<compile_context>
chip_gen: v5e
topology: v5e:2x2
jax: 0.10.0
libtpu: 0.0.40
codegen_flags: <defaults>
</compile_context>

<pallas_src>
import functools

import jax
import jax.numpy as jnp
from jax.experimental import pallas as pl
from jax.experimental.pallas import tpu as pltpu

# Safe on v5e/v6e (128 MiB physical) and v7x (64 MiB physical).
VMEM_LIMIT = 48 * 1024 * 1024
EPS = 1e-8


def _full_spec(shape):
    """BlockSpec for a weight fully resident in VMEM for every grid step."""
    nd = len(shape)
    return pl.BlockSpec(shape, lambda *idx: (0,) * nd)


def _gln(x, gamma, beta, eps):
    """Global layer norm over the whole (C, T) slab (causal=False)."""
    mu = jnp.mean(x)
    var = jnp.mean((x - mu) ** 2)
    return gamma * (x - mu) * jax.lax.rsqrt(var + eps) + beta


def _prelu(x, slope):
    return jnp.where(x >= 0, x, slope * x)


# --------------------------------------------------------------------------- #
# Fully fused kernel: encoder -> gLN -> bottleneck -> mic fusion -> TCN blocks
#                     -> output conv -> sigmoid mask -> decoder -> overlap-add
# Grid: (B,)  ("parallel")
# --------------------------------------------------------------------------- #

def _fused_kernel(slopes_ref, frames_ref,
                  wenc_ref, g0_ref, b0_ref, wbn_ref, bbn_ref,
                  win_ref, bin_ref, g1_ref, be1_ref,
                  wdw_ref, bdw_ref, g2_ref, be2_ref,
                  wres_ref, bres_ref,
                  wo_ref, bo_ref, wdec_ref,
                  o_ref,
                  norm_ref, dwbuf_ref,
                  *, mic, L, enc_dim, hid, spk, stride,
                  ksize, dils, left, max_pad, eps):
    nblk = len(dils)

    # ---- encoder: ONE (enc_dim, win) x (win, mic*L) MXU matmul --------------- #
    fb = frames_ref[0].astype(jnp.bfloat16)                          # (win, mic*L)
    enc_all = jnp.dot(wenc_ref[...], fb,
                      preferred_element_type=jnp.float32)            # (enc_dim, mic*L)
    enc0 = enc_all[:, 0:L]                                           # reference-mic encoding

    # ---- per-mic gLN, packed lane-dense, single bottleneck matmul ------------ #
    g0 = g0_ref[...]
    b0 = b0_ref[...]
    for m in range(mic):                                             # static unroll
        slab = enc_all[:, m * L:(m + 1) * L]
        norm_ref[:, m * L:(m + 1) * L] = _gln(slab, g0, b0, eps)
    bn_all = jnp.dot(wbn_ref[...], norm_ref[...].astype(jnp.bfloat16),
                     preferred_element_type=jnp.float32)             # (feat, mic*L)
    # TODO(synk): models_attention_set.TCN cross-mic attention source was not
    # provided; microphone channels are fused with a plain mean.
    acc = bn_all[:, 0:L]
    for m in range(1, mic):
        acc = acc + bn_all[:, m * L:(m + 1) * L]
    x = acc * (1.0 / mic) + bbn_ref[...]                             # (feat, L)

    # ---- zero only the depthwise halo columns, once per sample --------------- #
    dwbuf_ref[:, left - max_pad:left] = jnp.zeros((hid, max_pad), jnp.float32)
    dwbuf_ref[:, left + L:left + L + max_pad] = jnp.zeros((hid, max_pad), jnp.float32)

    # ---- TCN blocks (static unroll, all weights VMEM-resident) --------------- #
    for i, dil in enumerate(dils):
        pad = dil * (ksize - 1) // 2
        # 1x1 input conv + PReLU + gLN
        y = jnp.dot(win_ref[i], x.astype(jnp.bfloat16),
                    preferred_element_type=jnp.float32) + bin_ref[i]  # (hid, L)
        y = _prelu(y, slopes_ref[2 * i])
        y = _gln(y, g1_ref[i], be1_ref[i], eps)

        # depthwise dilated conv ('same', odd kernel) on 128-aligned halo buffer
        dwbuf_ref[:, left:left + L] = y                               # aligned central store
        z = jnp.zeros((hid, L), jnp.float32)
        for k in range(ksize):                                        # static taps
            off = left - pad + k * dil
            z = z + wdw_ref[i, k] * dwbuf_ref[:, off:off + L]
        z = z + bdw_ref[i]

        # PReLU + gLN + 1x1 residual conv + residual add
        z = _prelu(z, slopes_ref[2 * i + 1])
        z = _gln(z, g2_ref[i], be2_ref[i], eps)
        res = jnp.dot(wres_ref[i], z.astype(jnp.bfloat16),
                      preferred_element_type=jnp.float32) + bres_ref[i]
        x = x + res

    # ---- tail: PReLU + merged output conv + sigmoid mask + decoder + OLA ----- #
    xo = _prelu(x, slopes_ref[2 * nblk])
    logits = jnp.dot(wo_ref[...], xo.astype(jnp.bfloat16),
                     preferred_element_type=jnp.float32) + bo_ref[...]  # (spk*enc_dim, L)
    masks = jax.nn.sigmoid(logits)
    wdec = wdec_ref[...]                                                # (win, enc_dim) f32

    for s in range(spk):                                                # static unroll
        masked = masks[s * enc_dim:(s + 1) * enc_dim, :] * enc0          # (enc_dim, L)
        fr = jnp.dot(wdec, masked, preferred_element_type=jnp.float32)   # (win, L) f32
        f_lo = fr[0:stride, :]
        f_hi = fr[stride:2 * stride, :]
        # 50% overlap-add written as shifted-halves directly into the output block
        o_ref[0, s, :, 0:1] = f_lo[:, 0:1]
        o_ref[0, s, :, 1:L] = f_lo[:, 1:L] + f_hi[:, 0:L - 1]
        o_ref[0, s, :, L:L + 1] = f_hi[:, L - 1:L]


def fused_call(packed, frames, cfg, L, dils):
    mic, spk = cfg['mic_num'], cfg['num_spk']
    enc_dim, feat = cfg['enc_dim'], cfg['feature_dim']
    hid = 4 * feat
    win, stride, ksize = cfg['win'], cfg['stride'], cfg['kernel']
    nblk = len(dils)
    max_pad = max(d * (ksize - 1) // 2 for d in dils)
    left = ((max_pad + 127) // 128) * 128          # 128-aligned central store offset
    B = frames.shape[0]

    kernel = functools.partial(
        _fused_kernel, mic=mic, L=L, enc_dim=enc_dim, hid=hid, spk=spk,
        stride=stride, ksize=ksize, dils=tuple(dils), left=left,
        max_pad=max_pad, eps=EPS)

    in_specs = [
        pl.BlockSpec(memory_space=pltpu.MemorySpace.SMEM),             # PReLU slopes
        pl.BlockSpec((1, win, mic * L), lambda b: (b, 0, 0)),          # framed audio
        _full_spec((enc_dim, win)),                                    # W_enc (bf16)
        _full_spec((enc_dim, 1)), _full_spec((enc_dim, 1)),            # gLN gamma/beta
        _full_spec((feat, enc_dim)), _full_spec((feat, 1)),            # bottleneck
        _full_spec((nblk, hid, feat)), _full_spec((nblk, hid, 1)),     # W_in / b_in
        _full_spec((nblk, hid, 1)), _full_spec((nblk, hid, 1)),        # g1 / be1
        _full_spec((nblk, ksize, hid, 1)), _full_spec((nblk, hid, 1)),  # W_dw / b_dw
        _full_spec((nblk, hid, 1)), _full_spec((nblk, hid, 1)),        # g2 / be2
        _full_spec((nblk, feat, hid)), _full_spec((nblk, feat, 1)),    # W_res / b_res
        _full_spec((spk * enc_dim, feat)), _full_spec((spk * enc_dim, 1)),  # W_o / b_o
        _full_spec((win, enc_dim)),                                    # decoder basis (f32)
    ]

    return pl.pallas_call(
        kernel,
        out_shape=jax.ShapeDtypeStruct((B, spk, stride, L + 1), jnp.float32),
        grid=(B,),
        in_specs=in_specs,
        out_specs=pl.BlockSpec((1, spk, stride, L + 1), lambda b: (b, 0, 0, 0)),
        scratch_shapes=[
            pltpu.VMEM((enc_dim, mic * L), jnp.float32),               # mic-packed gLN output
            pltpu.VMEM((hid, left + L + max_pad), jnp.float32),        # depthwise halo buffer
        ],
        compiler_params=pltpu.CompilerParams(
            dimension_semantics=("parallel",),
            vmem_limit_bytes=VMEM_LIMIT),
    )(packed['slopes'], frames,
      packed['W_enc'], packed['g0'], packed['b0'], packed['W_bn'], packed['b_bn'],
      packed['W_in'], packed['b_in'], packed['g1'], packed['be1'],
      packed['W_dw'], packed['b_dw'], packed['g2'], packed['be2'],
      packed['W_res'], packed['b_res'],
      packed['W_o'], packed['b_o'], packed['W_decT'])


# ------------------------------ full forward ------------------------------- #

def net_forward(packed, x, cfg):
    win, stride = cfg['win'], cfg['stride']
    spk = cfg['num_spk']
    B, mic, nsample = x.shape
    x = x.astype(jnp.float32)

    # pad_signal (matches the PyTorch reference)
    rest = win - (stride + nsample % win) % win
    if rest > 0:
        x = jnp.concatenate([x, jnp.zeros((B, mic, rest), jnp.float32)], axis=2)
    pad_aux = jnp.zeros((B, mic, stride), jnp.float32)
    x = jnp.concatenate([pad_aux, x, pad_aux], axis=2)
    Tpad = x.shape[2]
    L = (Tpad - win) // stride + 1                    # number of encoder frames
    assert Tpad == (L + 1) * stride                   # stride == win // 2

    # framed encoder operand (B, win, mic*L): frame l of mic m = x[b, m, l*stride:+win]
    halves = x.reshape(B, mic, L + 1, stride)
    frames = jnp.concatenate([halves[:, :, :L, :], halves[:, :, 1:, :]], axis=-1)
    frames = jnp.transpose(frames, (0, 3, 1, 2)).reshape(B, win, mic * L)

    dils = tuple(2 ** l for _ in range(cfg['stack']) for l in range(cfg['layer']))

    # one fused kernel: encoder + TCN + masks + decoder + overlap-add (halves form)
    out_halves = fused_call(packed, frames, cfg, L, dils)    # (B, spk, stride, L+1)

    # final interleave + trim (tiny XLA glue)
    sig = jnp.transpose(out_halves, (0, 1, 3, 2)).reshape(B, spk, (L + 1) * stride)
    sig = sig[:, :, stride: (L + 1) * stride - (rest + stride)]
    return sig[:, :, None, :]                                 # (B, num_spk, 1, nsample)


# ------------------------------ param init / pack -------------------------- #

def init_params(key, cfg):
    enc_dim, feat = cfg['enc_dim'], cfg['feature_dim']
    hid = 4 * feat
    win, spk = cfg['win'], cfg['num_spk']
    nblocks = cfg['stack'] * cfg['layer']
    kit = iter(jax.random.split(key, 16 + 8 * nblocks))

    def nrm(shape, fan_in):
        return jax.random.normal(next(kit), shape, jnp.float32) / jnp.sqrt(float(fan_in))

    blocks = []
    for _ in range(nblocks):
        blocks.append(dict(
            W_in=nrm((hid, feat), feat), b_in=jnp.zeros((hid,), jnp.float32),
            a1=jnp.float32(0.25),
            g1=jnp.ones((hid,), jnp.float32), be1=jnp.zeros((hid,), jnp.float32),
            W_dw=nrm((hid, cfg['kernel']), cfg['kernel']), b_dw=jnp.zeros((hid,), jnp.float32),
            a2=jnp.float32(0.25),
            g2=jnp.ones((hid,), jnp.float32), be2=jnp.zeros((hid,), jnp.float32),
            W_res=nrm((feat, hid), hid), b_res=jnp.zeros((feat,), jnp.float32),
        ))
    tcn = dict(
        ln_gamma=jnp.ones((enc_dim,), jnp.float32),
        ln_beta=jnp.zeros((enc_dim,), jnp.float32),
        W_bn=nrm((feat, enc_dim), enc_dim), b_bn=jnp.zeros((feat,), jnp.float32),
        blocks=blocks,
        a_out=jnp.float32(0.25),
        W_o=nrm((enc_dim * spk, feat), feat), b_o=jnp.zeros((enc_dim * spk,), jnp.float32),
    )
    return dict(
        W_enc=nrm((enc_dim, win), win),      # Conv1d(1, enc_dim, win, bias=False)
        W_dec=nrm((enc_dim, win), enc_dim),  # ConvTranspose1d(enc_dim, 1, win, bias=False)
        tcn=tcn,
    )


def pack_params(params, cfg):
    """Stack per-block weights, cast matmul weights to bf16 ONCE, reshape biases."""
    tp = params['tcn']
    blocks = tp['blocks']

    def stack(name):
        return jnp.stack([b[name] for b in blocks])

    slopes = jnp.stack([v for b in blocks for v in (b['a1'], b['a2'])]
                       + [tp['a_out']]).astype(jnp.float32)
    return dict(
        slopes=slopes,
        W_enc=params['W_enc'].astype(jnp.bfloat16),
        g0=tp['ln_gamma'][:, None], b0=tp['ln_beta'][:, None],
        W_bn=tp['W_bn'].astype(jnp.bfloat16), b_bn=tp['b_bn'][:, None],
        W_in=stack('W_in').astype(jnp.bfloat16), b_in=stack('b_in')[:, :, None],
        g1=stack('g1')[:, :, None], be1=stack('be1')[:, :, None],
        W_dw=jnp.transpose(stack('W_dw'), (0, 2, 1))[:, :, :, None],   # (nblk,ksize,hid,1) f32
        b_dw=stack('b_dw')[:, :, None],
        g2=stack('g2')[:, :, None], be2=stack('be2')[:, :, None],
        W_res=stack('W_res').astype(jnp.bfloat16), b_res=stack('b_res')[:, :, None],
        W_o=tp['W_o'].astype(jnp.bfloat16), b_o=tp['b_o'][:, None],
        W_decT=jnp.transpose(params['W_dec']).astype(jnp.float32),     # decoder stays f32
    )


# --------------------------------- main ------------------------------------ #

if __name__ == "__main__":
    cfg = dict(mic_num=2, ch_dim=4, enc_dim=32, feature_dim=16,
               win=16, stride=8, layer=3, stack=1, kernel=3, num_spk=2)

    key = jax.random.PRNGKey(0)
    pkey, xkey = jax.random.split(key)
    params = init_params(pkey, cfg)
    packed = pack_params(params, cfg)
    x = jax.random.normal(xkey, (2, cfg['mic_num'], 80), jnp.float32)   # (B, mic, S)

    fwd = jax.jit(functools.partial(net_forward, cfg=cfg))
    out = jax.block_until_ready(fwd(packed, x))
    assert out.shape == (2, cfg['num_spk'], 1, 80), out.shape
    assert bool(jnp.all(jnp.isfinite(out)))
    print("KERNEL_OK")
</pallas_src>

<mosaic_0001>
module attributes {stable_mosaic.version = 11 : i64} {
  func.func @_fused_kernel(%arg0: i32, %arg1: memref<7xf32, #tpu.memory_space<smem>>, %arg2: memref<1x16x24xf32, #tpu.memory_space<vmem>>, %arg3: memref<32x16xbf16, #tpu.memory_space<vmem>>, %arg4: memref<32x1xf32, #tpu.memory_space<vmem>>, %arg5: memref<32x1xf32, #tpu.memory_space<vmem>>, %arg6: memref<16x32xbf16, #tpu.memory_space<vmem>>, %arg7: memref<16x1xf32, #tpu.memory_space<vmem>>, %arg8: memref<3x64x16xbf16, #tpu.memory_space<vmem>>, %arg9: memref<3x64x1xf32, #tpu.memory_space<vmem>>, %arg10: memref<3x64x1xf32, #tpu.memory_space<vmem>>, %arg11: memref<3x64x1xf32, #tpu.memory_space<vmem>>, %arg12: memref<3x3x64x1xf32, #tpu.memory_space<vmem>>, %arg13: memref<3x64x1xf32, #tpu.memory_space<vmem>>, %arg14: memref<3x64x1xf32, #tpu.memory_space<vmem>>, %arg15: memref<3x64x1xf32, #tpu.memory_space<vmem>>, %arg16: memref<3x16x64xbf16, #tpu.memory_space<vmem>>, %arg17: memref<3x16x1xf32, #tpu.memory_space<vmem>>, %arg18: memref<64x16xbf16, #tpu.memory_space<vmem>>, %arg19: memref<64x1xf32, #tpu.memory_space<vmem>>, %arg20: memref<16x32xf32, #tpu.memory_space<vmem>>, %arg21: memref<1x2x8x13xf32, #tpu.memory_space<vmem>>, %arg22: memref<32x24xf32, #tpu.memory_space<vmem>>, %arg23: memref<64x144xf32, #tpu.memory_space<vmem>>) attributes {dimension_semantics = [#tpu.dimension_semantics<parallel>], iteration_bounds = array<i64: 2>, scalar_prefetch = 0 : i64, scratch_operands = 2 : i64, tpu.core_type = #tpu.core_type<tc>, window_params = [{transform_indices = @transform_0, window_bounds = array<i64: 7>}, {transform_indices = @transform_1, window_bounds = array<i64: 1, 16, 24>}, {pipeline_mode = #tpu.pipeline_mode<synchronous>, transform_indices = @transform_2, window_bounds = array<i64: 32, 16>}, {pipeline_mode = #tpu.pipeline_mode<synchronous>, transform_indices = @transform_3, window_bounds = array<i64: 32, 1>}, {pipeline_mode = #tpu.pipeline_mode<synchronous>, transform_indices = @transform_4, window_bounds = array<i64: 32, 1>}, {pipeline_mode = #tpu.pipeline_mode<synchronous>, transform_indices = @transform_5, window_bounds = array<i64: 16, 32>}, {pipeline_mode = #tpu.pipeline_mode<synchronous>, transform_indices = @transform_6, window_bounds = array<i64: 16, 1>}, {pipeline_mode = #tpu.pipeline_mode<synchronous>, transform_indices = @transform_7, window_bounds = array<i64: 3, 64, 16>}, {pipeline_mode = #tpu.pipeline_mode<synchronous>, transform_indices = @transform_8, window_bounds = array<i64: 3, 64, 1>}, {pipeline_mode = #tpu.pipeline_mode<synchronous>, transform_indices = @transform_9, window_bounds = array<i64: 3, 64, 1>}, {pipeline_mode = #tpu.pipeline_mode<synchronous>, transform_indices = @transform_10, window_bounds = array<i64: 3, 64, 1>}, {pipeline_mode = #tpu.pipeline_mode<synchronous>, transform_indices = @transform_11, window_bounds = array<i64: 3, 3, 64, 1>}, {pipeline_mode = #tpu.pipeline_mode<synchronous>, transform_indices = @transform_12, window_bounds = array<i64: 3, 64, 1>}, {pipeline_mode = #tpu.pipeline_mode<synchronous>, transform_indices = @transform_13, window_bounds = array<i64: 3, 64, 1>}, {pipeline_mode = #tpu.pipeline_mode<synchronous>, transform_indices = @transform_14, window_bounds = array<i64: 3, 64, 1>}, {pipeline_mode = #tpu.pipeline_mode<synchronous>, transform_indices = @transform_15, window_bounds = array<i64: 3, 16, 64>}, {pipeline_mode = #tpu.pipeline_mode<synchronous>, transform_indices = @transform_16, window_bounds = array<i64: 3, 16, 1>}, {pipeline_mode = #tpu.pipeline_mode<synchronous>, transform_indices = @transform_17, window_bounds = array<i64: 64, 16>}, {pipeline_mode = #tpu.pipeline_mode<synchronous>, transform_indices = @transform_18, window_bounds = array<i64: 64, 1>}, {pipeline_mode = #tpu.pipeline_mode<synchronous>, transform_indices = @transform_19, window_bounds = array<i64: 16, 32>}, {transform_indices = @transform_20, window_bounds = array<i64: 1, 2, 8, 13>}]} {
    %c0 = arith.constant 0 : index
    %c0_0 = arith.constant 0 : index
    %c0_1 = arith.constant 0 : index
    %0 = vector.load %arg2[%c0, %c0_0, %c0_1] : memref<1x16x24xf32, #tpu.memory_space<vmem>>, vector<1x16x24xf32>
    %1 = vector.shape_cast %0 : vector<1x16x24xf32> to vector<16x24xf32>
    %2 = arith.truncf %1 : vector<16x24xf32> to vector<16x24xbf16>
    %c0_2 = arith.constant 0 : index
    %c0_3 = arith.constant 0 : index
    %3 = vector.load %arg3[%c0_2, %c0_3] : memref<32x16xbf16, #tpu.memory_space<vmem>>, vector<32x16xbf16>
    %cst = arith.constant dense<0.000000e+00> : vector<32x24xf32>
    %4 = tpu.matmul %3, %2, %cst {dimension_numbers = #tpu.dot_dimension_numbers<[1], [0], [0], [1], [0, 0, 1, 1], [], []>} : vector<32x16xbf16>, vector<16x24xbf16>, vector<32x24xf32> -> vector<32x24xf32>
    %5 = vector.extract_strided_slice %4 {offsets = [0, 0], sizes = [32, 12], strides = [1, 1]} : vector<32x24xf32> to vector<32x12xf32>
    %c0_4 = arith.constant 0 : index
    %c0_5 = arith.constant 0 : index
    %6 = vector.load %arg4[%c0_4, %c0_5] : memref<32x1xf32, #tpu.memory_space<vmem>>, vector<32x1xf32>
    %c0_6 = arith.constant 0 : index
    %c0_7 = arith.constant 0 : index
    %7 = vector.load %arg5[%c0_6, %c0_7] : memref<32x1xf32, #tpu.memory_space<vmem>>, vector<32x1xf32>
    %8 = vector.extract_strided_slice %4 {offsets = [0, 0], sizes = [32, 12], strides = [1, 1]} : vector<32x24xf32> to vector<32x12xf32>
    %9 = vector.shape_cast %8 : vector<32x12xf32> to vector<1x32x12xf32>
    %cst_8 = arith.constant dense<0.000000e+00> : vector<1xf32>
    %10 = vector.multi_reduction <add>, %9, %cst_8 [1, 2] : vector<1x32x12xf32> to vector<1xf32>
    %11 = vector.shape_cast %10 : vector<1xf32> to vector<1x1x1xf32>
    %12 = vector.extract %11[0, 0, 0] : f32 from vector<1x1x1xf32>
    %cst_9 = arith.constant 3.840000e+02 : f32
    %13 = arith.divf %12, %cst_9 : f32
    %14 = vector.broadcast %13 : f32 to vector<32x12xf32>
    %15 = arith.subf %8, %14 : vector<32x12xf32>
    %16 = arith.mulf %15, %15 : vector<32x12xf32>
    %17 = vector.shape_cast %16 : vector<32x12xf32> to vector<1x32x12xf32>
    %cst_10 = arith.constant dense<0.000000e+00> : vector<1xf32>
    %18 = vector.multi_reduction <add>, %17, %cst_10 [1, 2] : vector<1x32x12xf32> to vector<1xf32>
    %19 = vector.shape_cast %18 : vector<1xf32> to vector<1x1x1xf32>
    %20 = vector.extract %19[0, 0, 0] : f32 from vector<1x1x1xf32>
    %cst_11 = arith.constant 3.840000e+02 : f32
    %21 = arith.divf %20, %cst_11 : f32
    %22 = vector.broadcast %13 : f32 to vector<32x12xf32>
    %23 = arith.subf %8, %22 : vector<32x12xf32>
    %24 = vector.broadcast %6 : vector<32x1xf32> to vector<32x12xf32>
    %25 = arith.mulf %24, %23 : vector<32x12xf32>
    %cst_12 = arith.constant 9.99999993E-9 : f32
    %26 = arith.addf %21, %cst_12 : f32
    %27 = math.rsqrt %26 : f32
    %28 = vector.broadcast %27 : f32 to vector<32x12xf32>
    %29 = arith.mulf %25, %28 : vector<32x12xf32>
    %30 = vector.broadcast %7 : vector<32x1xf32> to vector<32x12xf32>
    %31 = arith.addf %29, %30 : vector<32x12xf32>
    %c0_13 = arith.constant 0 : index
    %c0_14 = arith.constant 0 : index
    %32 = vector.load %arg22[%c0_13, %c0_14] : memref<32x24xf32, #tpu.memory_space<vmem>>, vector<32x12xf32>
    tpu.vector_store %arg22[%c0_13, %c0_14], %31 {strides = array<i32>} : memref<32x24xf32, #tpu.memory_space<vmem>>, vector<32x12xf32>,
    %33 = vector.extract_strided_slice %4 {offsets = [0, 12], sizes = [32, 12], strides = [1, 1]} : vector<32x24xf32> to vector<32x12xf32>
    %34 = vector.shape_cast %33 : vector<32x12xf32> to vector<1x32x12xf32>
    %cst_15 = arith.constant dense<0.000000e+00> : vector<1xf32>
    %35 = vector.multi_reduction <add>, %34, %cst_15 [1, 2] : vector<1x32x12xf32> to vector<1xf32>
    %36 = vector.shape_cast %35 : vector<1xf32> to vector<1x1x1xf32>
    %37 = vector.extract %36[0, 0, 0] : f32 from vector<1x1x1xf32>
    %cst_16 = arith.constant 3.840000e+02 : f32
    %38 = arith.divf %37, %cst_16 : f32
    %39 = vector.broadcast %38 : f32 to vector<32x12xf32>
    %40 = arith.subf %33, %39 : vector<32x12xf32>
    %41 = arith.mulf %40, %40 : vector<32x12xf32>
    %42 = vector.shape_cast %41 : vector<32x12xf32> to vector<1x32x12xf32>
    %cst_17 = arith.constant dense<0.000000e+00> : vector<1xf32>
    %43 = vector.multi_reduction <add>, %42, %cst_17 [1, 2] : vector<1x32x12xf32> to vector<1xf32>
    %44 = vector.shape_cast %43 : vector<1xf32> to vector<1x1x1xf32>
    %45 = vector.extract %44[0, 0, 0] : f32 from vector<1x1x1xf32>
    %cst_18 = arith.constant 3.840000e+02 : f32
    %46 = arith.divf %45, %cst_18 : f32
    %47 = vector.broadcast %38 : f32 to vector<32x12xf32>
    %48 = arith.subf %33, %47 : vector<32x12xf32>
    %49 = vector.broadcast %6 : vector<32x1xf32> to vector<32x12xf32>
    %50 = arith.mulf %49, %48 : vector<32x12xf32>
    %cst_19 = arith.constant 9.99999993E-9 : f32
    %51 = arith.addf %46, %cst_19 : f32
    %52 = math.rsqrt %51 : f32
    %53 = vector.broadcast %52 : f32 to vector<32x12xf32>
    %54 = arith.mulf %50, %53 : vector<32x12xf32>
    %55 = vector.broadcast %7 : vector<32x1xf32> to vector<32x12xf32>
    %56 = arith.addf %54, %55 : vector<32x12xf32>
    %c0_20 = arith.constant 0 : index
    %c12 = arith.constant 12 : index
    %57 = vector.load %arg22[%c0_20, %c12] : memref<32x24xf32, #tpu.memory_space<vmem>>, vector<32x12xf32>
    tpu.vector_store %arg22[%c0_20, %c12], %56 {strides = array<i32>} : memref<32x24xf32, #tpu.memory_space<vmem>>, vector<32x12xf32>,
    %c0_21 = arith.constant 0 : index
    %c0_22 = arith.constant 0 : index
    %58 = vector.load %arg6[%c0_21, %c0_22] : memref<16x32xbf16, #tpu.memory_space<vmem>>, vector<16x32xbf16>
    %c0_23 = arith.constant 0 : index
    %c0_24 = arith.constant 0 : index
    %59 = vector.load %arg22[%c0_23, %c0_24] : memref<32x24xf32, #tpu.memory_space<vmem>>, vector<32x24xf32>
    %60 = arith.truncf %59 : vector<32x24xf32> to vector<32x24xbf16>
    %cst_25 = arith.constant dense<0.000000e+00> : vector<16x24xf32>
    %61 = tpu.matmul %58, %60, %cst_25 {dimension_numbers = #tpu.dot_dimension_numbers<[1], [0], [0], [1], [0, 0, 1, 1], [], []>} : vector<16x32xbf16>, vector<32x24xbf16>, vector<16x24xf32> -> vector<16x24xf32>
    %62 = vector.extract_strided_slice %61 {offsets = [0, 0], sizes = [16, 12], strides = [1, 1]} : vector<16x24xf32> to vector<16x12xf32>
    %63 = vector.extract_strided_slice %61 {offsets = [0, 12], sizes = [16, 12], strides = [1, 1]} : vector<16x24xf32> to vector<16x12xf32>
    %64 = arith.addf %62, %63 : vector<16x12xf32>
    %cst_26 = arith.constant 5.000000e-01 : f32
    %65 = vector.broadcast %cst_26 : f32 to vector<16x12xf32>
    %66 = arith.mulf %64, %65 : vector<16x12xf32>
    %c0_27 = arith.constant 0 : index
    %c0_28 = arith.constant 0 : index
    %67 = vector.load %arg7[%c0_27, %c0_28] : memref<16x1xf32, #tpu.memory_space<vmem>>, vector<16x1xf32>
    %68 = vector.broadcast %67 : vector<16x1xf32> to vector<16x12xf32>
    %69 = arith.addf %66, %68 : vector<16x12xf32>
    %cst_29 = arith.constant 0.000000e+00 : f32
    %70 = vector.broadcast %cst_29 : f32 to vector<64x4xf32>
    %c0_30 = arith.constant 0 : index
    %c124 = arith.constant 124 : index
    %71 = vector.load %arg23[%c0_30, %c124] : memref<64x144xf32, #tpu.memory_space<vmem>>, vector<64x4xf32>
    tpu.vector_store %arg23[%c0_30, %c124], %70 {strides = array<i32>} : memref<64x144xf32, #tpu.memory_space<vmem>>, vector<64x4xf32>,
    %cst_31 = arith.constant 0.000000e+00 : f32
    %72 = vector.broadcast %cst_31 : f32 to vector<64x4xf32>
    %c0_32 = arith.constant 0 : index
    %c140 = arith.constant 140 : index
    %73 = vector.load %arg23[%c0_32, %c140] : memref<64x144xf32, #tpu.memory_space<vmem>>, vector<64x4xf32>
    tpu.vector_store %arg23[%c0_32, %c140], %72 {strides = array<i32>} : memref<64x144xf32, #tpu.memory_space<vmem>>, vector<64x4xf32>,
    %c0_33 = arith.constant 0 : index
    %c0_34 = arith.constant 0 : index
    %c0_35 = arith.constant 0 : index
    %74 = vector.load %arg8[%c0_33, %c0_34, %c0_35] : memref<3x64x16xbf16, #tpu.memory_space<vmem>>, vector<1x64x16xbf16>
    %75 = vector.shape_cast %74 : vector<1x64x16xbf16> to vector<64x16xbf16>
    %76 = arith.truncf %69 : vector<16x12xf32> to vector<16x12xbf16>
    %cst_36 = arith.constant dense<0.000000e+00> : vector<64x12xf32>
    %77 = tpu.matmul %75, %76, %cst_36 {dimension_numbers = #tpu.dot_dimension_numbers<[1], [0], [0], [1], [0, 0, 1, 1], [], []>} : vector<64x16xbf16>, vector<16x12xbf16>, vector<64x12xf32> -> vector<64x12xf32>
    %c0_37 = arith.constant 0 : index
    %c0_38 = arith.constant 0 : index
    %c0_39 = arith.constant 0 : index
    %78 = vector.load %arg9[%c0_37, %c0_38, %c0_39] : memref<3x64x1xf32, #tpu.memory_space<vmem>>, vector<1x64x1xf32>
    %79 = vector.shape_cast %78 : vector<1x64x1xf32> to vector<64x1xf32>
    %80 = vector.broadcast %79 : vector<64x1xf32> to vector<64x12xf32>
    %81 = arith.addf %77, %80 : vector<64x12xf32>
    %c0_40 = arith.constant 0 : index
    %82 = memref.load %arg1[%c0_40] : memref<7xf32, #tpu.memory_space<smem>>
    %cst_41 = arith.constant 0.000000e+00 : f32
    %83 = vector.broadcast %cst_41 : f32 to vector<64x12xf32>
    %84 = arith.cmpf oge, %81, %83 : vector<64x12xf32>
    %85 = vector.broadcast %82 : f32 to vector<64x12xf32>
    %86 = arith.mulf %85, %81 : vector<64x12xf32>
    %87 = arith.select %84, %81, %86 : vector<64x12xi1>, vector<64x12xf32>
    %c0_42 = arith.constant 0 : index
    %c0_43 = arith.constant 0 : index
    %c0_44 = arith.constant 0 : index
    %88 = vector.load %arg10[%c0_42, %c0_43, %c0_44] : memref<3x64x1xf32, #tpu.memory_space<vmem>>, vector<1x64x1xf32>
    %89 = vector.shape_cast %88 : vector<1x64x1xf32> to vector<64x1xf32>
    %c0_45 = arith.constant 0 : index
    %c0_46 = arith.constant 0 : index
    %c0_47 = arith.constant 0 : index
    %90 = vector.load %arg11[%c0_45, %c0_46, %c0_47] : memref<3x64x1xf32, #tpu.memory_space<vmem>>, vector<1x64x1xf32>
    %91 = vector.shape_cast %90 : vector<1x64x1xf32> to vector<64x1xf32>
    %92 = vector.shape_cast %87 : vector<64x12xf32> to vector<1x64x12xf32>
    %cst_48 = arith.constant dense<0.000000e+00> : vector<1xf32>
    %93 = vector.multi_reduction <add>, %92, %cst_48 [1, 2] : vector<1x64x12xf32> to vector<1xf32>
    %94 = vector.shape_cast %93 : vector<1xf32> to vector<1x1x1xf32>
    %95 = vector.extract %94[0, 0, 0] : f32 from vector<1x1x1xf32>
    %cst_49 = arith.constant 7.680000e+02 : f32
    %96 = arith.divf %95, %cst_49 : f32
    %97 = vector.broadcast %96 : f32 to vector<64x12xf32>
    %98 = arith.subf %87, %97 : vector<64x12xf32>
    %99 = arith.mulf %98, %98 : vector<64x12xf32>
    %100 = vector.shape_cast %99 : vector<64x12xf32> to vector<1x64x12xf32>
    %cst_50 = arith.constant dense<0.000000e+00> : vector<1xf32>
    %101 = vector.multi_reduction <add>, %100, %cst_50 [1, 2] : vector<1x64x12xf32> to vector<1xf32>
    %102 = vector.shape_cast %101 : vector<1xf32> to vector<1x1x1xf32>
    %103 = vector.extract %102[0, 0, 0] : f32 from vector<1x1x1xf32>
    %cst_51 = arith.constant 7.680000e+02 : f32
    %104 = arith.divf %103, %cst_51 : f32
    %105 = vector.broadcast %96 : f32 to vector<64x12xf32>
    %106 = arith.subf %87, %105 : vector<64x12xf32>
    %107 = vector.broadcast %89 : vector<64x1xf32> to vector<64x12xf32>
    %108 = arith.mulf %107, %106 : vector<64x12xf32>
    %cst_52 = arith.constant 9.99999993E-9 : f32
    %109 = arith.addf %104, %cst_52 : f32
    %110 = math.rsqrt %109 : f32
    %111 = vector.broadcast %110 : f32 to vector<64x12xf32>
    %112 = arith.mulf %108, %111 : vector<64x12xf32>
    %113 = vector.broadcast %91 : vector<64x1xf32> to vector<64x12xf32>
    %114 = arith.addf %112, %113 : vector<64x12xf32>
    %c0_53 = arith.constant 0 : index
    %c128 = arith.constant 128 : index
    %115 = vector.load %arg23[%c0_53, %c128] : memref<64x144xf32, #tpu.memory_space<vmem>>, vector<64x12xf32>
    tpu.vector_store %arg23[%c0_53, %c128], %114 {strides = array<i32>} : memref<64x144xf32, #tpu.memory_space<vmem>>, vector<64x12xf32>,
    %cst_54 = arith.constant 0.000000e+00 : f32
    %116 = vector.broadcast %cst_54 : f32 to vector<64x12xf32>
    %c0_55 = arith.constant 0 : index
    %c0_56 = arith.constant 0 : index
    %c0_57 = arith.constant 0 : index
    %c0_58 = arith.constant 0 : index
    %117 = vector.load %arg12[%c0_55, %c0_56, %c0_57, %c0_58] : memref<3x3x64x1xf32, #tpu.memory_space<vmem>>, vector<1x1x64x1xf32>
    %118 = vector.shape_cast %117 : vector<1x1x64x1xf32> to vector<64x1xf32>
    %c0_59 = arith.constant 0 : index
    %c127 = arith.constant 127 : index
    %119 = vector.load %arg23[%c0_59, %c127] : memref<64x144xf32, #tpu.memory_space<vmem>>, vector<64x12xf32>
    %120 = vector.broadcast %118 : vector<64x1xf32> to vector<64x12xf32>
    %121 = arith.mulf %120, %119 : vector<64x12xf32>
    %122 = arith.addf %116, %121 : vector<64x12xf32>
    %c0_60 = arith.constant 0 : index
    %c1 = arith.constant 1 : index
    %c0_61 = arith.constant 0 : index
    %c0_62 = arith.constant 0 : index
    %123 = vector.load %arg12[%c0_60, %c1, %c0_61, %c0_62] : memref<3x3x64x1xf32, #tpu.memory_space<vmem>>, vector<1x1x64x1xf32>
    %124 = vector.shape_cast %123 : vector<1x1x64x1xf32> to vector<64x1xf32>
    %c0_63 = arith.constant 0 : index
    %c128_64 = arith.constant 128 : index
    %125 = vector.load %arg23[%c0_63, %c128_64] : memref<64x144xf32, #tpu.memory_space<vmem>>, vector<64x12xf32>
    %126 = vector.broadcast %124 : vector<64x1xf32> to vector<64x12xf32>
    %127 = arith.mulf %126, %125 : vector<64x12xf32>
    %128 = arith.addf %122, %127 : vector<64x12xf32>
    %c0_65 = arith.constant 0 : index
    %c2 = arith.constant 2 : index
    %c0_66 = arith.constant 0 : index
    %c0_67 = arith.constant 0 : index
    %129 = vector.load %arg12[%c0_65, %c2, %c0_66, %c0_67] : memref<3x3x64x1xf32, #tpu.memory_space<vmem>>, vector<1x1x64x1xf32>
    %130 = vector.shape_cast %129 : vector<1x1x64x1xf32> to vector<64x1xf32>
    %c0_68 = arith.constant 0 : index
    %c129 = arith.constant 129 : index
    %131 = vector.load %arg23[%c0_68, %c129] : memref<64x144xf32, #tpu.memory_space<vmem>>, vector<64x12xf32>
    %132 = vector.broadcast %130 : vector<64x1xf32> to vector<64x12xf32>
    %133 = arith.mulf %132, %131 : vector<64x12xf32>
    %134 = arith.addf %128, %133 : vector<64x12xf32>
    %c0_69 = arith.constant 0 : index
    %c0_70 = arith.constant 0 : index
    %c0_71 = arith.constant 0 : index
    %135 = vector.load %arg13[%c0_69, %c0_70, %c0_71] : memref<3x64x1xf32, #tpu.memory_space<vmem>>, vector<1x64x1xf32>
    %136 = vector.shape_cast %135 : vector<1x64x1xf32> to vector<64x1xf32>
    %137 = vector.broadcast %136 : vector<64x1xf32> to vector<64x12xf32>
    %138 = arith.addf %134, %137 : vector<64x12xf32>
    %c1_72 = arith.constant 1 : index
    %139 = memref.load %arg1[%c1_72] : memref<7xf32, #tpu.memory_space<smem>>
    %cst_73 = arith.constant 0.000000e+00 : f32
    %140 = vector.broadcast %cst_73 : f32 to vector<64x12xf32>
    %141 = arith.cmpf oge, %138, %140 : vector<64x12xf32>
    %142 = vector.broadcast %139 : f32 to vector<64x12xf32>
    %143 = arith.mulf %142, %138 : vector<64x12xf32>
    %144 = arith.select %141, %138, %143 : vector<64x12xi1>, vector<64x12xf32>
    %c0_74 = arith.constant 0 : index
    %c0_75 = arith.constant 0 : index
    %c0_76 = arith.constant 0 : index
    %145 = vector.load %arg14[%c0_74, %c0_75, %c0_76] : memref<3x64x1xf32, #tpu.memory_space<vmem>>, vector<1x64x1xf32>
    %146 = vector.shape_cast %145 : vector<1x64x1xf32> to vector<64x1xf32>
    %c0_77 = arith.constant 0 : index
    %c0_78 = arith.constant 0 : index
    %c0_79 = arith.constant 0 : index
    %147 = vector.load %arg15[%c0_77, %c0_78, %c0_79] : memref<3x64x1xf32, #tpu.memory_space<vmem>>, vector<1x64x1xf32>
    %148 = vector.shape_cast %147 : vector<1x64x1xf32> to vector<64x1xf32>
    %149 = vector.shape_cast %144 : vector<64x12xf32> to vector<1x64x12xf32>
    %cst_80 = arith.constant dense<0.000000e+00> : vector<1xf32>
    %150 = vector.multi_reduction <add>, %149, %cst_80 [1, 2] : vector<1x64x12xf32> to vector<1xf32>
    %151 = vector.shape_cast %150 : vector<1xf32> to vector<1x1x1xf32>
    %152 = vector.extract %151[0, 0, 0] : f32 from vector<1x1x1xf32>
    %cst_81 = arith.constant 7.680000e+02 : f32
    %153 = arith.divf %152, %cst_81 : f32
    %154 = vector.broadcast %153 : f32 to vector<64x12xf32>
    %155 = arith.subf %144, %154 : vector<64x12xf32>
    %156 = arith.mulf %155, %155 : vector<64x12xf32>
    %157 = vector.shape_cast %156 : vector<64x12xf32> to vector<1x64x12xf32>
    %cst_82 = arith.constant dense<0.000000e+00> : vector<1xf32>
    %158 = vector.multi_reduction <add>, %157, %cst_82 [1, 2] : vector<1x64x12xf32> to vector<1xf32>
    %159 = vector.shape_cast %158 : vector<1xf32> to vector<1x1x1xf32>
    %160 = vector.extract %159[0, 0, 0] : f32 from vector<1x1x1xf32>
    %cst_83 = arith.constant 7.680000e+02 : f32
    %161 = arith.divf %160, %cst_83 : f32
    %162 = vector.broadcast %153 : f32 to vector<64x12xf32>
    %163 = arith.subf %144, %162 : vector<64x12xf32>
    %164 = vector.broadcast %146 : vector<64x1xf32> to vector<64x12xf32>
    %165 = arith.mulf %164, %163 : vector<64x12xf32>
    %cst_84 = arith.constant 9.99999993E-9 : f32
    %166 = arith.addf %161, %cst_84 : f32
    %167 = math.rsqrt %166 : f32
    %168 = vector.broadcast %167 : f32 to vector<64x12xf32>
    %169 = arith.mulf %165, %168 : vector<64x12xf32>
    %170 = vector.broadcast %148 : vector<64x1xf32> to vector<64x12xf32>
    %171 = arith.addf %169, %170 : vector<64x12xf32>
    %c0_85 = arith.constant 0 : index
    %c0_86 = arith.constant 0 : index
    %c0_87 = arith.constant 0 : index
    %172 = vector.load %arg16[%c0_85, %c0_86, %c0_87] : memref<3x16x64xbf16, #tpu.memory_space<vmem>>, vector<1x16x64xbf16>
    %173 = vector.shape_cast %172 : vector<1x16x64xbf16> to vector<16x64xbf16>
    %174 = arith.truncf %171 : vector<64x12xf32> to vector<64x12xbf16>
    %cst_88 = arith.constant dense<0.000000e+00> : vector<16x12xf32>
    %175 = tpu.matmul %173, %174, %cst_88 {dimension_numbers = #tpu.dot_dimension_numbers<[1], [0], [0], [1], [0, 0, 1, 1], [], []>} : vector<16x64xbf16>, vector<64x12xbf16>, vector<16x12xf32> -> vector<16x12xf32>
    %c0_89 = arith.constant 0 : index
    %c0_90 = arith.constant 0 : index
    %c0_91 = arith.constant 0 : index
    %176 = vector.load %arg17[%c0_89, %c0_90, %c0_91] : memref<3x16x1xf32, #tpu.memory_space<vmem>>, vector<1x16x1xf32>
    %177 = vector.shape_cast %176 : vector<1x16x1xf32> to vector<16x1xf32>
    %178 = vector.broadcast %177 : vector<16x1xf32> to vector<16x12xf32>
    %179 = arith.addf %175, %178 : vector<16x12xf32>
    %180 = arith.addf %69, %179 : vector<16x12xf32>
    %c1_92 = arith.constant 1 : index
    %c0_93 = arith.constant 0 : index
    %c0_94 = arith.constant 0 : index
    %181 = vector.load %arg8[%c1_92, %c0_93, %c0_94] : memref<3x64x16xbf16, #tpu.memory_space<vmem>>, vector<1x64x16xbf16>
    %182 = vector.shape_cast %181 : vector<1x64x16xbf16> to vector<64x16xbf16>
    %183 = arith.truncf %180 : vector<16x12xf32> to vector<16x12xbf16>
    %cst_95 = arith.constant dense<0.000000e+00> : vector<64x12xf32>
    %184 = tpu.matmul %182, %183, %cst_95 {dimension_numbers = #tpu.dot_dimension_numbers<[1], [0], [0], [1], [0, 0, 1, 1], [], []>} : vector<64x16xbf16>, vector<16x12xbf16>, vector<64x12xf32> -> vector<64x12xf32>
    %c1_96 = arith.constant 1 : index
    %c0_97 = arith.constant 0 : index
    %c0_98 = arith.constant 0 : index
    %185 = vector.load %arg9[%c1_96, %c0_97, %c0_98] : memref<3x64x1xf32, #tpu.memory_space<vmem>>, vector<1x64x1xf32>
    %186 = vector.shape_cast %185 : vector<1x64x1xf32> to vector<64x1xf32>
    %187 = vector.broadcast %186 : vector<64x1xf32> to vector<64x12xf32>
    %188 = arith.addf %184, %187 : vector<64x12xf32>
    %c2_99 = arith.constant 2 : index
    %189 = memref.load %arg1[%c2_99] : memref<7xf32, #tpu.memory_space<smem>>
    %cst_100 = arith.constant 0.000000e+00 : f32
    %190 = vector.broadcast %cst_100 : f32 to vector<64x12xf32>
    %191 = arith.cmpf oge, %188, %190 : vector<64x12xf32>
    %192 = vector.broadcast %189 : f32 to vector<64x12xf32>
    %193 = arith.mulf %192, %188 : vector<64x12xf32>
    %194 = arith.select %191, %188, %193 : vector<64x12xi1>, vector<64x12xf32>
    %c1_101 = arith.constant 1 : index
    %c0_102 = arith.constant 0 : index
    %c0_103 = arith.constant 0 : index
    %195 = vector.load %arg10[%c1_101, %c0_102, %c0_103] : memref<3x64x1xf32, #tpu.memory_space<vmem>>, vector<1x64x1xf32>
    %196 = vector.shape_cast %195 : vector<1x64x1xf32> to vector<64x1xf32>
    %c1_104 = arith.constant 1 : index
    %c0_105 = arith.constant 0 : index
    %c0_106 = arith.constant 0 : index
    %197 = vector.load %arg11[%c1_104, %c0_105, %c0_106] : memref<3x64x1xf32, #tpu.memory_space<vmem>>, vector<1x64x1xf32>
    %198 = vector.shape_cast %197 : vector<1x64x1xf32> to vector<64x1xf32>
    %199 = vector.shape_cast %194 : vector<64x12xf32> to vector<1x64x12xf32>
    %cst_107 = arith.constant dense<0.000000e+00> : vector<1xf32>
    %200 = vector.multi_reduction <add>, %199, %cst_107 [1, 2] : vector<1x64x12xf32> to vector<1xf32>
    %201 = vector.shape_cast %200 : vector<1xf32> to vector<1x1x1xf32>
    %202 = vector.extract %201[0, 0, 0] : f32 from vector<1x1x1xf32>
    %cst_108 = arith.constant 7.680000e+02 : f32
    %203 = arith.divf %202, %cst_108 : f32
    %204 = vector.broadcast %203 : f32 to vector<64x12xf32>
    %205 = arith.subf %194, %204 : vector<64x12xf32>
    %206 = arith.mulf %205, %205 : vector<64x12xf32>
    %207 = vector.shape_cast %206 : vector<64x12xf32> to vector<1x64x12xf32>
    %cst_109 = arith.constant dense<0.000000e+00> : vector<1xf32>
    %208 = vector.multi_reduction <add>, %207, %cst_109 [1, 2] : vector<1x64x12xf32> to vector<1xf32>
    %209 = vector.shape_cast %208 : vector<1xf32> to vector<1x1x1xf32>
    %210 = vector.extract %209[0, 0, 0] : f32 from vector<1x1x1xf32>
    %cst_110 = arith.constant 7.680000e+02 : f32
    %211 = arith.divf %210, %cst_110 : f32
    %212 = vector.broadcast %203 : f32 to vector<64x12xf32>
    %213 = arith.subf %194, %212 : vector<64x12xf32>
    %214 = vector.broadcast %196 : vector<64x1xf32> to vector<64x12xf32>
    %215 = arith.mulf %214, %213 : vector<64x12xf32>
    %cst_111 = arith.constant 9.99999993E-9 : f32
    %216 = arith.addf %211, %cst_111 : f32
    %217 = math.rsqrt %216 : f32
    %218 = vector.broadcast %217 : f32 to vector<64x12xf32>
    %219 = arith.mulf %215, %218 : vector<64x12xf32>
    %220 = vector.broadcast %198 : vector<64x1xf32> to vector<64x12xf32>
    %221 = arith.addf %219, %220 : vector<64x12xf32>
    %c0_112 = arith.constant 0 : index
    %c128_113 = arith.constant 128 : index
    %222 = vector.load %arg23[%c0_112, %c128_113] : memref<64x144xf32, #tpu.memory_space<vmem>>, vector<64x12xf32>
    tpu.vector_store %arg23[%c0_112, %c128_113], %221 {strides = array<i32>} : memref<64x144xf32, #tpu.memory_space<vmem>>, vector<64x12xf32>,
    %cst_114 = arith.constant 0.000000e+00 : f32
    %223 = vector.broadcast %cst_114 : f32 to vector<64x12xf32>
    %c1_115 = arith.constant 1 : index
    %c0_116 = arith.constant 0 : index
    %c0_117 = arith.constant 0 : index
    %c0_118 = arith.constant 0 : index
    %224 = vector.load %arg12[%c1_115, %c0_116, %c0_117, %c0_118] : memref<3x3x64x1xf32, #tpu.memory_space<vmem>>, vector<1x1x64x1xf32>
    %225 = vector.shape_cast %224 : vector<1x1x64x1xf32> to vector<64x1xf32>
    %c0_119 = arith.constant 0 : index
    %c126 = arith.constant 126 : index
    %226 = vector.load %arg23[%c0_119, %c126] : memref<64x144xf32, #tpu.memory_space<vmem>>, vector<64x12xf32>
    %227 = vector.broadcast %225 : vector<64x1xf32> to vector<64x12xf32>
    %228 = arith.mulf %227, %226 : vector<64x12xf32>
    %229 = arith.addf %223, %228 : vector<64x12xf32>
    %c1_120 = arith.constant 1 : index
    %c1_121 = arith.constant 1 : index
    %c0_122 = arith.constant 0 : index
    %c0_123 = arith.constant 0 : index
    %230 = vector.load %arg12[%c1_120, %c1_121, %c0_122, %c0_123] : memref<3x3x64x1xf32, #tpu.memory_space<vmem>>, vector<1x1x64x1xf32>
    %231 = vector.shape_cast %230 : vector<1x1x64x1xf32> to vector<64x1xf32>
    %c0_124 = arith.constant 0 : index
    %c128_125 = arith.constant 128 : index
    %232 = vector.load %arg23[%c0_124, %c128_125] : memref<64x144xf32, #tpu.memory_space<vmem>>, vector<64x12xf32>
    %233 = vector.broadcast %231 : vector<64x1xf32> to vector<64x12xf32>
    %234 = arith.mulf %233, %232 : vector<64x12xf32>
    %235 = arith.addf %229, %234 : vector<64x12xf32>
    %c1_126 = arith.constant 1 : index
    %c2_127 = arith.constant 2 : index
    %c0_128 = arith.constant 0 : index
    %c0_129 = arith.constant 0 : index
    %236 = vector.load %arg12[%c1_126, %c2_127, %c0_128, %c0_129] : memref<3x3x64x1xf32, #tpu.memory_space<vmem>>, vector<1x1x64x1xf32>
    %237 = vector.shape_cast %236 : vector<1x1x64x1xf32> to vector<64x1xf32>
    %c0_130 = arith.constant 0 : index
    %c130 = arith.constant 130 : index
    %238 = vector.load %arg23[%c0_130, %c130] : memref<64x144xf32, #tpu.memory_space<vmem>>, vector<64x12xf32>
    %239 = vector.broadcast %237 : vector<64x1xf32> to vector<64x12xf32>
    %240 = arith.mulf %239, %238 : vector<64x12xf32>
    %241 = arith.addf %235, %240 : vector<64x12xf32>
    %c1_131 = arith.constant 1 : index
    %c0_132 = arith.constant 0 : index
    %c0_133 = arith.constant 0 : index
    %242 = vector.load %arg13[%c1_131, %c0_132, %c0_133] : memref<3x64x1xf32, #tpu.memory_space<vmem>>, vector<1x64x1xf32>
    %243 = vector.shape_cast %242 : vector<1x64x1xf32> to vector<64x1xf32>
    %244 = vector.broadcast %243 : vector<64x1xf32> to vector<64x12xf32>
    %245 = arith.addf %241, %244 : vector<64x12xf32>
    %c3 = arith.constant 3 : index
    %246 = memref.load %arg1[%c3] : memref<7xf32, #tpu.memory_space<smem>>
    %cst_134 = arith.constant 0.000000e+00 : f32
    %247 = vector.broadcast %cst_134 : f32 to vector<64x12xf32>
    %248 = arith.cmpf oge, %245, %247 : vector<64x12xf32>
    %249 = vector.broadcast %246 : f32 to vector<64x12xf32>
    %250 = arith.mulf %249, %245 : vector<64x12xf32>
    %251 = arith.select %248, %245, %250 : vector<64x12xi1>, vector<64x12xf32>
    %c1_135 = arith.constant 1 : index
    %c0_136 = arith.constant 0 : index
    %c0_137 = arith.constant 0 : index
    %252 = vector.load %arg14[%c1_135, %c0_136, %c0_137] : memref<3x64x1xf32, #tpu.memory_space<vmem>>, vector<1x64x1xf32>
    %253 = vector.shape_cast %252 : vector<1x64x1xf32> to vector<64x1xf32>
    %c1_138 = arith.constant 1 : index
    %c0_139 = arith.constant 0 : index
    %c0_140 = arith.constant 0 : index
    %254 = vector.load %arg15[%c1_138, %c0_139, %c0_140] : memref<3x64x1xf32, #tpu.memory_space<vmem>>, vector<1x64x1xf32>
    %255 = vector.shape_cast %254 : vector<1x64x1xf32> to vector<64x1xf32>
    %256 = vector.shape_cast %251 : vector<64x12xf32> to vector<1x64x12xf32>
    %cst_141 = arith.constant dense<0.000000e+00> : vector<1xf32>
    %257 = vector.multi_reduction <add>, %256, %cst_141 [1, 2] : vector<1x64x12xf32> to vector<1xf32>
    %258 = vector.shape_cast %257 : vector<1xf32> to vector<1x1x1xf32>
    %259 = vector.extract %258[0, 0, 0] : f32 from vector<1x1x1xf32>
    %cst_142 = arith.constant 7.680000e+02 : f32
    %260 = arith.divf %259, %cst_142 : f32
    %261 = vector.broadcast %260 : f32 to vector<64x12xf32>
    %262 = arith.subf %251, %261 : vector<64x12xf32>
    %263 = arith.mulf %262, %262 : vector<64x12xf32>
    %264 = vector.shape_cast %263 : vector<64x12xf32> to vector<1x64x12xf32>
    %cst_143 = arith.constant dense<0.000000e+00> : vector<1xf32>
    %265 = vector.multi_reduction <add>, %264, %cst_143 [1, 2] : vector<1x64x12xf32> to vector<1xf32>
    %266 = vector.shape_cast %265 : vector<1xf32> to vector<1x1x1xf32>
    %267 = vector.extract %266[0, 0, 0] : f32 from vector<1x1x1xf32>
    %cst_144 = arith.constant 7.680000e+02 : f32
    %268 = arith.divf %267, %cst_144 : f32
    %269 = vector.broadcast %260 : f32 to vector<64x12xf32>
    %270 = arith.subf %251, %269 : vector<64x12xf32>
    %271 = vector.broadcast %253 : vector<64x1xf32> to vector<64x12xf32>
    %272 = arith.mulf %271, %270 : vector<64x12xf32>
    %cst_145 = arith.constant 9.99999993E-9 : f32
    %273 = arith.addf %268, %cst_145 : f32
    %274 = math.rsqrt %273 : f32
    %275 = vector.broadcast %274 : f32 to vector<64x12xf32>
    %276 = arith.mulf %272, %275 : vector<64x12xf32>
    %277 = vector.broadcast %255 : vector<64x1xf32> to vector<64x12xf32>
    %278 = arith.addf %276, %277 : vector<64x12xf32>
    %c1_146 = arith.constant 1 : index
    %c0_147 = arith.constant 0 : index
    %c0_148 = arith.constant 0 : index
    %279 = vector.load %arg16[%c1_146, %c0_147, %c0_148] : memref<3x16x64xbf16, #tpu.memory_space<vmem>>, vector<1x16x64xbf16>
    %280 = vector.shape_cast %279 : vector<1x16x64xbf16> to vector<16x64xbf16>
    %281 = arith.truncf %278 : vector<64x12xf32> to vector<64x12xbf16>
    %cst_149 = arith.constant dense<0.000000e+00> : vector<16x12xf32>
    %282 = tpu.matmul %280, %281, %cst_149 {dimension_numbers = #tpu.dot_dimension_numbers<[1], [0], [0], [1], [0, 0, 1, 1], [], []>} : vector<16x64xbf16>, vector<64x12xbf16>, vector<16x12xf32> -> vector<16x12xf32>
    %c1_150 = arith.constant 1 : index
    %c0_151 = arith.constant 0 : index
    %c0_152 = arith.constant 0 : index
    %283 = vector.load %arg17[%c1_150, %c0_151, %c0_152] : memref<3x16x1xf32, #tpu.memory_space<vmem>>, vector<1x16x1xf32>
    %284 = vector.shape_cast %283 : vector<1x16x1xf32> to vector<16x1xf32>
    %285 = vector.broadcast %284 : vector<16x1xf32> to vector<16x12xf32>
    %286 = arith.addf %282, %285 : vector<16x12xf32>
    %287 = arith.addf %180, %286 : vector<16x12xf32>
    %c2_153 = arith.constant 2 : index
    %c0_154 = arith.constant 0 : index
    %c0_155 = arith.constant 0 : index
    %288 = vector.load %arg8[%c2_153, %c0_154, %c0_155] : memref<3x64x16xbf16, #tpu.memory_space<vmem>>, vector<1x64x16xbf16>
    %289 = vector.shape_cast %288 : vector<1x64x16xbf16> to vector<64x16xbf16>
    %290 = arith.truncf %287 : vector<16x12xf32> to vector<16x12xbf16>
    %cst_156 = arith.constant dense<0.000000e+00> : vector<64x12xf32>
    %291 = tpu.matmul %289, %290, %cst_156 {dimension_numbers = #tpu.dot_dimension_numbers<[1], [0], [0], [1], [0, 0, 1, 1], [], []>} : vector<64x16xbf16>, vector<16x12xbf16>, vector<64x12xf32> -> vector<64x12xf32>
    %c2_157 = arith.constant 2 : index
    %c0_158 = arith.constant 0 : index
    %c0_159 = arith.constant 0 : index
    %292 = vector.load %arg9[%c2_157, %c0_158, %c0_159] : memref<3x64x1xf32, #tpu.memory_space<vmem>>, vector<1x64x1xf32>
    %293 = vector.shape_cast %292 : vector<1x64x1xf32> to vector<64x1xf32>
    %294 = vector.broadcast %293 : vector<64x1xf32> to vector<64x12xf32>
    %295 = arith.addf %291, %294 : vector<64x12xf32>
    %c4 = arith.constant 4 : index
    %296 = memref.load %arg1[%c4] : memref<7xf32, #tpu.memory_space<smem>>
    %cst_160 = arith.constant 0.000000e+00 : f32
    %297 = vector.broadcast %cst_160 : f32 to vector<64x12xf32>
    %298 = arith.cmpf oge, %295, %297 : vector<64x12xf32>
    %299 = vector.broadcast %296 : f32 to vector<64x12xf32>
    %300 = arith.mulf %299, %295 : vector<64x12xf32>
    %301 = arith.select %298, %295, %300 : vector<64x12xi1>, vector<64x12xf32>
    %c2_161 = arith.constant 2 : index
    %c0_162 = arith.constant 0 : index
    %c0_163 = arith.constant 0 : index
    %302 = vector.load %arg10[%c2_161, %c0_162, %c0_163] : memref<3x64x1xf32, #tpu.memory_space<vmem>>, vector<1x64x1xf32>
    %303 = vector.shape_cast %302 : vector<1x64x1xf32> to vector<64x1xf32>
    %c2_164 = arith.constant 2 : index
    %c0_165 = arith.constant 0 : index
    %c0_166 = arith.constant 0 : index
    %304 = vector.load %arg11[%c2_164, %c0_165, %c0_166] : memref<3x64x1xf32, #tpu.memory_space<vmem>>, vector<1x64x1xf32>
    %305 = vector.shape_cast %304 : vector<1x64x1xf32> to vector<64x1xf32>
    %306 = vector.shape_cast %301 : vector<64x12xf32> to vector<1x64x12xf32>
    %cst_167 = arith.constant dense<0.000000e+00> : vector<1xf32>
    %307 = vector.multi_reduction <add>, %306, %cst_167 [1, 2] : vector<1x64x12xf32> to vector<1xf32>
    %308 = vector.shape_cast %307 : vector<1xf32> to vector<1x1x1xf32>
    %309 = vector.extract %308[0, 0, 0] : f32 from vector<1x1x1xf32>
    %cst_168 = arith.constant 7.680000e+02 : f32
    %310 = arith.divf %309, %cst_168 : f32
    %311 = vector.broadcast %310 : f32 to vector<64x12xf32>
    %312 = arith.subf %301, %311 : vector<64x12xf32>
    %313 = arith.mulf %312, %312 : vector<64x12xf32>
    %314 = vector.shape_cast %313 : vector<64x12xf32> to vector<1x64x12xf32>
    %cst_169 = arith.constant dense<0.000000e+00> : vector<1xf32>
    %315 = vector.multi_reduction <add>, %314, %cst_169 [1, 2] : vector<1x64x12xf32> to vector<1xf32>
    %316 = vector.shape_cast %315 : vector<1xf32> to vector<1x1x1xf32>
    %317 = vector.extract %316[0, 0, 0] : f32 from vector<1x1x1xf32>
    %cst_170 = arith.constant 7.680000e+02 : f32
    %318 = arith.divf %317, %cst_170 : f32
    %319 = vector.broadcast %310 : f32 to vector<64x12xf32>
    %320 = arith.subf %301, %319 : vector<64x12xf32>
    %321 = vector.broadcast %303 : vector<64x1xf32> to vector<64x12xf32>
    %322 = arith.mulf %321, %320 : vector<64x12xf32>
    %cst_171 = arith.constant 9.99999993E-9 : f32
    %323 = arith.addf %318, %cst_171 : f32
    %324 = math.rsqrt %323 : f32
    %325 = vector.broadcast %324 : f32 to vector<64x12xf32>
    %326 = arith.mulf %322, %325 : vector<64x12xf32>
    %327 = vector.broadcast %305 : vector<64x1xf32> to vector<64x12xf32>
    %328 = arith.addf %326, %327 : vector<64x12xf32>
    %c0_172 = arith.constant 0 : index
    %c128_173 = arith.constant 128 : index
    %329 = vector.load %arg23[%c0_172, %c128_173] : memref<64x144xf32, #tpu.memory_space<vmem>>, vector<64x12xf32>
    tpu.vector_store %arg23[%c0_172, %c128_173], %328 {strides = array<i32>} : memref<64x144xf32, #tpu.memory_space<vmem>>, vector<64x12xf32>,
    %cst_174 = arith.constant 0.000000e+00 : f32
    %330 = vector.broadcast %cst_174 : f32 to vector<64x12xf32>
    %c2_175 = arith.constant 2 : index
    %c0_176 = arith.constant 0 : index
    %c0_177 = arith.constant 0 : index
    %c0_178 = arith.constant 0 : index
    %331 = vector.load %arg12[%c2_175, %c0_176, %c0_177, %c0_178] : memref<3x3x64x1xf32, #tpu.memory_space<vmem>>, vector<1x1x64x1xf32>
    %332 = vector.shape_cast %331 : vector<1x1x64x1xf32> to vector<64x1xf32>
    %c0_179 = arith.constant 0 : index
    %c124_180 = arith.constant 124 : index
    %333 = vector.load %arg23[%c0_179, %c124_180] : memref<64x144xf32, #tpu.memory_space<vmem>>, vector<64x12xf32>
    %334 = vector.broadcast %332 : vector<64x1xf32> to vector<64x12xf32>
    %335 = arith.mulf %334, %333 : vector<64x12xf32>
    %336 = arith.addf %330, %335 : vector<64x12xf32>
    %c2_181 = arith.constant 2 : index
    %c1_182 = arith.constant 1 : index
    %c0_183 = arith.constant 0 : index
    %c0_184 = arith.constant 0 : index
    %337 = vector.load %arg12[%c2_181, %c1_182, %c0_183, %c0_184] : memref<3x3x64x1xf32, #tpu.memory_space<vmem>>, vector<1x1x64x1xf32>
    %338 = vector.shape_cast %337 : vector<1x1x64x1xf32> to vector<64x1xf32>
    %c0_185 = arith.constant 0 : index
    %c128_186 = arith.constant 128 : index
    %339 = vector.load %arg23[%c0_185, %c128_186] : memref<64x144xf32, #tpu.memory_space<vmem>>, vector<64x12xf32>
    %340 = vector.broadcast %338 : vector<64x1xf32> to vector<64x12xf32>
    %341 = arith.mulf %340, %339 : vector<64x12xf32>
    %342 = arith.addf %336, %341 : vector<64x12xf32>
    %c2_187 = arith.constant 2 : index
    %c2_188 = arith.constant 2 : index
    %c0_189 = arith.constant 0 : index
    %c0_190 = arith.constant 0 : index
    %343 = vector.load %arg12[%c2_187, %c2_188, %c0_189, %c0_190] : memref<3x3x64x1xf32, #tpu.memory_space<vmem>>, vector<1x1x64x1xf32>
    %344 = vector.shape_cast %343 : vector<1x1x64x1xf32> to vector<64x1xf32>
    %c0_191 = arith.constant 0 : index
    %c132 = arith.constant 132 : index
    %345 = vector.load %arg23[%c0_191, %c132] : memref<64x144xf32, #tpu.memory_space<vmem>>, vector<64x12xf32>
    %346 = vector.broadcast %344 : vector<64x1xf32> to vector<64x12xf32>
    %347 = arith.mulf %346, %345 : vector<64x12xf32>
    %348 = arith.addf %342, %347 : vector<64x12xf32>
    %c2_192 = arith.constant 2 : index
    %c0_193 = arith.constant 0 : index
    %c0_194 = arith.constant 0 : index
    %349 = vector.load %arg13[%c2_192, %c0_193, %c0_194] : memref<3x64x1xf32, #tpu.memory_space<vmem>>, vector<1x64x1xf32>
    %350 = vector.shape_cast %349 : vector<1x64x1xf32> to vector<64x1xf32>
    %351 = vector.broadcast %350 : vector<64x1xf32> to vector<64x12xf32>
    %352 = arith.addf %348, %351 : vector<64x12xf32>
    %c5 = arith.constant 5 : index
    %353 = memref.load %arg1[%c5] : memref<7xf32, #tpu.memory_space<smem>>
    %cst_195 = arith.constant 0.000000e+00 : f32
    %354 = vector.broadcast %cst_195 : f32 to vector<64x12xf32>
    %355 = arith.cmpf oge, %352, %354 : vector<64x12xf32>
    %356 = vector.broadcast %353 : f32 to vector<64x12xf32>
    %357 = arith.mulf %356, %352 : vector<64x12xf32>
    %358 = arith.select %355, %352, %357 : vector<64x12xi1>, vector<64x12xf32>
    %c2_196 = arith.constant 2 : index
    %c0_197 = arith.constant 0 : index
    %c0_198 = arith.constant 0 : index
    %359 = vector.load %arg14[%c2_196, %c0_197, %c0_198] : memref<3x64x1xf32, #tpu.memory_space<vmem>>, vector<1x64x1xf32>
    %360 = vector.shape_cast %359 : vector<1x64x1xf32> to vector<64x1xf32>
    %c2_199 = arith.constant 2 : index
    %c0_200 = arith.constant 0 : index
    %c0_201 = arith.constant 0 : index
    %361 = vector.load %arg15[%c2_199, %c0_200, %c0_201] : memref<3x64x1xf32, #tpu.memory_space<vmem>>, vector<1x64x1xf32>
    %362 = vector.shape_cast %361 : vector<1x64x1xf32> to vector<64x1xf32>
    %363 = vector.shape_cast %358 : vector<64x12xf32> to vector<1x64x12xf32>
    %cst_202 = arith.constant dense<0.000000e+00> : vector<1xf32>
    %364 = vector.multi_reduction <add>, %363, %cst_202 [1, 2] : vector<1x64x12xf32> to vector<1xf32>
    %365 = vector.shape_cast %364 : vector<1xf32> to vector<1x1x1xf32>
    %366 = vector.extract %365[0, 0, 0] : f32 from vector<1x1x1xf32>
    %cst_203 = arith.constant 7.680000e+02 : f32
    %367 = arith.divf %366, %cst_203 : f32
    %368 = vector.broadcast %367 : f32 to vector<64x12xf32>
    %369 = arith.subf %358, %368 : vector<64x12xf32>
    %370 = arith.mulf %369, %369 : vector<64x12xf32>
    %371 = vector.shape_cast %370 : vector<64x12xf32> to vector<1x64x12xf32>
    %cst_204 = arith.constant dense<0.000000e+00> : vector<1xf32>
    %372 = vector.multi_reduction <add>, %371, %cst_204 [1, 2] : vector<1x64x12xf32> to vector<1xf32>
    %373 = vector.shape_cast %372 : vector<1xf32> to vector<1x1x1xf32>
    %374 = vector.extract %373[0, 0, 0] : f32 from vector<1x1x1xf32>
    %cst_205 = arith.constant 7.680000e+02 : f32
    %375 = arith.divf %374, %cst_205 : f32
    %376 = vector.broadcast %367 : f32 to vector<64x12xf32>
    %377 = arith.subf %358, %376 : vector<64x12xf32>
    %378 = vector.broadcast %360 : vector<64x1xf32> to vector<64x12xf32>
    %379 = arith.mulf %378, %377 : vector<64x12xf32>
    %cst_206 = arith.constant 9.99999993E-9 : f32
    %380 = arith.addf %375, %cst_206 : f32
    %381 = math.rsqrt %380 : f32
    %382 = vector.broadcast %381 : f32 to vector<64x12xf32>
    %383 = arith.mulf %379, %382 : vector<64x12xf32>
    %384 = vector.broadcast %362 : vector<64x1xf32> to vector<64x12xf32>
    %385 = arith.addf %383, %384 : vector<64x12xf32>
    %c2_207 = arith.constant 2 : index
    %c0_208 = arith.constant 0 : index
    %c0_209 = arith.constant 0 : index
    %386 = vector.load %arg16[%c2_207, %c0_208, %c0_209] : memref<3x16x64xbf16, #tpu.memory_space<vmem>>, vector<1x16x64xbf16>
    %387 = vector.shape_cast %386 : vector<1x16x64xbf16> to vector<16x64xbf16>
    %388 = arith.truncf %385 : vector<64x12xf32> to vector<64x12xbf16>
    %cst_210 = arith.constant dense<0.000000e+00> : vector<16x12xf32>
    %389 = tpu.matmul %387, %388, %cst_210 {dimension_numbers = #tpu.dot_dimension_numbers<[1], [0], [0], [1], [0, 0, 1, 1], [], []>} : vector<16x64xbf16>, vector<64x12xbf16>, vector<16x12xf32> -> vector<16x12xf32>
    %c2_211 = arith.constant 2 : index
    %c0_212 = arith.constant 0 : index
    %c0_213 = arith.constant 0 : index
    %390 = vector.load %arg17[%c2_211, %c0_212, %c0_213] : memref<3x16x1xf32, #tpu.memory_space<vmem>>, vector<1x16x1xf32>
    %391 = vector.shape_cast %390 : vector<1x16x1xf32> to vector<16x1xf32>
    %392 = vector.broadcast %391 : vector<16x1xf32> to vector<16x12xf32>
    %393 = arith.addf %389, %392 : vector<16x12xf32>
    %394 = arith.addf %287, %393 : vector<16x12xf32>
    %c6 = arith.constant 6 : index
    %395 = memref.load %arg1[%c6] : memref<7xf32, #tpu.memory_space<smem>>
    %cst_214 = arith.constant 0.000000e+00 : f32
    %396 = vector.broadcast %cst_214 : f32 to vector<16x12xf32>
    %397 = arith.cmpf oge, %394, %396 : vector<16x12xf32>
    %398 = vector.broadcast %395 : f32 to vector<16x12xf32>
    %399 = arith.mulf %398, %394 : vector<16x12xf32>
    %400 = arith.select %397, %394, %399 : vector<16x12xi1>, vector<16x12xf32>
    %c0_215 = arith.constant 0 : index
    %c0_216 = arith.constant 0 : index
    %401 = vector.load %arg18[%c0_215, %c0_216] : memref<64x16xbf16, #tpu.memory_space<vmem>>, vector<64x16xbf16>
    %402 = arith.truncf %400 : vector<16x12xf32> to vector<16x12xbf16>
    %cst_217 = arith.constant dense<0.000000e+00> : vector<64x12xf32>
    %403 = tpu.matmul %401, %402, %cst_217 {dimension_numbers = #tpu.dot_dimension_numbers<[1], [0], [0], [1], [0, 0, 1, 1], [], []>} : vector<64x16xbf16>, vector<16x12xbf16>, vector<64x12xf32> -> vector<64x12xf32>
    %c0_218 = arith.constant 0 : index
    %c0_219 = arith.constant 0 : index
    %404 = vector.load %arg19[%c0_218, %c0_219] : memref<64x1xf32, #tpu.memory_space<vmem>>, vector<64x1xf32>
    %405 = vector.broadcast %404 : vector<64x1xf32> to vector<64x12xf32>
    %406 = arith.addf %403, %405 : vector<64x12xf32>
    %407 = arith.negf %406 : vector<64x12xf32>
    %408 = math.exp %407 : vector<64x12xf32>
    %cst_220 = arith.constant 1.000000e+00 : f32
    %409 = vector.broadcast %cst_220 : f32 to vector<64x12xf32>
    %410 = arith.addf %409, %408 : vector<64x12xf32>
    %411 = arith.divf %409, %410 : vector<64x12xf32>
    %c0_221 = arith.constant 0 : index
    %c0_222 = arith.constant 0 : index
    %412 = vector.load %arg20[%c0_221, %c0_222] : memref<16x32xf32, #tpu.memory_space<vmem>>, vector<16x32xf32>
    %413 = vector.extract_strided_slice %411 {offsets = [0, 0], sizes = [32, 12], strides = [1, 1]} : vector<64x12xf32> to vector<32x12xf32>
    %414 = arith.mulf %413, %5 : vector<32x12xf32>
    %cst_223 = arith.constant dense<0.000000e+00> : vector<16x12xf32>
    %415 = tpu.matmul %412, %414, %cst_223 {dimension_numbers = #tpu.dot_dimension_numbers<[1], [0], [0], [1], [0, 0, 1, 1], [], []>} : vector<16x32xf32>, vector<32x12xf32>, vector<16x12xf32> -> vector<16x12xf32>
    %416 = vector.extract_strided_slice %415 {offsets = [0, 0], sizes = [8, 12], strides = [1, 1]} : vector<16x12xf32> to vector<8x12xf32>
    %417 = vector.extract_strided_slice %415 {offsets = [8, 0], sizes = [8, 12], strides = [1, 1]} : vector<16x12xf32> to vector<8x12xf32>
    %418 = vector.extract_strided_slice %416 {offsets = [0, 0], sizes = [8, 1], strides = [1, 1]} : vector<8x12xf32> to vector<8x1xf32>
    %c0_224 = arith.constant 0 : index
    %c0_225 = arith.constant 0 : index
    %c0_226 = arith.constant 0 : index
    %c0_227 = arith.constant 0 : index
    %419 = vector.load %arg21[%c0_224, %c0_225, %c0_226, %c0_227] : memref<1x2x8x13xf32, #tpu.memory_space<vmem>>, vector<1x1x8x1xf32>
    %420 = vector.shape_cast %419 : vector<1x1x8x1xf32> to vector<8x1xf32>
    %421 = vector.shape_cast %418 : vector<8x1xf32> to vector<1x1x8x1xf32>
    tpu.vector_store %arg21[%c0_224, %c0_225, %c0_226, %c0_227], %421 {strides = array<i32>} : memref<1x2x8x13xf32, #tpu.memory_space<vmem>>, vector<1x1x8x1xf32>,
    %422 = vector.extract_strided_slice %416 {offsets = [0, 1], sizes = [8, 11], strides = [1, 1]} : vector<8x12xf32> to vector<8x11xf32>
    %423 = vector.extract_strided_slice %417 {offsets = [0, 0], sizes = [8, 11], strides = [1, 1]} : vector<8x12xf32> to vector<8x11xf32>
    %424 = arith.addf %422, %423 : vector<8x11xf32>
    %c0_228 = arith.constant 0 : index
    %c0_229 = arith.constant 0 : index
    %c0_230 = arith.constant 0 : index
    %c1_231 = arith.constant 1 : index
    %425 = vector.load %arg21[%c0_228, %c0_229, %c0_230, %c1_231] : memref<1x2x8x13xf32, #tpu.memory_space<vmem>>, vector<1x1x8x11xf32>
    %426 = vector.shape_cast %425 : vector<1x1x8x11xf32> to vector<8x11xf32>
    %427 = vector.shape_cast %424 : vector<8x11xf32> to vector<1x1x8x11xf32>
    tpu.vector_store %arg21[%c0_228, %c0_229, %c0_230, %c1_231], %427 {strides = array<i32>} : memref<1x2x8x13xf32, #tpu.memory_space<vmem>>, vector<1x1x8x11xf32>,
    %428 = vector.extract_strided_slice %417 {offsets = [0, 11], sizes = [8, 1], strides = [1, 1]} : vector<8x12xf32> to vector<8x1xf32>
    %c0_232 = arith.constant 0 : index
    %c0_233 = arith.constant 0 : index
    %c0_234 = arith.constant 0 : index
    %c12_235 = arith.constant 12 : index
    %429 = vector.load %arg21[%c0_232, %c0_233, %c0_234, %c12_235] : memref<1x2x8x13xf32, #tpu.memory_space<vmem>>, vector<1x1x8x1xf32>
    %430 = vector.shape_cast %429 : vector<1x1x8x1xf32> to vector<8x1xf32>
    %431 = vector.shape_cast %428 : vector<8x1xf32> to vector<1x1x8x1xf32>
    tpu.vector_store %arg21[%c0_232, %c0_233, %c0_234, %c12_235], %431 {strides = array<i32>} : memref<1x2x8x13xf32, #tpu.memory_space<vmem>>, vector<1x1x8x1xf32>,
    %432 = vector.extract_strided_slice %411 {offsets = [32, 0], sizes = [32, 12], strides = [1, 1]} : vector<64x12xf32> to vector<32x12xf32>
    %433 = arith.mulf %432, %5 : vector<32x12xf32>
    %cst_236 = arith.constant dense<0.000000e+00> : vector<16x12xf32>
    %434 = tpu.matmul %412, %433, %cst_236 {dimension_numbers = #tpu.dot_dimension_numbers<[1], [0], [0], [1], [0, 0, 1, 1], [], []>} : vector<16x32xf32>, vector<32x12xf32>, vector<16x12xf32> -> vector<16x12xf32>
    %435 = vector.extract_strided_slice %434 {offsets = [0, 0], sizes = [8, 12], strides = [1, 1]} : vector<16x12xf32> to vector<8x12xf32>
    %436 = vector.extract_strided_slice %434 {offsets = [8, 0], sizes = [8, 12], strides = [1, 1]} : vector<16x12xf32> to vector<8x12xf32>
    %437 = vector.extract_strided_slice %435 {offsets = [0, 0], sizes = [8, 1], strides = [1, 1]} : vector<8x12xf32> to vector<8x1xf32>
    %c0_237 = arith.constant 0 : index
    %c1_238 = arith.constant 1 : index
    %c0_239 = arith.constant 0 : index
    %c0_240 = arith.constant 0 : index
    %438 = vector.load %arg21[%c0_237, %c1_238, %c0_239, %c0_240] : memref<1x2x8x13xf32, #tpu.memory_space<vmem>>, vector<1x1x8x1xf32>
    %439 = vector.shape_cast %438 : vector<1x1x8x1xf32> to vector<8x1xf32>
    %440 = vector.shape_cast %437 : vector<8x1xf32> to vector<1x1x8x1xf32>
    tpu.vector_store %arg21[%c0_237, %c1_238, %c0_239, %c0_240], %440 {strides = array<i32>} : memref<1x2x8x13xf32, #tpu.memory_space<vmem>>, vector<1x1x8x1xf32>,
    %441 = vector.extract_strided_slice %435 {offsets = [0, 1], sizes = [8, 11], strides = [1, 1]} : vector<8x12xf32> to vector<8x11xf32>
    %442 = vector.extract_strided_slice %436 {offsets = [0, 0], sizes = [8, 11], strides = [1, 1]} : vector<8x12xf32> to vector<8x11xf32>
    %443 = arith.addf %441, %442 : vector<8x11xf32>
    %c0_241 = arith.constant 0 : index
    %c1_242 = arith.constant 1 : index
    %c0_243 = arith.constant 0 : index
    %c1_244 = arith.constant 1 : index
    %444 = vector.load %arg21[%c0_241, %c1_242, %c0_243, %c1_244] : memref<1x2x8x13xf32, #tpu.memory_space<vmem>>, vector<1x1x8x11xf32>
    %445 = vector.shape_cast %444 : vector<1x1x8x11xf32> to vector<8x11xf32>
    %446 = vector.shape_cast %443 : vector<8x11xf32> to vector<1x1x8x11xf32>
    tpu.vector_store %arg21[%c0_241, %c1_242, %c0_243, %c1_244], %446 {strides = array<i32>} : memref<1x2x8x13xf32, #tpu.memory_space<vmem>>, vector<1x1x8x11xf32>,
    %447 = vector.extract_strided_slice %436 {offsets = [0, 11], sizes = [8, 1], strides = [1, 1]} : vector<8x12xf32> to vector<8x1xf32>
    %c0_245 = arith.constant 0 : index
    %c1_246 = arith.constant 1 : index
    %c0_247 = arith.constant 0 : index
    %c12_248 = arith.constant 12 : index
    %448 = vector.load %arg21[%c0_245, %c1_246, %c0_247, %c12_248] : memref<1x2x8x13xf32, #tpu.memory_space<vmem>>, vector<1x1x8x1xf32>
    %449 = vector.shape_cast %448 : vector<1x1x8x1xf32> to vector<8x1xf32>
    %450 = vector.shape_cast %447 : vector<8x1xf32> to vector<1x1x8x1xf32>
    tpu.vector_store %arg21[%c0_245, %c1_246, %c0_247, %c12_248], %450 {strides = array<i32>} : memref<1x2x8x13xf32, #tpu.memory_space<vmem>>, vector<1x1x8x1xf32>,
    return
  }
  func.func @transform_0(%arg0: i32) -> i32 {
    %c0_i32 = arith.constant 0 : i32
    %c0_i32_0 = arith.constant 0 : i32
    return %c0_i32 : i32
  }
  func.func @transform_1(%arg0: i32) -> (i32, i32, i32) {
    %c0_i32 = arith.constant 0 : i32
    %c0_i32_0 = arith.constant 0 : i32
    %c0_i32_1 = arith.constant 0 : i32
    return %arg0, %c0_i32, %c0_i32_0 : i32, i32, i32
  }
  func.func @transform_2(%arg0: i32) -> (i32, i32) {
    %c0_i32 = arith.constant 0 : i32
    %c0_i32_0 = arith.constant 0 : i32
    %c0_i32_1 = arith.constant 0 : i32
    return %c0_i32, %c0_i32_0 : i32, i32
  }
  func.func @transform_3(%arg0: i32) -> (i32, i32) {
    %c0_i32 = arith.constant 0 : i32
    %c0_i32_0 = arith.constant 0 : i32
    %c0_i32_1 = arith.constant 0 : i32
    return %c0_i32, %c0_i32_0 : i32, i32
  }
  func.func @transform_4(%arg0: i32) -> (i32, i32) {
    %c0_i32 = arith.constant 0 : i32
    %c0_i32_0 = arith.constant 0 : i32
    %c0_i32_1 = arith.constant 0 : i32
    return %c0_i32, %c0_i32_0 : i32, i32
  }
  func.func @transform_5(%arg0: i32) -> (i32, i32) {
    %c0_i32 = arith.constant 0 : i32
    %c0_i32_0 = arith.constant 0 : i32
    %c0_i32_1 = arith.constant 0 : i32
    return %c0_i32, %c0_i32_0 : i32, i32
  }
  func.func @transform_6(%arg0: i32) -> (i32, i32) {
    %c0_i32 = arith.constant 0 : i32
    %c0_i32_0 = arith.constant 0 : i32
    %c0_i32_1 = arith.constant 0 : i32
    return %c0_i32, %c0_i32_0 : i32, i32
  }
  func.func @transform_7(%arg0: i32) -> (i32, i32, i32) {
    %c0_i32 = arith.constant 0 : i32
    %c0_i32_0 = arith.constant 0 : i32
    %c0_i32_1 = arith.constant 0 : i32
    %c0_i32_2 = arith.constant 0 : i32
    return %c0_i32, %c0_i32_0, %c0_i32_1 : i32, i32, i32
  }
  func.func @transform_8(%arg0: i32) -> (i32, i32, i32) {
    %c0_i32 = arith.constant 0 : i32
    %c0_i32_0 = arith.constant 0 : i32
    %c0_i32_1 = arith.constant 0 : i32
    %c0_i32_2 = arith.constant 0 : i32
    return %c0_i32, %c0_i32_0, %c0_i32_1 : i32, i32, i32
  }
  func.func @transform_9(%arg0: i32) -> (i32, i32, i32) {
    %c0_i32 = arith.constant 0 : i32
    %c0_i32_0 = arith.constant 0 : i32
    %c0_i32_1 = arith.constant 0 : i32
    %c0_i32_2 = arith.constant 0 : i32
    return %c0_i32, %c0_i32_0, %c0_i32_1 : i32, i32, i32
  }
  func.func @transform_10(%arg0: i32) -> (i32, i32, i32) {
    %c0_i32 = arith.constant 0 : i32
    %c0_i32_0 = arith.constant 0 : i32
    %c0_i32_1 = arith.constant 0 : i32
    %c0_i32_2 = arith.constant 0 : i32
    return %c0_i32, %c0_i32_0, %c0_i32_1 : i32, i32, i32
  }
  func.func @transform_11(%arg0: i32) -> (i32, i32, i32, i32) {
    %c0_i32 = arith.constant 0 : i32
    %c0_i32_0 = arith.constant 0 : i32
    %c0_i32_1 = arith.constant 0 : i32
    %c0_i32_2 = arith.constant 0 : i32
    %c0_i32_3 = arith.constant 0 : i32
    return %c0_i32, %c0_i32_0, %c0_i32_1, %c0_i32_2 : i32, i32, i32, i32
  }
  func.func @transform_12(%arg0: i32) -> (i32, i32, i32) {
    %c0_i32 = arith.constant 0 : i32
    %c0_i32_0 = arith.constant 0 : i32
    %c0_i32_1 = arith.constant 0 : i32
    %c0_i32_2 = arith.constant 0 : i32
    return %c0_i32, %c0_i32_0, %c0_i32_1 : i32, i32, i32
  }
  func.func @transform_13(%arg0: i32) -> (i32, i32, i32) {
    %c0_i32 = arith.constant 0 : i32
    %c0_i32_0 = arith.constant 0 : i32
    %c0_i32_1 = arith.constant 0 : i32
    %c0_i32_2 = arith.constant 0 : i32
    return %c0_i32, %c0_i32_0, %c0_i32_1 : i32, i32, i32
  }
  func.func @transform_14(%arg0: i32) -> (i32, i32, i32) {
    %c0_i32 = arith.constant 0 : i32
    %c0_i32_0 = arith.constant 0 : i32
    %c0_i32_1 = arith.constant 0 : i32
    %c0_i32_2 = arith.constant 0 : i32
    return %c0_i32, %c0_i32_0, %c0_i32_1 : i32, i32, i32
  }
  func.func @transform_15(%arg0: i32) -> (i32, i32, i32) {
    %c0_i32 = arith.constant 0 : i32
    %c0_i32_0 = arith.constant 0 : i32
    %c0_i32_1 = arith.constant 0 : i32
    %c0_i32_2 = arith.constant 0 : i32
    return %c0_i32, %c0_i32_0, %c0_i32_1 : i32, i32, i32
  }
  func.func @transform_16(%arg0: i32) -> (i32, i32, i32) {
    %c0_i32 = arith.constant 0 : i32
    %c0_i32_0 = arith.constant 0 : i32
    %c0_i32_1 = arith.constant 0 : i32
    %c0_i32_2 = arith.constant 0 : i32
    return %c0_i32, %c0_i32_0, %c0_i32_1 : i32, i32, i32
  }
  func.func @transform_17(%arg0: i32) -> (i32, i32) {
    %c0_i32 = arith.constant 0 : i32
    %c0_i32_0 = arith.constant 0 : i32
    %c0_i32_1 = arith.constant 0 : i32
    return %c0_i32, %c0_i32_0 : i32, i32
  }
  func.func @transform_18(%arg0: i32) -> (i32, i32) {
    %c0_i32 = arith.constant 0 : i32
    %c0_i32_0 = arith.constant 0 : i32
    %c0_i32_1 = arith.constant 0 : i32
    return %c0_i32, %c0_i32_0 : i32, i32
  }
  func.func @transform_19(%arg0: i32) -> (i32, i32) {
    %c0_i32 = arith.constant 0 : i32
    %c0_i32_0 = arith.constant 0 : i32
    %c0_i32_1 = arith.constant 0 : i32
    return %c0_i32, %c0_i32_0 : i32, i32
  }
  func.func @transform_20(%arg0: i32) -> (i32, i32, i32, i32) {
    %c0_i32 = arith.constant 0 : i32
    %c0_i32_0 = arith.constant 0 : i32
    %c0_i32_1 = arith.constant 0 : i32
    %c0_i32_2 = arith.constant 0 : i32
    return %arg0, %c0_i32, %c0_i32_0, %c0_i32_1 : i32, i32, i32, i32
  }
}

</mosaic_0001>

<llo_original>
// kernel: net_forward.1
$region0: #{net_forward.1}
  #allocation0 [shape = 'u32[]', space=smem, size = 0x4, offset = 0x4, fixed_abs, tag = 'smem constant byte address 0x4 - core index']
  #allocation1 [shape = 'u32[72,128]{1,0:T(1,128)}', space=vmem, size = 0x9000, scoped, tag = 'internal scratch']
  #allocation2 [shape = 'f32[32,24]{1,0:T(8,128)}', space=vmem, size = 0x4000, scoped, tag = 'scratch operand']
  #allocation3 [shape = 'f32[64,144]{1,0:T(8,128)}', space=vmem, size = 0x10000, scoped, tag = 'scratch operand']
  %s0 = inlined_call_operand.vmem [shape: f32[7], index: 0, kind: input, shape index: {}]
  %s1 = inlined_call_operand.vmem [shape: f32[2,16,24], index: 1, kind: input, shape index: {}]
  %s2 = inlined_call_operand.vmem [shape: bf16[32,16], index: 2, kind: input, shape index: {}]
  %s3 = inlined_call_operand.vmem [shape: f32[32,1], index: 3, kind: input, shape index: {}]
  %s4 = inlined_call_operand.vmem [shape: f32[32,1], index: 4, kind: input, shape index: {}]
  %s5 = inlined_call_operand.vmem [shape: bf16[16,32], index: 5, kind: input, shape index: {}]
  %s6 = inlined_call_operand.vmem [shape: f32[16,1], index: 6, kind: input, shape index: {}]
  %s7 = inlined_call_operand.vmem [shape: bf16[3,64,16], index: 7, kind: input, shape index: {}]
  %s8 = inlined_call_operand.vmem [shape: f32[3,64,1], index: 8, kind: input, shape index: {}]
  %s9 = inlined_call_operand.vmem [shape: f32[3,64,1], index: 9, kind: input, shape index: {}]
  %s10 = inlined_call_operand.vmem [shape: f32[3,64,1], index: 10, kind: input, shape index: {}]
  %s11 = inlined_call_operand.vmem [shape: f32[3,3,64,1], index: 11, kind: input, shape index: {}]
  %s12 = inlined_call_operand.vmem [shape: f32[3,64,1], index: 12, kind: input, shape index: {}]
  %s13 = inlined_call_operand.vmem [shape: f32[3,64,1], index: 13, kind: input, shape index: {}]
  %s14 = inlined_call_operand.vmem [shape: f32[3,64,1], index: 14, kind: input, shape index: {}]
  %s15 = inlined_call_operand.vmem [shape: bf16[3,16,64], index: 15, kind: input, shape index: {}]
  %s16 = inlined_call_operand.vmem [shape: f32[3,16,1], index: 16, kind: input, shape index: {}]
  %s17 = inlined_call_operand.vmem [shape: bf16[64,16], index: 17, kind: input, shape index: {}]
  %s18 = inlined_call_operand.vmem [shape: f32[64,1], index: 18, kind: input, shape index: {}]
  %s19 = inlined_call_operand.vmem [shape: f32[16,32], index: 19, kind: input, shape index: {}]
  %s20 = inlined_call_operand.vmem [shape: f32[2,2,8,13], index: 20, kind: output, shape index: {}]
  %s21 = sld [smem:[#allocation0]]
  $region117: #{net_forward.1} parent=0
    _
  %s23 = ssub.s32 1, %s21
  %s24 = scalar_select 0, %s23, %s21
  $region1: #{net_forward.1} parent=0
    #allocation4 [shape = 'u8[512]{0}', space=smem, size = 0x200, scoped, tag = 'input window, operand 0, single buffered']
    #allocation5 [shape = 's32[2]{0}', space=sflag, size = 0x8, scoped, tag = 'scoped memory for net_forward.1']
    %25 = vsyncpa [#allocation5], 0
    loop: start=0, step=1, limit=4
    $region2: #{net_forward.1} parent=1 // loop_pre_header
      _
    $region3: #{net_forward.1} parent=1 // loop_header
      %s27 = sphi 0, %s31
      %p28 = scmp.ge.s32.totalorder %s27, 4
      %s35 = sphi 0, %s35
      %s37 = sphi 0, %s35
      %s38 = sphi 0, %s37
      %s52 = sphi 0, %s38
      %s58 = sphi 0, %s60
      %s61 = sphi 0, %s58
      %s62 = sphi 0, %s61
      %s78 = sphi 0, %s62
      %s82 = sphi 0, %s82
      %s84 = sphi 0, %s82
      %s85 = sphi 0, %s84
      %s99 = sphi 0, %s85
      %s103 = sphi 0, %s103
      %s105 = sphi 0, %s103
      %s106 = sphi 0, %s105
      %s120 = sphi 0, %s106
      %s124 = sphi 0, %s124
      %s126 = sphi 0, %s124
      %s127 = sphi 0, %s126
      %s141 = sphi 0, %s127
      %s145 = sphi 0, %s145
      %s147 = sphi 0, %s145
      %s148 = sphi 0, %s147
      %s162 = sphi 0, %s148
      %s166 = sphi 0, %s166
      %s168 = sphi 0, %s166
      %s169 = sphi 0, %s168
      %s183 = sphi 0, %s169
      %s187 = sphi 0, %s187
      %s189 = sphi 0, %s187
      %s190 = sphi 0, %s189
      %s204 = sphi 0, %s190
      %s208 = sphi 0, %s208
      %s210 = sphi 0, %s208
      %s211 = sphi 0, %s210
      %s225 = sphi 0, %s211
      %s229 = sphi 0, %s229
      %s231 = sphi 0, %s229
      %s232 = sphi 0, %s231
      %s246 = sphi 0, %s232
      %s250 = sphi 0, %s250
      %s252 = sphi 0, %s250
      %s253 = sphi 0, %s252
      %s267 = sphi 0, %s253
      %s271 = sphi 0, %s271
      %s273 = sphi 0, %s271
      %s274 = sphi 0, %s273
      %s288 = sphi 0, %s274
      %s292 = sphi 0, %s292
      %s294 = sphi 0, %s292
      %s295 = sphi 0, %s294
      %s309 = sphi 0, %s295
      %s313 = sphi 0, %s313
      %s315 = sphi 0, %s313
      %s316 = sphi 0, %s315
      %s330 = sphi 0, %s316
      %s334 = sphi 0, %s334
      %s336 = sphi 0, %s334
      %s337 = sphi 0, %s336
      %s351 = sphi 0, %s337
      %s355 = sphi 0, %s355
      %s357 = sphi 0, %s355
      %s358 = sphi 0, %s357
      %s372 = sphi 0, %s358
      %s376 = sphi 0, %s376
      %s378 = sphi 0, %s376
      %s379 = sphi 0, %s378
      %s393 = sphi 0, %s379
      %s397 = sphi 0, %s397
      %s399 = sphi 0, %s397
      %s400 = sphi 0, %s399
      %s414 = sphi 0, %s400
      %s418 = sphi 0, %s418
      %s420 = sphi 0, %s418
      %s421 = sphi 0, %s420
      %s435 = sphi 0, %s421
      %s439 = sphi 0, %s439
      %s441 = sphi 0, %s439
      %s442 = sphi 0, %s441
      %s456 = sphi 0, %s442
      %s462 = sphi 0, %s464
      %s465 = sphi 0, %s462
      %s466 = sphi 0, %s465
      %s482 = sphi 0, %s466
    $region4: #{net_forward.1} parent=1 // loop_header_branch
      %30 = sbr.rel (%p28) target = $region8
    $region5: #{net_forward.1} parent=1 // loop_body
      %s32 = ssub.s32 %s27, 1
      %s33 = ssub.s32 %s27, 2
      %s34 = sadd.s32 %s27, 1
      %s36 = sadd.s32 %s35, 1
      %p39 = scmp.eq.s32.totalorder %s27, 1
      %p40 = scmp.ne.s32.totalorder %s35, %s37
      %p41 = scmp.eq.s32.totalorder %s27, 0
      %p42 = por %p40, %p41
      %p43 = scmp.ne.s32.totalorder %s35, %s37
      %p44 = scmp.eq.s32.totalorder %s32, 1
      %p45 = por %p43, %p44
      %p46 = scmp.ne.s32.totalorder %s37, %s38
      %p47 = scmp.eq.s32.totalorder %s32, 0
      %p48 = por %p46, %p47
      %p49 = scmp.ne.s32.totalorder %s37, %s38
      %p50 = scmp.eq.s32.totalorder %s33, 1
      %p51 = por %p49, %p50
      %p53 = scmp.ne.s32.totalorder %s38, %s52
      %p54 = scmp.eq.s32.totalorder %s33, 0
      %p55 = por %p53, %p54
      %s56 = ssub.s32 %s27, %s34
      %p57 = scmp.eq.s32.totalorder %s56, 0
      %s59 = sadd.s32 %s58, 1
      %s60 = scalar_select %p57, %s58, %s59
      %p63 = pneg %p57
      %p64 = scmp.eq.s32.totalorder %s27, 1
      %p65 = por %p63, %p64
      %p66 = scmp.ne.s32.totalorder %s58, %s61
      %p67 = scmp.eq.s32.totalorder %s27, 0
      %p68 = por %p66, %p67
      %p69 = scmp.ne.s32.totalorder %s58, %s61
      %p70 = scmp.eq.s32.totalorder %s32, 1
      %p71 = por %p69, %p70
      %p72 = scmp.ne.s32.totalorder %s61, %s62
      %p73 = scmp.eq.s32.totalorder %s32, 0
      %p74 = por %p72, %p73
      %p75 = scmp.ne.s32.totalorder %s61, %s62
      %p76 = scmp.eq.s32.totalorder %s33, 1
      %p77 = por %p75, %p76
      %p79 = scmp.ne.s32.totalorder %s62, %s78
      %p80 = scmp.eq.s32.totalorder %s33, 0
      %p81 = por %p79, %p80
      %s83 = sadd.s32 %s82, 1
      %p86 = scmp.eq.s32.totalorder %s27, 1
      %p87 = scmp.ne.s32.totalorder %s82, %s84
      %p88 = scmp.eq.s32.totalorder %s27, 0
      %p89 = por %p87, %p88
      %p90 = scmp.ne.s32.totalorder %s82, %s84
      %p91 = scmp.eq.s32.totalorder %s32, 1
      %p92 = por %p90, %p91
      %p93 = scmp.ne.s32.totalorder %s84, %s85
      %p94 = scmp.eq.s32.totalorder %s32, 0
      %p95 = por %p93, %p94
      %p96 = scmp.ne.s32.totalorder %s84, %s85
      %p97 = scmp.eq.s32.totalorder %s33, 1
      %p98 = por %p96, %p97
      %p100 = scmp.ne.s32.totalorder %s85, %s99
      %p101 = scmp.eq.s32.totalorder %s33, 0
      %p102 = por %p100, %p101
      %s104 = sadd.s32 %s103, 1
      %p107 = scmp.eq.s32.totalorder %s27, 1
      %p108 = scmp.ne.s32.totalorder %s103, %s105
      %p109 = scmp.eq.s32.totalorder %s27, 0
      %p110 = por %p108, %p109
      %p111 = scmp.ne.s32.totalorder %s103, %s105
      %p112 = scmp.eq.s32.totalorder %s32, 1
      %p113 = por %p111, %p112
      %p114 = scmp.ne.s32.totalorder %s105, %s106
      %p115 = scmp.eq.s32.totalorder %s32, 0
      %p116 = por %p114, %p115
      %p117 = scmp.ne.s32.totalorder %s105, %s106
      %p118 = scmp.eq.s32.totalorder %s33, 1
      %p119 = por %p117, %p118
      %p121 = scmp.ne.s32.totalorder %s106, %s120
      %p122 = scmp.eq.s32.totalorder %s33, 0
      %p123 = por %p121, %p122
      %s125 = sadd.s32 %s124, 1
      %p128 = scmp.eq.s32.totalorder %s27, 1
      %p129 = scmp.ne.s32.totalorder %s124, %s126
      %p130 = scmp.eq.s32.totalorder %s27, 0
      %p131 = por %p129, %p130
      %p132 = scmp.ne.s32.totalorder %s124, %s126
      %p133 = scmp.eq.s32.totalorder %s32, 1
      %p134 = por %p132, %p133
      %p135 = scmp.ne.s32.totalorder %s126, %s127
      %p136 = scmp.eq.s32.totalorder %s32, 0
      %p137 = por %p135, %p136
      %p138 = scmp.ne.s32.totalorder %s126, %s127
      %p139 = scmp.eq.s32.totalorder %s33, 1
      %p140 = por %p138, %p139
      %p142 = scmp.ne.s32.totalorder %s127, %s141
      %p143 = scmp.eq.s32.totalorder %s33, 0
      %p144 = por %p142, %p143
      %s146 = sadd.s32 %s145, 1
      %p149 = scmp.eq.s32.totalorder %s27, 1
      %p150 = scmp.ne.s32.totalorder %s145, %s147
      %p151 = scmp.eq.s32.totalorder %s27, 0
      %p152 = por %p150, %p151
      %p153 = scmp.ne.s32.totalorder %s145, %s147
      %p154 = scmp.eq.s32.totalorder %s32, 1
      %p155 = por %p153, %p154
      %p156 = scmp.ne.s32.totalorder %s147, %s148
      %p157 = scmp.eq.s32.totalorder %s32, 0
      %p158 = por %p156, %p157
      %p159 = scmp.ne.s32.totalorder %s147, %s148
      %p160 = scmp.eq.s32.totalorder %s33, 1
      %p161 = por %p159, %p160
      %p163 = scmp.ne.s32.totalorder %s148, %s162
      %p164 = scmp.eq.s32.totalorder %s33, 0
      %p165 = por %p163, %p164
      %s167 = sadd.s32 %s166, 1
      %p170 = scmp.eq.s32.totalorder %s27, 1
      %p171 = scmp.ne.s32.totalorder %s166, %s168
      %p172 = scmp.eq.s32.totalorder %s27, 0
      %p173 = por %p171, %p172
      %p174 = scmp.ne.s32.totalorder %s166, %s168
      %p175 = scmp.eq.s32.totalorder %s32, 1
      %p176 = por %p174, %p175
      %p177 = scmp.ne.s32.totalorder %s168, %s169
      %p178 = scmp.eq.s32.totalorder %s32, 0
      %p179 = por %p177, %p178
      %p180 = scmp.ne.s32.totalorder %s168, %s169
      %p181 = scmp.eq.s32.totalorder %s33, 1
      %p182 = por %p180, %p181
      %p184 = scmp.ne.s32.totalorder %s169, %s183
      %p185 = scmp.eq.s32.totalorder %s33, 0
      %p186 = por %p184, %p185
      %s188 = sadd.s32 %s187, 1
      %p191 = scmp.eq.s32.totalorder %s27, 1
      %p192 = scmp.ne.s32.totalorder %s187, %s189
      %p193 = scmp.eq.s32.totalorder %s27, 0
      %p194 = por %p192, %p193
      %p195 = scmp.ne.s32.totalorder %s187, %s189
      %p196 = scmp.eq.s32.totalorder %s32, 1
      %p197 = por %p195, %p196
      %p198 = scmp.ne.s32.totalorder %s189, %s190
      %p199 = scmp.eq.s32.totalorder %s32, 0
      %p200 = por %p198, %p199
      %p201 = scmp.ne.s32.totalorder %s189, %s190
      %p202 = scmp.eq.s32.totalorder %s33, 1
      %p203 = por %p201, %p202
      %p205 = scmp.ne.s32.totalorder %s190, %s204
      %p206 = scmp.eq.s32.totalorder %s33, 0
      %p207 = por %p205, %p206
      %s209 = sadd.s32 %s208, 1
      %p212 = scmp.eq.s32.totalorder %s27, 1
      %p213 = scmp.ne.s32.totalorder %s208, %s210
      %p214 = scmp.eq.s32.totalorder %s27, 0
      %p215 = por %p213, %p214
      %p216 = scmp.ne.s32.totalorder %s208, %s210
      %p217 = scmp.eq.s32.totalorder %s32, 1
      %p218 = por %p216, %p217
      %p219 = scmp.ne.s32.totalorder %s210, %s211
      %p220 = scmp.eq.s32.totalorder %s32, 0
      %p221 = por %p219, %p220
      %p222 = scmp.ne.s32.totalorder %s210, %s211
      %p223 = scmp.eq.s32.totalorder %s33, 1
      %p224 = por %p222, %p223
      %p226 = scmp.ne.s32.totalorder %s211, %s225
      %p227 = scmp.eq.s32.totalorder %s33, 0
      %p228 = por %p226, %p227
      %s230 = sadd.s32 %s229, 1
      %p233 = scmp.eq.s32.totalorder %s27, 1
      %p234 = scmp.ne.s32.totalorder %s229, %s231
      %p235 = scmp.eq.s32.totalorder %s27, 0
      %p236 = por %p234, %p235
      %p237 = scmp.ne.s32.totalorder %s229, %s231
      %p238 = scmp.eq.s32.totalorder %s32, 1
      %p239 = por %p237, %p238
      %p240 = scmp.ne.s32.totalorder %s231, %s232
      %p241 = scmp.eq.s32.totalorder %s32, 0
      %p242 = por %p240, %p241
      %p243 = scmp.ne.s32.totalorder %s231, %s232
      %p244 = scmp.eq.s32.totalorder %s33, 1
      %p245 = por %p243, %p244
      %p247 = scmp.ne.s32.totalorder %s232, %s246
      %p248 = scmp.eq.s32.totalorder %s33, 0
      %p249 = por %p247, %p248
      %s251 = sadd.s32 %s250, 1
      %p254 = scmp.eq.s32.totalorder %s27, 1
      %p255 = scmp.ne.s32.totalorder %s250, %s252
      %p256 = scmp.eq.s32.totalorder %s27, 0
      %p257 = por %p255, %p256
      %p258 = scmp.ne.s32.totalorder %s250, %s252
      %p259 = scmp.eq.s32.totalorder %s32, 1
      %p260 = por %p258, %p259
      %p261 = scmp.ne.s32.totalorder %s252, %s253
      %p262 = scmp.eq.s32.totalorder %s32, 0
      %p263 = por %p261, %p262
      %p264 = scmp.ne.s32.totalorder %s252, %s253
      %p265 = scmp.eq.s32.totalorder %s33, 1
      %p266 = por %p264, %p265
      %p268 = scmp.ne.s32.totalorder %s253, %s267
      %p269 = scmp.eq.s32.totalorder %s33, 0
      %p270 = por %p268, %p269
      %s272 = sadd.s32 %s271, 1
      %p275 = scmp.eq.s32.totalorder %s27, 1
      %p276 = scmp.ne.s32.totalorder %s271, %s273
      %p277 = scmp.eq.s32.totalorder %s27, 0
      %p278 = por %p276, %p277
      %p279 = scmp.ne.s32.totalorder %s271, %s273
      %p280 = scmp.eq.s32.totalorder %s32, 1
      %p281 = por %p279, %p280
      %p282 = scmp.ne.s32.totalorder %s273, %s274
      %p283 = scmp.eq.s32.totalorder %s32, 0
      %p284 = por %p282, %p283
      %p285 = scmp.ne.s32.totalorder %s273, %s274
      %p286 = scmp.eq.s32.totalorder %s33, 1
      %p287 = por %p285, %p286
      %p289 = scmp.ne.s32.totalorder %s274, %s288
      %p290 = scmp.eq.s32.totalorder %s33, 0
      %p291 = por %p289, %p290
      %s293 = sadd.s32 %s292, 1
      %p296 = scmp.eq.s32.totalorder %s27, 1
      %p297 = scmp.ne.s32.totalorder %s292, %s294
      %p298 = scmp.eq.s32.totalorder %s27, 0
      %p299 = por %p297, %p298
      %p300 = scmp.ne.s32.totalorder %s292, %s294
      %p301 = scmp.eq.s32.totalorder %s32, 1
      %p302 = por %p300, %p301
      %p303 = scmp.ne.s32.totalorder %s294, %s295
      %p304 = scmp.eq.s32.totalorder %s32, 0
      %p305 = por %p303, %p304
      %p306 = scmp.ne.s32.totalorder %s294, %s295
      %p307 = scmp.eq.s32.totalorder %s33, 1
      %p308 = por %p306, %p307
      %p310 = scmp.ne.s32.totalorder %s295, %s309
      %p311 = scmp.eq.s32.totalorder %s33, 0
      %p312 = por %p310, %p311
      %s314 = sadd.s32 %s313, 1
      %p317 = scmp.eq.s32.totalorder %s27, 1
      %p318 = scmp.ne.s32.totalorder %s313, %s315
      %p319 = scmp.eq.s32.totalorder %s27, 0
      %p320 = por %p318, %p319
      %p321 = scmp.ne.s32.totalorder %s313, %s315
      %p322 = scmp.eq.s32.totalorder %s32, 1
      %p323 = por %p321, %p322
      %p324 = scmp.ne.s32.totalorder %s315, %s316
      %p325 = scmp.eq.s32.totalorder %s32, 0
      %p326 = por %p324, %p325
      %p327 = scmp.ne.s32.totalorder %s315, %s316
      %p328 = scmp.eq.s32.totalorder %s33, 1
      %p329 = por %p327, %p328
      %p331 = scmp.ne.s32.totalorder %s316, %s330
      %p332 = scmp.eq.s32.totalorder %s33, 0
      %p333 = por %p331, %p332
      %s335 = sadd.s32 %s334, 1
      %p338 = scmp.eq.s32.totalorder %s27, 1
      %p339 = scmp.ne.s32.totalorder %s334, %s336
      %p340 = scmp.eq.s32.totalorder %s27, 0
      %p341 = por %p339, %p340
      %p342 = scmp.ne.s32.totalorder %s334, %s336
      %p343 = scmp.eq.s32.totalorder %s32, 1
      %p344 = por %p342, %p343
      %p345 = scmp.ne.s32.totalorder %s336, %s337
      %p346 = scmp.eq.s32.totalorder %s32, 0
      %p347 = por %p345, %p346
      %p348 = scmp.ne.s32.totalorder %s336, %s337
      %p349 = scmp.eq.s32.totalorder %s33, 1
      %p350 = por %p348, %p349
      %p352 = scmp.ne.s32.totalorder %s337, %s351
      %p353 = scmp.eq.s32.totalorder %s33, 0
      %p354 = por %p352, %p353
      %s356 = sadd.s32 %s355, 1
      %p359 = scmp.eq.s32.totalorder %s27, 1
      %p360 = scmp.ne.s32.totalorder %s355, %s357
      %p361 = scmp.eq.s32.totalorder %s27, 0
      %p362 = por %p360, %p361
      %p363 = scmp.ne.s32.totalorder %s355, %s357
      %p364 = scmp.eq.s32.totalorder %s32, 1
      %p365 = por %p363, %p364
      %p366 = scmp.ne.s32.totalorder %s357, %s358
      %p367 = scmp.eq.s32.totalorder %s32, 0
      %p368 = por %p366, %p367
      %p369 = scmp.ne.s32.totalorder %s357, %s358
      %p370 = scmp.eq.s32.totalorder %s33, 1
      %p371 = por %p369, %p370
      %p373 = scmp.ne.s32.totalorder %s358, %s372
      %p374 = scmp.eq.s32.totalorder %s33, 0
      %p375 = por %p373, %p374
      %s377 = sadd.s32 %s376, 1
      %p380 = scmp.eq.s32.totalorder %s27, 1
      %p381 = scmp.ne.s32.totalorder %s376, %s378
      %p382 = scmp.eq.s32.totalorder %s27, 0
      %p383 = por %p381, %p382
      %p384 = scmp.ne.s32.totalorder %s376, %s378
      %p385 = scmp.eq.s32.totalorder %s32, 1
      %p386 = por %p384, %p385
      %p387 = scmp.ne.s32.totalorder %s378, %s379
      %p388 = scmp.eq.s32.totalorder %s32, 0
      %p389 = por %p387, %p388
      %p390 = scmp.ne.s32.totalorder %s378, %s379
      %p391 = scmp.eq.s32.totalorder %s33, 1
      %p392 = por %p390, %p391
      %p394 = scmp.ne.s32.totalorder %s379, %s393
      %p395 = scmp.eq.s32.totalorder %s33, 0
      %p396 = por %p394, %p395
      %s398 = sadd.s32 %s397, 1
      %p401 = scmp.eq.s32.totalorder %s27, 1
      %p402 = scmp.ne.s32.totalorder %s397, %s399
      %p403 = scmp.eq.s32.totalorder %s27, 0
      %p404 = por %p402, %p403
      %p405 = scmp.ne.s32.totalorder %s397, %s399
      %p406 = scmp.eq.s32.totalorder %s32, 1
      %p407 = por %p405, %p406
      %p408 = scmp.ne.s32.totalorder %s399, %s400
      %p409 = scmp.eq.s32.totalorder %s32, 0
      %p410 = por %p408, %p409
      %p411 = scmp.ne.s32.totalorder %s399, %s400
      %p412 = scmp.eq.s32.totalorder %s33, 1
      %p413 = por %p411, %p412
      %p415 = scmp.ne.s32.totalorder %s400, %s414
      %p416 = scmp.eq.s32.totalorder %s33, 0
      %p417 = por %p415, %p416
      %s419 = sadd.s32 %s418, 1
      %p422 = scmp.eq.s32.totalorder %s27, 1
      %p423 = scmp.ne.s32.totalorder %s418, %s420
      %p424 = scmp.eq.s32.totalorder %s27, 0
      %p425 = por %p423, %p424
      %p426 = scmp.ne.s32.totalorder %s418, %s420
      %p427 = scmp.eq.s32.totalorder %s32, 1
      %p428 = por %p426, %p427
      %p429 = scmp.ne.s32.totalorder %s420, %s421
      %p430 = scmp.eq.s32.totalorder %s32, 0
      %p431 = por %p429, %p430
      %p432 = scmp.ne.s32.totalorder %s420, %s421
      %p433 = scmp.eq.s32.totalorder %s33, 1
      %p434 = por %p432, %p433
      %p436 = scmp.ne.s32.totalorder %s421, %s435
      %p437 = scmp.eq.s32.totalorder %s33, 0
      %p438 = por %p436, %p437
      %s440 = sadd.s32 %s439, 1
      %p443 = scmp.eq.s32.totalorder %s27, 1
      %p444 = scmp.ne.s32.totalorder %s439, %s441
      %p445 = scmp.eq.s32.totalorder %s27, 0
      %p446 = por %p444, %p445
      %p447 = scmp.ne.s32.totalorder %s439, %s441
      %p448 = scmp.eq.s32.totalorder %s32, 1
      %p449 = por %p447, %p448
      %p450 = scmp.ne.s32.totalorder %s441, %s442
      %p451 = scmp.eq.s32.totalorder %s32, 0
      %p452 = por %p450, %p451
      %p453 = scmp.ne.s32.totalorder %s441, %s442
      %p454 = scmp.eq.s32.totalorder %s33, 1
      %p455 = por %p453, %p454
      %p457 = scmp.ne.s32.totalorder %s442, %s456
      %p458 = scmp.eq.s32.totalorder %s33, 0
      %p459 = por %p457, %p458
      %s460 = ssub.s32 %s27, %s34
      %p461 = scmp.eq.s32.totalorder %s460, 0
      %s463 = sadd.s32 %s462, 1
      %s464 = scalar_select %p461, %s462, %s463
      %p467 = pneg %p461
      %p468 = scmp.eq.s32.totalorder %s27, 1
      %p469 = por %p467, %p468
      %p470 = scmp.ne.s32.totalorder %s462, %s465
      %p471 = scmp.eq.s32.totalorder %s27, 0
      %p472 = por %p470, %p471
      %p473 = scmp.ne.s32.totalorder %s462, %s465
      %p474 = scmp.eq.s32.totalorder %s32, 1
      %p475 = por %p473, %p474
      %p476 = scmp.ne.s32.totalorder %s465, %s466
      %p477 = scmp.eq.s32.totalorder %s32, 0
      %p478 = por %p476, %p477
      %p479 = scmp.ne.s32.totalorder %s465, %s466
      %p480 = scmp.eq.s32.totalorder %s33, 1
      %p481 = por %p479, %p480
      %p483 = scmp.ne.s32.totalorder %s466, %s482
      %p484 = scmp.eq.s32.totalorder %s33, 0
      %p485 = por %p483, %p484
      %p486 = scmp.le.s32.totalorder 1, %s27
      %p487 = scmp.lt.s32.totalorder %s27, 3
      %p488 = pnand %p486, %p487
      %p489 = pneg %p488
      // Predicated region
      $region9: #{net_forward.1} parent=5 // pred_check
        _
      $region10: #{net_forward.1} parent=5 // pred_check_branch
        %491 = sbr.rel (%p488) target = $region12
      $region11: #{net_forward.1} parent=5 // pred_region
        %s492 = ssub.s32 %s27, 1
        // Predicated region
        $region13: #{net_forward.1} parent=11 // pred_check
          %p493 = pneg %p48
        $region14: #{net_forward.1} parent=11 // pred_check_branch
          %495 = sbr.rel (%p493) target = $region16
        $region15: #{net_forward.1} parent=11 // pred_region
          %497 = vsyncadd [#allocation5], 0
          %s499 = sshll.u32 %s0, 4
          %s500 = int_to_ptr.vmem [resolvable:$true] %s499
          %502 = dma.vmem_to_smem %s500, 16, [#allocation4], [#allocation5]
        $region16: #{net_forward.1} parent=11 // pred_fallthru
          _
        // Predicated region
        $region17: #{net_forward.1} parent=11 // pred_check
          %p503 = pneg %p95
        $region18: #{net_forward.1} parent=11 // pred_check_branch
          %505 = sbr.rel (%p503) target = $region20
        $region19: #{net_forward.1} parent=11 // pred_region
          _
        $region20: #{net_forward.1} parent=11 // pred_fallthru
          _
        // Predicated region
        $region21: #{net_forward.1} parent=11 // pred_check
          %p506 = pneg %p116
        $region22: #{net_forward.1} parent=11 // pred_check_branch
          %508 = sbr.rel (%p506) target = $region24
        $region23: #{net_forward.1} parent=11 // pred_region
          _
        $region24: #{net_forward.1} parent=11 // pred_fallthru
          _
        // Predicated region
        $region25: #{net_forward.1} parent=11 // pred_check
          %p509 = pneg %p137
        $region26: #{net_forward.1} parent=11 // pred_check_branch
          %511 = sbr.rel (%p509) target = $region28
        $region27: #{net_forward.1} parent=11 // pred_region
          _
        $region28: #{net_forward.1} parent=11 // pred_fallthru
          _
        // Predicated region
        $region29: #{net_forward.1} parent=11 // pred_check
          %p512 = pneg %p158
        $region30: #{net_forward.1} parent=11 // pred_check_branch
          %514 = sbr.rel (%p512) target = $region32
        $region31: #{net_forward.1} parent=11 // pred_region
          _
        $region32: #{net_forward.1} parent=11 // pred_fallthru
          _
        // Predicated region
        $region33: #{net_forward.1} parent=11 // pred_check
          %p515 = pneg %p179
        $region34: #{net_forward.1} parent=11 // pred_check_branch
          %517 = sbr.rel (%p515) target = $region36
        $region35: #{net_forward.1} parent=11 // pred_region
          _
        $region36: #{net_forward.1} parent=11 // pred_fallthru
          _
        // Predicated region
        $region37: #{net_forward.1} parent=11 // pred_check
          %p518 = pneg %p200
        $region38: #{net_forward.1} parent=11 // pred_check_branch
          %520 = sbr.rel (%p518) target = $region40
        $region39: #{net_forward.1} parent=11 // pred_region
          _
        $region40: #{net_forward.1} parent=11 // pred_fallthru
          _
        // Predicated region
        $region41: #{net_forward.1} parent=11 // pred_check
          %p521 = pneg %p221
        $region42: #{net_forward.1} parent=11 // pred_check_branch
          %523 = sbr.rel (%p521) target = $region44
        $region43: #{net_forward.1} parent=11 // pred_region
          _
        $region44: #{net_forward.1} parent=11 // pred_fallthru
          _
        // Predicated region
        $region45: #{net_forward.1} parent=11 // pred_check
          %p524 = pneg %p242
        $region46: #{net_forward.1} parent=11 // pred_check_branch
          %526 = sbr.rel (%p524) target = $region48
        $region47: #{net_forward.1} parent=11 // pred_region
          _
        $region48: #{net_forward.1} parent=11 // pred_fallthru
          _
        // Predicated region
        $region49: #{net_forward.1} parent=11 // pred_check
          %p527 = pneg %p263
        $region50: #{net_forward.1} parent=11 // pred_check_branch
          %529 = sbr.rel (%p527) target = $region52
        $region51: #{net_forward.1} parent=11 // pred_region
          _
        $region52: #{net_forward.1} parent=11 // pred_fallthru
          _
        // Predicated region
        $region53: #{net_forward.1} parent=11 // pred_check
          %p530 = pneg %p284
        $region54: #{net_forward.1} parent=11 // pred_check_branch
          %532 = sbr.rel (%p530) target = $region56
        $region55: #{net_forward.1} parent=11 // pred_region
          _
        $region56: #{net_forward.1} parent=11 // pred_fallthru
          _
        // Predicated region
        $region57: #{net_forward.1} parent=11 // pred_check
          %p533 = pneg %p305
        $region58: #{net_forward.1} parent=11 // pred_check_branch
          %535 = sbr.rel (%p533) target = $region60
        $region59: #{net_forward.1} parent=11 // pred_region
          _
        $region60: #{net_forward.1} parent=11 // pred_fallthru
          _
        // Predicated region
        $region61: #{net_forward.1} parent=11 // pred_check
          %p536 = pneg %p326
        $region62: #{net_forward.1} parent=11 // pred_check_branch
          %538 = sbr.rel (%p536) target = $region64
        $region63: #{net_forward.1} parent=11 // pred_region
          _
        $region64: #{net_forward.1} parent=11 // pred_fallthru
          _
        // Predicated region
        $region65: #{net_forward.1} parent=11 // pred_check
          %p539 = pneg %p347
        $region66: #{net_forward.1} parent=11 // pred_check_branch
          %541 = sbr.rel (%p539) target = $region68
        $region67: #{net_forward.1} parent=11 // pred_region
          _
        $region68: #{net_forward.1} parent=11 // pred_fallthru
          _
        // Predicated region
        $region69: #{net_forward.1} parent=11 // pred_check
          %p542 = pneg %p368
        $region70: #{net_forward.1} parent=11 // pred_check_branch
          %544 = sbr.rel (%p542) target = $region72
        $region71: #{net_forward.1} parent=11 // pred_region
          _
        $region72: #{net_forward.1} parent=11 // pred_fallthru
          _
        // Predicated region
        $region73: #{net_forward.1} parent=11 // pred_check
          %p545 = pneg %p389
        $region74: #{net_forward.1} parent=11 // pred_check_branch
          %547 = sbr.rel (%p545) target = $region76
        $region75: #{net_forward.1} parent=11 // pred_region
          _
        $region76: #{net_forward.1} parent=11 // pred_fallthru
          _
        // Predicated region
        $region77: #{net_forward.1} parent=11 // pred_check
          %p548 = pneg %p410
        $region78: #{net_forward.1} parent=11 // pred_check_branch
          %550 = sbr.rel (%p548) target = $region80
        $region79: #{net_forward.1} parent=11 // pred_region
          _
        $region80: #{net_forward.1} parent=11 // pred_fallthru
          _
        // Predicated region
        $region81: #{net_forward.1} parent=11 // pred_check
          %p551 = pneg %p431
        $region82: #{net_forward.1} parent=11 // pred_check_branch
          %553 = sbr.rel (%p551) target = $region84
        $region83: #{net_forward.1} parent=11 // pred_region
          _
        $region84: #{net_forward.1} parent=11 // pred_fallthru
          _
        // Predicated region
        $region85: #{net_forward.1} parent=11 // pred_check
          %p554 = pneg %p452
        $region86: #{net_forward.1} parent=11 // pred_check_branch
          %556 = sbr.rel (%p554) target = $region88
        $region87: #{net_forward.1} parent=11 // pred_region
          _
        $region88: #{net_forward.1} parent=11 // pred_fallthru
          _
      $region12: #{net_forward.1} parent=5 // pred_fallthru
        _
      %p557 = scmp.lt.s32.totalorder %s27, 2
      // Predicated region
      $region89: #{net_forward.1} parent=5 // pred_check
        %p558 = pneg %p557
      $region90: #{net_forward.1} parent=5 // pred_check_branch
        %560 = sbr.rel (%p558) target = $region92
      $region91: #{net_forward.1} parent=5 // pred_region
        // Predicated region
        $region93: #{net_forward.1} parent=91 // pred_check
          %p561 = pneg %p68
        $region94: #{net_forward.1} parent=91 // pred_check_branch
          %563 = sbr.rel (%p561) target = $region96
        $region95: #{net_forward.1} parent=91 // pred_region
          %p564 = scmp.lt.s32.totalorder %s27, 1
          %s565 = scalar_select %p564, %s27, 1
          %s566 = smul.addr %s565, 2
          %s567 = smul.addr %s566, 8
          %s568 = scalar_lea.vmem %s1, %s567
        $region96: #{net_forward.1} parent=91 // pred_fallthru
          _
      $region92: #{net_forward.1} parent=5 // pred_fallthru
        _
      %p569 = scmp.le.s32.totalorder 1, %s27
      %p570 = scmp.lt.s32.totalorder %s27, 3
      %p571 = pnand %p569, %p570
      %p572 = pneg %p571
      // Predicated region
      $region97: #{net_forward.1} parent=5 // pred_check
        _
      $region98: #{net_forward.1} parent=5 // pred_check_branch
        %574 = sbr.rel (%p571) target = $region100
      $region99: #{net_forward.1} parent=5 // pred_region
        %s575 = ssub.s32 %s27, 1
        // Predicated region
        $region101: #{net_forward.1} parent=99 // pred_check
          %p576 = pneg %p48
        $region102: #{net_forward.1} parent=99 // pred_check_branch
          %578 = sbr.rel (%p576) target = $region104
        $region103: #{net_forward.1} parent=99 // pred_region
          %580 = dma.done [#allocation5], 16
        $region104: #{net_forward.1} parent=99 // pred_fallthru
          _
        %581 = sfence
        %p582 = pneg %p48
        %p583 = pneg %p45
        %p584 = scmp.lt.s32.totalorder %s32, 1
        %s585 = scalar_select %p584, %s32, 1
        %s586 = smul.addr %s585, 2
        %s587 = smul.addr %s586, 8
        %s588 = scalar_lea.vmem %s1, %s587
        %p589 = pneg %p74
        %p590 = pneg %p71
        %p591 = pneg %p95
        %p592 = pneg %p92
        %p593 = pneg %p116
        %p594 = pneg %p113
        %p595 = pneg %p137
        %p596 = pneg %p134
        %p597 = pneg %p158
        %p598 = pneg %p155
        %p599 = pneg %p179
        %p600 = pneg %p176
        %p601 = pneg %p200
        %p602 = pneg %p197
        %p603 = pneg %p221
        %p604 = pneg %p218
        %p605 = pneg %p242
        %p606 = pneg %p239
        %p607 = pneg %p263
        %p608 = pneg %p260
        %p609 = pneg %p284
        %p610 = pneg %p281
        %p611 = pneg %p305
        %p612 = pneg %p302
        %p613 = pneg %p326
        %p614 = pneg %p323
        %p615 = pneg %p347
        %p616 = pneg %p344
        %p617 = pneg %p368
        %p618 = pneg %p365
        %p619 = pneg %p389
        %p620 = pneg %p386
        %p621 = pneg %p410
        %p622 = pneg %p407
        %p623 = pneg %p431
        %p624 = pneg %p428
        %p625 = pneg %p452
        %p626 = pneg %p449
        %p627 = pneg %p478
        %p628 = pneg %p475
        %p629 = scmp.lt.s32.totalorder %s32, 1
        %s630 = scalar_select %p629, %s32, 1
        %s631 = smul.addr %s630, 2
        %s632 = smul.addr %s631, 8
        %s633 = scalar_lea.vmem %s20, %s632
        %p634 = scmp.lt.s32.totalorder %s32, 1
        %s635 = scalar_select %p634, %s32, 1
        %s636 = smul.addr %s635, 2
        %s637 = smul.addr %s636, 8
        %s638 = scalar_lea.vmem %s1, %s637
        %p639 = scmp.lt.s32.totalorder %s32, 1
        %s640 = scalar_select %p639, %s32, 1
        %s641 = smul.addr %s640, 2
        %s642 = smul.addr %s641, 8
        %s643 = scalar_lea.vmem %s20, %s642
        %v645 = vld [vmem:[%s638] sm:$0xff]
        %v646 = vld [vmem:[%s638 + $0x8] sm:$0xff]
        %v647 = vpack.c.bf16 %v646, %v645
        %v648 = vld [vmem:[%s2] sm:$0xf]
        %v649 = vld [vmem:[%s2 + $0x4] sm:$0xf]
        %v650 = vld [vmem:[%s2 + $0x8] sm:$0xf]
        %v651 = vld [vmem:[%s2 + $0xc] sm:$0xf]
        %v656 = vunpack.c.l.b16 %v648
        %v657 = vunpack.c.l.b16 %v649
        %v658 = vunpack.c.l.b16 %v650
        %v659 = vunpack.c.l.b16 %v651
        %v660 = vpack.c.b16 %v657, %v656
        %v661 = vpack.c.b16 %v659, %v658
        %vm662 = vcmask 130048
        %v664 = vsel %vm662, %v660, 0
        %v667 = vsel %vm662, %v661, 0
        %669 = vmatpush.bf16.msra.mxu0 0
        %670 = vmatpush.bf16.msra.mxu0 0
        %671 = vmatpush.bf16.msra.mxu0 0
        %672 = vmatpush.bf16.msra.mxu0 0
        %673 = vmatpush.bf16.msra.mxu0 0
        %674 = vmatpush.bf16.msra.mxu0 0
        %675 = vmatpush.bf16.msra.mxu0 0
        %676 = vmatpush.bf16.msra.mxu0 %v647
        %677 = vmatmul.bf16.gmra.mxu0 %v664
        %v678 = vpop.f32.mrf.mxu0
        %v679 = vadd.f32 0.0, %v678
        %v680 = vpop.f32.mrf.mxu0
        %v681 = vadd.f32 0.0, %v680
        %682 = vmatmul.bf16.gmra.mxu0 %v667
        %v683 = vpop.f32.mrf.mxu0
        %v684 = vadd.f32 0.0, %v683
        %v685 = vpop.f32.mrf.mxu0
        %v686 = vadd.f32 0.0, %v685
        %687 = vdwg.mxu0
        %v688 = vld [vmem:[%s3] sm:$0xff]
        %v689 = vld [vmem:[%s3 + $0x8] sm:$0xff]
        %v690 = vld [vmem:[%s3 + $0x10] sm:$0xff]
        %v691 = vld [vmem:[%s3 + $0x18] sm:$0xff]
        %v692 = vld [vmem:[%s4] sm:$0xff]
        %v693 = vld [vmem:[%s4 + $0x8] sm:$0xff]
        %v694 = vld [vmem:[%s4 + $0x10] sm:$0xff]
        %v695 = vld [vmem:[%s4 + $0x18] sm:$0xff]
        %vm696 = vcmask 97280
        %v697 = vsel %vm696, %v679, 0.0
        %v698 = vsel %vm696, %v681, 0.0
        %v699 = vadd.f32 %v697, %v698
        %v700 = vsel %vm696, %v684, 0.0
        %v701 = vadd.f32 %v699, %v700
        %v702 = vsel %vm696, %v686, 0.0
        %v703 = vadd.f32 %v701, %v702
        %704 = vadd.xlane.f32.xlu0 %v703
        %v705 = vpop.xlane.xlu0 %704
        %v706 = vrot.slane %v705, 4
        %v707 = vadd.f32 %v705, %v706
        %v708 = vrot.slane %v707, 2
        %v709 = vadd.f32 %v707, %v708
        %v710 = vrot.slane %v709, 1
        %v711 = vadd.f32 %v709, %v710
        %s712 = vtos %v711
        %v713 = vrcp.pop 384.0
        %v714 = vmul.f32 384.0, %v713
        %v715 = vsub.f32 1.0, %v714
        %v716 = vmul.f32 %v713, %v715
        %v717 = vadd.f32 %v713, %v716
        %vm718 = vweird.f32 %v713
        %v719 = vsel %vm718, %v713, %v717
        %s720 = vtos %v719
        %s721 = smul.f32 %s712, %s720
        %v722 = vstv %s721
        %v723 = vsub.f32 %v679, %v722
        %v724 = vsub.f32 %v681, %v722
        %v725 = vsub.f32 %v684, %v722
        %v726 = vsub.f32 %v686, %v722
        %v727 = vmul.f32 %v723, %v723
        %v728 = vmul.f32 %v724, %v724
        %v729 = vmul.f32 %v725, %v725
        %v730 = vmul.f32 %v726, %v726
        %v731 = vsel %vm696, %v727, 0.0
        %v732 = vsel %vm696, %v728, 0.0
        %v733 = vadd.f32 %v731, %v732
        %v734 = vsel %vm696, %v729, 0.0
        %v735 = vadd.f32 %v733, %v734
        %v736 = vsel %vm696, %v730, 0.0
        %v737 = vadd.f32 %v735, %v736
        %738 = vadd.xlane.f32.xlu0 %v737
        %v739 = vpop.xlane.xlu0 %738
        %v740 = vrot.slane %v739, 4
        %v741 = vadd.f32 %v739, %v740
        %v742 = vrot.slane %v741, 2
        %v743 = vadd.f32 %v741, %v742
        %v744 = vrot.slane %v743, 1
        %v745 = vadd.f32 %v743, %v744
        %s746 = vtos %v745
        %v747 = vrcp.pop 384.0
        %v748 = vmul.f32 384.0, %v747
        %v749 = vsub.f32 1.0, %v748
        %v750 = vmul.f32 %v747, %v749
        %v751 = vadd.f32 %v747, %v750
        %vm752 = vweird.f32 %v747
        %v753 = vsel %vm752, %v747, %v751
        %s754 = vtos %v753
        %s755 = smul.f32 %s746, %s754
        %757 = vset.pattern.permute.xlu0 0
        %758 = vperm.xlu0 %757, %v688
        %v759 = vpop.permute.xlu0 %758
        %762 = vset.pattern.permute.xlu0 0
        %763 = vperm.xlu0 %762, %v689
        %v764 = vpop.permute.xlu0 %763
        %767 = vset.pattern.permute.xlu0 0
        %768 = vperm.xlu0 %767, %v690
        %v769 = vpop.permute.xlu0 %768
        %772 = vset.pattern.permute.xlu0 0
        %773 = vperm.xlu0 %772, %v691
        %v774 = vpop.permute.xlu0 %773
        %v776 = vmul.f32 %v759, %v723
        %v777 = vmul.f32 %v764, %v724
        %v778 = vmul.f32 %v769, %v725
        %v779 = vmul.f32 %v774, %v726
        %s780 = sadd.f32 %s755, 1e-08
        %v781 = vstv %s780
        %v782 = vrsqrt.pop %v781
        %v783 = vmul.f32 %v782, %v781
        %v784 = vmul.f32 %v783, %v782
        %v785 = vmul.f32 0.5, %v784
        %v786 = vsub.f32 1.5, %v785
        %v787 = vmul.f32 %v782, %v786
        %vm788 = vweird.f32 %v781
        %vm789 = vweird.f32 %v782
        %vm790 = vmor %vm788, %vm789
        %v791 = vsel %vm790, %v782, %v787
        %s792 = vtos %v791
        %v793 = vstv %s792
        %v794 = vmul.f32 %v776, %v793
        %v795 = vmul.f32 %v777, %v793
        %v796 = vmul.f32 %v778, %v793
        %v797 = vmul.f32 %v779, %v793
        %799 = vset.pattern.permute.xlu0 0
        %800 = vperm.xlu0 %799, %v692
        %v801 = vpop.permute.xlu0 %800
        %804 = vset.pattern.permute.xlu0 0
        %805 = vperm.xlu0 %804, %v693
        %v806 = vpop.permute.xlu0 %805
        %809 = vset.pattern.permute.xlu0 0
        %810 = vperm.xlu0 %809, %v694
        %v811 = vpop.permute.xlu0 %810
        %814 = vset.pattern.permute.xlu0 0
        %815 = vperm.xlu0 %814, %v695
        %v816 = vpop.permute.xlu0 %815
        %v818 = vadd.f32 %v794, %v801
        %v819 = vadd.f32 %v795, %v806
        %v820 = vadd.f32 %v796, %v811
        %v821 = vadd.f32 %v797, %v816
        %822 = vst.msk [vmem:[#allocation2] sm:$0xff] %vm696, %v818
        %823 = vst.msk [vmem:[#allocation2 + $0x8] sm:$0xff] %vm696, %v819
        %824 = vst.msk [vmem:[#allocation2 + $0x10] sm:$0xff] %vm696, %v820
        %825 = vst.msk [vmem:[#allocation2 + $0x18] sm:$0xff] %vm696, %v821
        %830 = vrot.lane.b32.xlu0 %v679, 116
        %v831 = vpop.permute.xlu0 %830
        %832 = vrot.lane.b32.xlu0 %v681, 116
        %v833 = vpop.permute.xlu0 %832
        %834 = vrot.lane.b32.xlu0 %v684, 116
        %v835 = vpop.permute.xlu0 %834
        %836 = vrot.lane.b32.xlu0 %v686, 116
        %v837 = vpop.permute.xlu0 %836
        %v842 = vsel %vm696, %v831, 0.0
        %v843 = vsel %vm696, %v833, 0.0
        %v844 = vadd.f32 %v842, %v843
        %v845 = vsel %vm696, %v835, 0.0
        %v846 = vadd.f32 %v844, %v845
        %v847 = vsel %vm696, %v837, 0.0
        %v848 = vadd.f32 %v846, %v847
        %849 = vadd.xlane.f32.xlu0 %v848
        %v850 = vpop.xlane.xlu0 %849
        %v851 = vrot.slane %v850, 4
        %v852 = vadd.f32 %v850, %v851
        %v853 = vrot.slane %v852, 2
        %v854 = vadd.f32 %v852, %v853
        %v855 = vrot.slane %v854, 1
        %v856 = vadd.f32 %v854, %v855
        %s857 = vtos %v856
        %v858 = vrcp.pop 384.0
        %v859 = vmul.f32 384.0, %v858
        %v860 = vsub.f32 1.0, %v859
        %v861 = vmul.f32 %v858, %v860
        %v862 = vadd.f32 %v858, %v861
        %vm863 = vweird.f32 %v858
        %v864 = vsel %vm863, %v858, %v862
        %s865 = vtos %v864
        %s866 = smul.f32 %s857, %s865
        %v867 = vstv %s866
        %v868 = vsub.f32 %v679, %v867
        %v869 = vsub.f32 %v681, %v867
        %v870 = vsub.f32 %v684, %v867
        %v871 = vsub.f32 %v686, %v867
        %v872 = vmul.f32 %v868, %v868
        %v873 = vmul.f32 %v869, %v869
        %v874 = vmul.f32 %v870, %v870
        %v875 = vmul.f32 %v871, %v871
        %880 = vrot.lane.b32.xlu0 %v872, 116
        %v881 = vpop.permute.xlu0 %880
        %882 = vrot.lane.b32.xlu0 %v873, 116
        %v883 = vpop.permute.xlu0 %882
        %884 = vrot.lane.b32.xlu0 %v874, 116
        %v885 = vpop.permute.xlu0 %884
        %886 = vrot.lane.b32.xlu0 %v875, 116
        %v887 = vpop.permute.xlu0 %886
        %v892 = vsel %vm696, %v881, 0.0
        %v893 = vsel %vm696, %v883, 0.0
        %v894 = vadd.f32 %v892, %v893
        %v895 = vsel %vm696, %v885, 0.0
        %v896 = vadd.f32 %v894, %v895
        %v897 = vsel %vm696, %v887, 0.0
        %v898 = vadd.f32 %v896, %v897
        %899 = vadd.xlane.f32.xlu0 %v898
        %v900 = vpop.xlane.xlu0 %899
        %v901 = vrot.slane %v900, 4
        %v902 = vadd.f32 %v900, %v901
        %v903 = vrot.slane %v902, 2
        %v904 = vadd.f32 %v902, %v903
        %v905 = vrot.slane %v904, 1
        %v906 = vadd.f32 %v904, %v905
        %s907 = vtos %v906
        %v908 = vrcp.pop 384.0
        %v909 = vmul.f32 384.0, %v908
        %v910 = vsub.f32 1.0, %v909
        %v911 = vmul.f32 %v908, %v910
        %v912 = vadd.f32 %v908, %v911
        %vm913 = vweird.f32 %v908
        %v914 = vsel %vm913, %v908, %v912
        %s915 = vtos %v914
        %s916 = smul.f32 %s907, %s915
        %v917 = vmul.f32 %v759, %v868
        %v918 = vmul.f32 %v764, %v869
        %v919 = vmul.f32 %v769, %v870
        %v920 = vmul.f32 %v774, %v871
        %s921 = sadd.f32 %s916, 1e-08
        %v922 = vstv %s921
        %v923 = vrsqrt.pop %v922
        %v924 = vmul.f32 %v923, %v922
        %v925 = vmul.f32 %v924, %v923
        %v926 = vmul.f32 0.5, %v925
        %v927 = vsub.f32 1.5, %v926
        %v928 = vmul.f32 %v923, %v927
        %vm929 = vweird.f32 %v922
        %vm930 = vweird.f32 %v923
        %vm931 = vmor %vm929, %vm930
        %v932 = vsel %vm931, %v923, %v928
        %s933 = vtos %v932
        %v934 = vstv %s933
        %v935 = vmul.f32 %v917, %v934
        %v936 = vmul.f32 %v918, %v934
        %v937 = vmul.f32 %v919, %v934
        %v938 = vmul.f32 %v920, %v934
        %v939 = vadd.f32 %v935, %v801
        %v940 = vadd.f32 %v936, %v806
        %v941 = vadd.f32 %v937, %v811
        %v942 = vadd.f32 %v938, %v816
        %vm943 = vcmask 195680
        %944 = vst.msk [vmem:[#allocation2] sm:$0xff] %vm943, %v939
        %945 = vst.msk [vmem:[#allocation2 + $0x8] sm:$0xff] %vm943, %v940
        %946 = vst.msk [vmem:[#allocation2 + $0x10] sm:$0xff] %vm943, %v941
        %947 = vst.msk [vmem:[#allocation2 + $0x18] sm:$0xff] %vm943, %v942
        %v948 = vld [vmem:[%s5] sm:$0xf]
        %v949 = vld [vmem:[%s5 + $0x4] sm:$0xf]
        %v950 = vld [vmem:[#allocation2] sm:$0xff]
        %v951 = vld [vmem:[#allocation2 + $0x8] sm:$0xff]
        %v952 = vld [vmem:[#allocation2 + $0x10] sm:$0xff]
        %v953 = vld [vmem:[#allocation2 + $0x18] sm:$0xff]
        %v954 = vpack.c.bf16 %v951, %v950
        %v955 = vpack.c.bf16 %v953, %v952
        %v958 = vunpack.c.l.b16 %v948
        %v959 = vunpack.c.l.b16 %v949
        %v960 = vpack.c.b16 %v959, %v958
        %vm961 = vcmask 261120
        %v963 = vsel %vm961, %v960, 0
        %965 = vmatpush.bf16.msra.mxu0 0
        %966 = vmatpush.bf16.msra.mxu0 0
        %967 = vmatpush.bf16.msra.mxu0 0
        %968 = vmatpush.bf16.msra.mxu0 0
        %969 = vmatpush.bf16.msra.mxu0 0
        %970 = vmatpush.bf16.msra.mxu0 0
        %971 = vmatpush.bf16.msra.mxu0 %v955
        %972 = vmatpush.bf16.msra.mxu0 %v954
        %973 = vmatmul.bf16.gmra.mxu0 %v963
        %v974 = vpop.f32.mrf.mxu0
        %v975 = vadd.f32 0.0, %v974
        %v976 = vpop.f32.mrf.mxu0
        %v977 = vadd.f32 0.0, %v976
        %978 = vdwg.mxu0
        %981 = vrot.lane.b32.xlu0 %v975, 116
        %v982 = vpop.permute.xlu0 %981
        %983 = vrot.lane.b32.xlu0 %v977, 116
        %v984 = vpop.permute.xlu0 %983
        %v987 = vadd.f32 %v975, %v982
        %v988 = vadd.f32 %v977, %v984
        %v989 = vmul.f32 %v987, 0.5
        %v990 = vmul.f32 %v988, 0.5
        %v991 = vld [vmem:[%s6] sm:$0xff]
        %v992 = vld [vmem:[%s6 + $0x8] sm:$0xff]
        %994 = vset.pattern.permute.xlu0 0
        %995 = vperm.xlu0 %994, %v991
        %v996 = vpop.permute.xlu0 %995
        %999 = vset.pattern.permute.xlu0 0
        %1000 = vperm.xlu0 %999, %v992
        %v1001 = vpop.permute.xlu0 %1000
        %v1003 = vadd.f32 %v989, %v996
        %v1004 = vadd.f32 %v990, %v1001
        %vm1005 = vcmask 1048544
        %1006 = vst.msk [vmem:[#allocation3] sm:$0xff] %vm1005, 0.0
        %1007 = vst.msk [vmem:[#allocation3 + $0x10] sm:$0xff] %vm1005, 0.0
        %1008 = vst.msk [vmem:[#allocation3 + $0x20] sm:$0xff] %vm1005, 0.0
        %1009 = vst.msk [vmem:[#allocation3 + $0x30] sm:$0xff] %vm1005, 0.0
        %1010 = vst.msk [vmem:[#allocation3 + $0x40] sm:$0xff] %vm1005, 0.0
        %1011 = vst.msk [vmem:[#allocation3 + $0x50] sm:$0xff] %vm1005, 0.0
        %1012 = vst.msk [vmem:[#allocation3 + $0x60] sm:$0xff] %vm1005, 0.0
        %1013 = vst.msk [vmem:[#allocation3 + $0x70] sm:$0xff] %vm1005, 0.0
        %vm1014 = vcmask 130144
        %1015 = vst.msk [vmem:[#allocation3 + $0x8] sm:$0xff] %vm1014, 0.0
        %1016 = vst.msk [vmem:[#allocation3 + $0x18] sm:$0xff] %vm1014, 0.0
        %1017 = vst.msk [vmem:[#allocation3 + $0x28] sm:$0xff] %vm1014, 0.0
        %1018 = vst.msk [vmem:[#allocation3 + $0x38] sm:$0xff] %vm1014, 0.0
        %1019 = vst.msk [vmem:[#allocation3 + $0x48] sm:$0xff] %vm1014, 0.0
        %1020 = vst.msk [vmem:[#allocation3 + $0x58] sm:$0xff] %vm1014, 0.0
        %1021 = vst.msk [vmem:[#allocation3 + $0x68] sm:$0xff] %vm1014, 0.0
        %1022 = vst.msk [vmem:[#allocation3 + $0x78] sm:$0xff] %vm1014, 0.0
        %v1023 = vld [vmem:[%s7] sm:$0xf]
        %v1024 = vld [vmem:[%s7 + $0x4] sm:$0xf]
        %v1025 = vld [vmem:[%s7 + $0x8] sm:$0xf]
        %v1026 = vld [vmem:[%s7 + $0xc] sm:$0xf]
        %v1027 = vld [vmem:[%s7 + $0x10] sm:$0xf]
        %v1028 = vld [vmem:[%s7 + $0x14] sm:$0xf]
        %v1029 = vld [vmem:[%s7 + $0x18] sm:$0xf]
        %v1030 = vld [vmem:[%s7 + $0x1c] sm:$0xf]
        %v1031 = vpack.c.bf16 %v1004, %v1003
        %v1032 = vld [vmem:[%s8] sm:$0xff]
        %v1033 = vld [vmem:[%s8 + $0x8] sm:$0xff]
        %v1034 = vld [vmem:[%s8 + $0x10] sm:$0xff]
        %v1035 = vld [vmem:[%s8 + $0x18] sm:$0xff]
        %v1036 = vld [vmem:[%s8 + $0x20] sm:$0xff]
        %v1037 = vld [vmem:[%s8 + $0x28] sm:$0xff]
        %v1038 = vld [vmem:[%s8 + $0x30] sm:$0xff]
        %v1039 = vld [vmem:[%s8 + $0x38] sm:$0xff]
        %1041 = vset.pattern.permute.xlu0 0
        %1042 = vperm.xlu0 %1041, %v1032
        %v1043 = vpop.permute.xlu0 %1042
        %1046 = vset.pattern.permute.xlu0 0
        %1047 = vperm.xlu0 %1046, %v1033
        %v1048 = vpop.permute.xlu0 %1047
        %1051 = vset.pattern.permute.xlu0 0
        %1052 = vperm.xlu0 %1051, %v1034
        %v1053 = vpop.permute.xlu0 %1052
        %1056 = vset.pattern.permute.xlu0 0
        %1057 = vperm.xlu0 %1056, %v1035
        %v1058 = vpop.permute.xlu0 %1057
        %1061 = vset.pattern.permute.xlu0 0
        %1062 = vperm.xlu0 %1061, %v1036
        %v1063 = vpop.permute.xlu0 %1062
        %1066 = vset.pattern.permute.xlu0 0
        %1067 = vperm.xlu0 %1066, %v1037
        %v1068 = vpop.permute.xlu0 %1067
        %1071 = vset.pattern.permute.xlu0 0
        %1072 = vperm.xlu0 %1071, %v1038
        %v1073 = vpop.permute.xlu0 %1072
        %1076 = vset.pattern.permute.xlu0 0
        %1077 = vperm.xlu0 %1076, %v1039
        %v1078 = vpop.permute.xlu0 %1077
        %v1088 = vunpack.c.l.b16 %v1023
        %v1089 = vunpack.c.l.b16 %v1024
        %v1090 = vunpack.c.l.b16 %v1025
        %v1091 = vunpack.c.l.b16 %v1026
        %v1092 = vunpack.c.l.b16 %v1027
        %v1093 = vunpack.c.l.b16 %v1028
        %v1094 = vunpack.c.l.b16 %v1029
        %v1095 = vunpack.c.l.b16 %v1030
        %v1096 = vpack.c.b16 %v1089, %v1088
        %v1097 = vpack.c.b16 %v1091, %v1090
        %v1098 = vpack.c.b16 %v1093, %v1092
        %v1099 = vpack.c.b16 %v1095, %v1094
        %v1101 = vsel %vm662, %v1096, 0
        %v1104 = vsel %vm662, %v1097, 0
        %v1107 = vsel %vm662, %v1098, 0
        %v1110 = vsel %vm662, %v1099, 0
        %1112 = vmatpush.bf16.msra.mxu0 0
        %1113 = vmatpush.bf16.msra.mxu0 0
        %1114 = vmatpush.bf16.msra.mxu0 0
        %1115 = vmatpush.bf16.msra.mxu0 0
        %1116 = vmatpush.bf16.msra.mxu0 0
        %1117 = vmatpush.bf16.msra.mxu0 0
        %1118 = vmatpush.bf16.msra.mxu0 0
        %1119 = vmatpush.bf16.msra.mxu0 %v1031
        %1120 = vmatmul.bf16.gmra.mxu0 %v1101
        %v1121 = vpop.f32.mrf.mxu0
        %v1122 = vadd.f32 %v1043, %v1121
        %v1123 = vpop.f32.mrf.mxu0
        %v1124 = vadd.f32 %v1048, %v1123
        %1125 = vmatmul.bf16.gmra.mxu0 %v1104
        %v1126 = vpop.f32.mrf.mxu0
        %v1127 = vadd.f32 %v1053, %v1126
        %v1128 = vpop.f32.mrf.mxu0
        %v1129 = vadd.f32 %v1058, %v1128
        %1130 = vmatmul.bf16.gmra.mxu0 %v1107
        %v1131 = vpop.f32.mrf.mxu0
        %v1132 = vadd.f32 %v1063, %v1131
        %v1133 = vpop.f32.mrf.mxu0
        %v1134 = vadd.f32 %v1068, %v1133
        %1135 = vmatmul.bf16.gmra.mxu0 %v1110
        %v1136 = vpop.f32.mrf.mxu0
        %v1137 = vadd.f32 %v1073, %v1136
        %v1138 = vpop.f32.mrf.mxu0
        %v1139 = vadd.f32 %v1078, %v1138
        %1140 = vdwg.mxu0
        %s1141 = sld [smem:[#allocation4]]
        %vm1142 = vcmp.ge.f32.partialorder %v1122, 0.0
        %vm1143 = vcmp.ge.f32.partialorder %v1124, 0.0
        %vm1144 = vcmp.ge.f32.partialorder %v1127, 0.0
        %vm1145 = vcmp.ge.f32.partialorder %v1129, 0.0
        %vm1146 = vcmp.ge.f32.partialorder %v1132, 0.0
        %vm1147 = vcmp.ge.f32.partialorder %v1134, 0.0
        %vm1148 = vcmp.ge.f32.partialorder %v1137, 0.0
        %vm1149 = vcmp.ge.f32.partialorder %v1139, 0.0
        %v1150 = vstv %s1141
        %v1151 = vmul.f32 %v1150, %v1122
        %v1152 = vmul.f32 %v1150, %v1124
        %v1153 = vmul.f32 %v1150, %v1127
        %v1154 = vmul.f32 %v1150, %v1129
        %v1155 = vmul.f32 %v1150, %v1132
        %v1156 = vmul.f32 %v1150, %v1134
        %v1157 = vmul.f32 %v1150, %v1137
        %v1158 = vmul.f32 %v1150, %v1139
        %v1159 = vsel %vm1142, %v1122, %v1151
        %v1160 = vsel %vm1143, %v1124, %v1152
        %v1161 = vsel %vm1144, %v1127, %v1153
        %v1162 = vsel %vm1145, %v1129, %v1154
        %v1163 = vsel %vm1146, %v1132, %v1155
        %v1164 = vsel %vm1147, %v1134, %v1156
        %v1165 = vsel %vm1148, %v1137, %v1157
        %v1166 = vsel %vm1149, %v1139, %v1158
        %v1167 = vld [vmem:[%s9] sm:$0xff]
        %v1168 = vld [vmem:[%s9 + $0x8] sm:$0xff]
        %v1169 = vld [vmem:[%s9 + $0x10] sm:$0xff]
        %v1170 = vld [vmem:[%s9 + $0x18] sm:$0xff]
        %v1171 = vld [vmem:[%s9 + $0x20] sm:$0xff]
        %v1172 = vld [vmem:[%s9 + $0x28] sm:$0xff]
        %v1173 = vld [vmem:[%s9 + $0x30] sm:$0xff]
        %v1174 = vld [vmem:[%s9 + $0x38] sm:$0xff]
        %v1175 = vld [vmem:[%s10] sm:$0xff]
        %v1176 = vld [vmem:[%s10 + $0x8] sm:$0xff]
        %v1177 = vld [vmem:[%s10 + $0x10] sm:$0xff]
        %v1178 = vld [vmem:[%s10 + $0x18] sm:$0xff]
        %v1179 = vld [vmem:[%s10 + $0x20] sm:$0xff]
        %v1180 = vld [vmem:[%s10 + $0x28] sm:$0xff]
        %v1181 = vld [vmem:[%s10 + $0x30] sm:$0xff]
        %v1182 = vld [vmem:[%s10 + $0x38] sm:$0xff]
        %v1183 = vsel %vm696, %v1159, 0.0
        %v1184 = vsel %vm696, %v1160, 0.0
        %v1185 = vadd.f32 %v1183, %v1184
        %v1186 = vsel %vm696, %v1161, 0.0
        %v1187 = vadd.f32 %v1185, %v1186
        %v1188 = vsel %vm696, %v1162, 0.0
        %v1189 = vadd.f32 %v1187, %v1188
        %v1190 = vsel %vm696, %v1163, 0.0
        %v1191 = vadd.f32 %v1189, %v1190
        %v1192 = vsel %vm696, %v1164, 0.0
        %v1193 = vadd.f32 %v1191, %v1192
        %v1194 = vsel %vm696, %v1165, 0.0
        %v1195 = vadd.f32 %v1193, %v1194
        %v1196 = vsel %vm696, %v1166, 0.0
        %v1197 = vadd.f32 %v1195, %v1196
        %1198 = vadd.xlane.f32.xlu0 %v1197
        %v1199 = vpop.xlane.xlu0 %1198
        %v1200 = vrot.slane %v1199, 4
        %v1201 = vadd.f32 %v1199, %v1200
        %v1202 = vrot.slane %v1201, 2
        %v1203 = vadd.f32 %v1201, %v1202
        %v1204 = vrot.slane %v1203, 1
        %v1205 = vadd.f32 %v1203, %v1204
        %s1206 = vtos %v1205
        %v1207 = vrcp.pop 768.0
        %v1208 = vmul.f32 768.0, %v1207
        %v1209 = vsub.f32 1.0, %v1208
        %v1210 = vmul.f32 %v1207, %v1209
        %v1211 = vadd.f32 %v1207, %v1210
        %vm1212 = vweird.f32 %v1207
        %v1213 = vsel %vm1212, %v1207, %v1211
        %s1214 = vtos %v1213
        %s1215 = smul.f32 %s1206, %s1214
        %v1216 = vstv %s1215
        %v1217 = vsub.f32 %v1159, %v1216
        %v1218 = vsub.f32 %v1160, %v1216
        %v1219 = vsub.f32 %v1161, %v1216
        %v1220 = vsub.f32 %v1162, %v1216
        %v1221 = vsub.f32 %v1163, %v1216
        %v1222 = vsub.f32 %v1164, %v1216
        %v1223 = vsub.f32 %v1165, %v1216
        %v1224 = vsub.f32 %v1166, %v1216
        %v1225 = vmul.f32 %v1217, %v1217
        %v1226 = vmul.f32 %v1218, %v1218
        %v1227 = vmul.f32 %v1219, %v1219
        %v1228 = vmul.f32 %v1220, %v1220
        %v1229 = vmul.f32 %v1221, %v1221
        %v1230 = vmul.f32 %v1222, %v1222
        %v1231 = vmul.f32 %v1223, %v1223
        %v1232 = vmul.f32 %v1224, %v1224
        %v1233 = vsel %vm696, %v1225, 0.0
        %v1234 = vsel %vm696, %v1226, 0.0
        %v1235 = vadd.f32 %v1233, %v1234
        %v1236 = vsel %vm696, %v1227, 0.0
        %v1237 = vadd.f32 %v1235, %v1236
        %v1238 = vsel %vm696, %v1228, 0.0
        %v1239 = vadd.f32 %v1237, %v1238
        %v1240 = vsel %vm696, %v1229, 0.0
        %v1241 = vadd.f32 %v1239, %v1240
        %v1242 = vsel %vm696, %v1230, 0.0
        %v1243 = vadd.f32 %v1241, %v1242
        %v1244 = vsel %vm696, %v1231, 0.0
        %v1245 = vadd.f32 %v1243, %v1244
        %v1246 = vsel %vm696, %v1232, 0.0
        %v1247 = vadd.f32 %v1245, %v1246
        %1248 = vadd.xlane.f32.xlu0 %v1247
        %v1249 = vpop.xlane.xlu0 %1248
        %v1250 = vrot.slane %v1249, 4
        %v1251 = vadd.f32 %v1249, %v1250
        %v1252 = vrot.slane %v1251, 2
        %v1253 = vadd.f32 %v1251, %v1252
        %v1254 = vrot.slane %v1253, 1
        %v1255 = vadd.f32 %v1253, %v1254
        %s1256 = vtos %v1255
        %v1257 = vrcp.pop 768.0
        %v1258 = vmul.f32 768.0, %v1257
        %v1259 = vsub.f32 1.0, %v1258
        %v1260 = vmul.f32 %v1257, %v1259
        %v1261 = vadd.f32 %v1257, %v1260
        %vm1262 = vweird.f32 %v1257
        %v1263 = vsel %vm1262, %v1257, %v1261
        %s1264 = vtos %v1263
        %s1265 = smul.f32 %s1256, %s1264
        %1267 = vset.pattern.permute.xlu0 0
        %1268 = vperm.xlu0 %1267, %v1167
        %v1269 = vpop.permute.xlu0 %1268
        %1272 = vset.pattern.permute.xlu0 0
        %1273 = vperm.xlu0 %1272, %v1168
        %v1274 = vpop.permute.xlu0 %1273
        %1277 = vset.pattern.permute.xlu0 0
        %1278 = vperm.xlu0 %1277, %v1169
        %v1279 = vpop.permute.xlu0 %1278
        %1282 = vset.pattern.permute.xlu0 0
        %1283 = vperm.xlu0 %1282, %v1170
        %v1284 = vpop.permute.xlu0 %1283
        %1287 = vset.pattern.permute.xlu0 0
        %1288 = vperm.xlu0 %1287, %v1171
        %v1289 = vpop.permute.xlu0 %1288
        %1292 = vset.pattern.permute.xlu0 0
        %1293 = vperm.xlu0 %1292, %v1172
        %v1294 = vpop.permute.xlu0 %1293
        %1297 = vset.pattern.permute.xlu0 0
        %1298 = vperm.xlu0 %1297, %v1173
        %v1299 = vpop.permute.xlu0 %1298
        %1302 = vset.pattern.permute.xlu0 0
        %1303 = vperm.xlu0 %1302, %v1174
        %v1304 = vpop.permute.xlu0 %1303
        %v1306 = vmul.f32 %v1269, %v1217
        %v1307 = vmul.f32 %v1274, %v1218
        %v1308 = vmul.f32 %v1279, %v1219
        %v1309 = vmul.f32 %v1284, %v1220
        %v1310 = vmul.f32 %v1289, %v1221
        %v1311 = vmul.f32 %v1294, %v1222
        %v1312 = vmul.f32 %v1299, %v1223
        %v1313 = vmul.f32 %v1304, %v1224
        %s1314 = sadd.f32 %s1265, 1e-08
        %v1315 = vstv %s1314
        %v1316 = vrsqrt.pop %v1315
        %v1317 = vmul.f32 %v1316, %v1315
        %v1318 = vmul.f32 %v1317, %v1316
        %v1319 = vmul.f32 0.5, %v1318
        %v1320 = vsub.f32 1.5, %v1319
        %v1321 = vmul.f32 %v1316, %v1320
        %vm1322 = vweird.f32 %v1315
        %vm1323 = vweird.f32 %v1316
        %vm1324 = vmor %vm1322, %vm1323
        %v1325 = vsel %vm1324, %v1316, %v1321
        %s1326 = vtos %v1325
        %v1327 = vstv %s1326
        %v1328 = vmul.f32 %v1306, %v1327
        %v1329 = vmul.f32 %v1307, %v1327
        %v1330 = vmul.f32 %v1308, %v1327
        %v1331 = vmul.f32 %v1309, %v1327
        %v1332 = vmul.f32 %v1310, %v1327
        %v1333 = vmul.f32 %v1311, %v1327
        %v1334 = vmul.f32 %v1312, %v1327
        %v1335 = vmul.f32 %v1313, %v1327
        %1337 = vset.pattern.permute.xlu0 0
        %1338 = vperm.xlu0 %1337, %v1175
        %v1339 = vpop.permute.xlu0 %1338
        %1342 = vset.pattern.permute.xlu0 0
        %1343 = vperm.xlu0 %1342, %v1176
        %v1344 = vpop.permute.xlu0 %1343
        %1347 = vset.pattern.permute.xlu0 0
        %1348 = vperm.xlu0 %1347, %v1177
        %v1349 = vpop.permute.xlu0 %1348
        %1352 = vset.pattern.permute.xlu0 0
        %1353 = vperm.xlu0 %1352, %v1178
        %v1354 = vpop.permute.xlu0 %1353
        %1357 = vset.pattern.permute.xlu0 0
        %1358 = vperm.xlu0 %1357, %v1179
        %v1359 = vpop.permute.xlu0 %1358
        %1362 = vset.pattern.permute.xlu0 0
        %1363 = vperm.xlu0 %1362, %v1180
        %v1364 = vpop.permute.xlu0 %1363
        %1367 = vset.pattern.permute.xlu0 0
        %1368 = vperm.xlu0 %1367, %v1181
        %v1369 = vpop.permute.xlu0 %1368
        %1372 = vset.pattern.permute.xlu0 0
        %1373 = vperm.xlu0 %1372, %v1182
        %v1374 = vpop.permute.xlu0 %1373
        %v1376 = vadd.f32 %v1328, %v1339
        %v1377 = vadd.f32 %v1329, %v1344
        %v1378 = vadd.f32 %v1330, %v1349
        %v1379 = vadd.f32 %v1331, %v1354
        %v1380 = vadd.f32 %v1332, %v1359
        %v1381 = vadd.f32 %v1333, %v1364
        %v1382 = vadd.f32 %v1334, %v1369
        %v1383 = vadd.f32 %v1335, %v1374
        %1384 = vst.msk [vmem:[#allocation3 + $0x8] sm:$0xff] %vm696, %v1376
        %1385 = vst.msk [vmem:[#allocation3 + $0x18] sm:$0xff] %vm696, %v1377
        %1386 = vst.msk [vmem:[#allocation3 + $0x28] sm:$0xff] %vm696, %v1378
        %1387 = vst.msk [vmem:[#allocation3 + $0x38] sm:$0xff] %vm696, %v1379
        %1388 = vst.msk [vmem:[#allocation3 + $0x48] sm:$0xff] %vm696, %v1380
        %1389 = vst.msk [vmem:[#allocation3 + $0x58] sm:$0xff] %vm696, %v1381
        %1390 = vst.msk [vmem:[#allocation3 + $0x68] sm:$0xff] %vm696, %v1382
        %1391 = vst.msk [vmem:[#allocation3 + $0x78] sm:$0xff] %vm696, %v1383
        %v1392 = vld [vmem:[%s11] sm:$0xff]
        %v1393 = vld [vmem:[%s11 + $0x8] sm:$0xff]
        %v1394 = vld [vmem:[%s11 + $0x10] sm:$0xff]
        %v1395 = vld [vmem:[%s11 + $0x18] sm:$0xff]
        %v1396 = vld [vmem:[%s11 + $0x20] sm:$0xff]
        %v1397 = vld [vmem:[%s11 + $0x28] sm:$0xff]
        %v1398 = vld [vmem:[%s11 + $0x30] sm:$0xff]
        %v1399 = vld [vmem:[%s11 + $0x38] sm:$0xff]
        %v1400 = vld [vmem:[#allocation3] sm:$0xff]
        %v1401 = vld [vmem:[#allocation3 + $0x8] sm:$0xff]
        %v1402 = vld [vmem:[#allocation3 + $0x10] sm:$0xff]
        %v1403 = vld [vmem:[#allocation3 + $0x18] sm:$0xff]
        %v1404 = vld [vmem:[#allocation3 + $0x20] sm:$0xff]
        %v1405 = vld [vmem:[#allocation3 + $0x28] sm:$0xff]
        %v1406 = vld [vmem:[#allocation3 + $0x30] sm:$0xff]
        %v1407 = vld [vmem:[#allocation3 + $0x38] sm:$0xff]
        %v1408 = vld [vmem:[#allocation3 + $0x40] sm:$0xff]
        %v1409 = vld [vmem:[#allocation3 + $0x48] sm:$0xff]
        %v1410 = vld [vmem:[#allocation3 + $0x50] sm:$0xff]
        %v1411 = vld [vmem:[#allocation3 + $0x58] sm:$0xff]
        %v1412 = vld [vmem:[#allocation3 + $0x60] sm:$0xff]
        %v1413 = vld [vmem:[#allocation3 + $0x68] sm:$0xff]
        %v1414 = vld [vmem:[#allocation3 + $0x70] sm:$0xff]
        %v1415 = vld [vmem:[#allocation3 + $0x78] sm:$0xff]
        %1417 = vset.pattern.permute.xlu0 0
        %1418 = vperm.xlu0 %1417, %v1392
        %v1419 = vpop.permute.xlu0 %1418
        %1422 = vset.pattern.permute.xlu0 0
        %1423 = vperm.xlu0 %1422, %v1393
        %v1424 = vpop.permute.xlu0 %1423
        %1427 = vset.pattern.permute.xlu0 0
        %1428 = vperm.xlu0 %1427, %v1394
        %v1429 = vpop.permute.xlu0 %1428
        %1432 = vset.pattern.permute.xlu0 0
        %1433 = vperm.xlu0 %1432, %v1395
        %v1434 = vpop.permute.xlu0 %1433
        %1437 = vset.pattern.permute.xlu0 0
        %1438 = vperm.xlu0 %1437, %v1396
        %v1439 = vpop.permute.xlu0 %1438
        %1442 = vset.pattern.permute.xlu0 0
        %1443 = vperm.xlu0 %1442, %v1397
        %v1444 = vpop.permute.xlu0 %1443
        %1447 = vset.pattern.permute.xlu0 0
        %1448 = vperm.xlu0 %1447, %v1398
        %v1449 = vpop.permute.xlu0 %1448
        %1452 = vset.pattern.permute.xlu0 0
        %1453 = vperm.xlu0 %1452, %v1399
        %v1454 = vpop.permute.xlu0 %1453
        %v1456 = vmul.f32 %v1419, %v1400
        %v1457 = vmul.f32 %v1419, %v1401
        %v1458 = vmul.f32 %v1424, %v1402
        %v1459 = vmul.f32 %v1424, %v1403
        %v1460 = vmul.f32 %v1429, %v1404
        %v1461 = vmul.f32 %v1429, %v1405
        %v1462 = vmul.f32 %v1434, %v1406
        %v1463 = vmul.f32 %v1434, %v1407
        %v1464 = vmul.f32 %v1439, %v1408
        %v1465 = vmul.f32 %v1439, %v1409
        %v1466 = vmul.f32 %v1444, %v1410
        %v1467 = vmul.f32 %v1444, %v1411
        %v1468 = vmul.f32 %v1449, %v1412
        %v1469 = vmul.f32 %v1449, %v1413
        %v1470 = vmul.f32 %v1454, %v1414
        %v1471 = vmul.f32 %v1454, %v1415
        %v1472 = vadd.f32 %v1456, 0.0
        %v1473 = vadd.f32 %v1457, 0.0
        %v1474 = vadd.f32 %v1458, 0.0
        %v1475 = vadd.f32 %v1459, 0.0
        %v1476 = vadd.f32 %v1460, 0.0
        %v1477 = vadd.f32 %v1461, 0.0
        %v1478 = vadd.f32 %v1462, 0.0
        %v1479 = vadd.f32 %v1463, 0.0
        %v1480 = vadd.f32 %v1464, 0.0
        %v1481 = vadd.f32 %v1465, 0.0
        %v1482 = vadd.f32 %v1466, 0.0
        %v1483 = vadd.f32 %v1467, 0.0
        %v1484 = vadd.f32 %v1468, 0.0
        %v1485 = vadd.f32 %v1469, 0.0
        %v1486 = vadd.f32 %v1470, 0.0
        %v1487 = vadd.f32 %v1471, 0.0
        %s1488 = scalar_lea.vmem %s11, 64
        %v1489 = vld [vmem:[%s1488] sm:$0xff]
        %v1490 = vld [vmem:[%s1488 + $0x8] sm:$0xff]
        %v1491 = vld [vmem:[%s1488 + $0x10] sm:$0xff]
        %v1492 = vld [vmem:[%s1488 + $0x18] sm:$0xff]
        %v1493 = vld [vmem:[%s1488 + $0x20] sm:$0xff]
        %v1494 = vld [vmem:[%s1488 + $0x28] sm:$0xff]
        %v1495 = vld [vmem:[%s1488 + $0x30] sm:$0xff]
        %v1496 = vld [vmem:[%s1488 + $0x38] sm:$0xff]
        %1498 = vset.pattern.permute.xlu0 0
        %1499 = vperm.xlu0 %1498, %v1489
        %v1500 = vpop.permute.xlu0 %1499
        %1503 = vset.pattern.permute.xlu0 0
        %1504 = vperm.xlu0 %1503, %v1490
        %v1505 = vpop.permute.xlu0 %1504
        %1508 = vset.pattern.permute.xlu0 0
        %1509 = vperm.xlu0 %1508, %v1491
        %v1510 = vpop.permute.xlu0 %1509
        %1513 = vset.pattern.permute.xlu0 0
        %1514 = vperm.xlu0 %1513, %v1492
        %v1515 = vpop.permute.xlu0 %1514
        %1518 = vset.pattern.permute.xlu0 0
        %1519 = vperm.xlu0 %1518, %v1493
        %v1520 = vpop.permute.xlu0 %1519
        %1523 = vset.pattern.permute.xlu0 0
        %1524 = vperm.xlu0 %1523, %v1494
        %v1525 = vpop.permute.xlu0 %1524
        %1528 = vset.pattern.permute.xlu0 0
        %1529 = vperm.xlu0 %1528, %v1495
        %v1530 = vpop.permute.xlu0 %1529
        %1533 = vset.pattern.permute.xlu0 0
        %1534 = vperm.xlu0 %1533, %v1496
        %v1535 = vpop.permute.xlu0 %1534
        %v1537 = vmul.f32 %v1500, %v1401
        %v1538 = vmul.f32 %v1505, %v1403
        %v1539 = vmul.f32 %v1510, %v1405
        %v1540 = vmul.f32 %v1515, %v1407
        %v1541 = vmul.f32 %v1520, %v1409
        %v1542 = vmul.f32 %v1525, %v1411
        %v1543 = vmul.f32 %v1530, %v1413
        %v1544 = vmul.f32 %v1535, %v1415
        %1553 = vrot.lane.b32.xlu0 %v1537, 127
        %v1554 = vpop.permute.xlu0 %1553
        %1555 = vrot.lane.b32.xlu0 %v1538, 127
        %v1556 = vpop.permute.xlu0 %1555
        %1557 = vrot.lane.b32.xlu0 %v1539, 127
        %v1558 = vpop.permute.xlu0 %1557
        %1559 = vrot.lane.b32.xlu0 %v1540, 127
        %v1560 = vpop.permute.xlu0 %1559
        %1561 = vrot.lane.b32.xlu0 %v1541, 127
        %v1562 = vpop.permute.xlu0 %1561
        %1563 = vrot.lane.b32.xlu0 %v1542, 127
        %v1564 = vpop.permute.xlu0 %1563
        %1565 = vrot.lane.b32.xlu0 %v1543, 127
        %v1566 = vpop.permute.xlu0 %1565
        %1567 = vrot.lane.b32.xlu0 %v1544, 127
        %v1568 = vpop.permute.xlu0 %1567
        %v1577 = vadd.f32 %v1472, %v1554
        %v1578 = vadd.f32 %v1473, %v1554
        %v1579 = vadd.f32 %v1474, %v1556
        %v1580 = vadd.f32 %v1475, %v1556
        %v1581 = vadd.f32 %v1476, %v1558
        %v1582 = vadd.f32 %v1477, %v1558
        %v1583 = vadd.f32 %v1478, %v1560
        %v1584 = vadd.f32 %v1479, %v1560
        %v1585 = vadd.f32 %v1480, %v1562
        %v1586 = vadd.f32 %v1481, %v1562
        %v1587 = vadd.f32 %v1482, %v1564
        %v1588 = vadd.f32 %v1483, %v1564
        %v1589 = vadd.f32 %v1484, %v1566
        %v1590 = vadd.f32 %v1485, %v1566
        %v1591 = vadd.f32 %v1486, %v1568
        %v1592 = vadd.f32 %v1487, %v1568
        %s1593 = scalar_lea.vmem %s11, 128
        %v1594 = vld [vmem:[%s1593] sm:$0xff]
        %v1595 = vld [vmem:[%s1593 + $0x8] sm:$0xff]
        %v1596 = vld [vmem:[%s1593 + $0x10] sm:$0xff]
        %v1597 = vld [vmem:[%s1593 + $0x18] sm:$0xff]
        %v1598 = vld [vmem:[%s1593 + $0x20] sm:$0xff]
        %v1599 = vld [vmem:[%s1593 + $0x28] sm:$0xff]
        %v1600 = vld [vmem:[%s1593 + $0x30] sm:$0xff]
        %v1601 = vld [vmem:[%s1593 + $0x38] sm:$0xff]
        %1603 = vset.pattern.permute.xlu0 0
        %1604 = vperm.xlu0 %1603, %v1594
        %v1605 = vpop.permute.xlu0 %1604
        %1608 = vset.pattern.permute.xlu0 0
        %1609 = vperm.xlu0 %1608, %v1595
        %v1610 = vpop.permute.xlu0 %1609
        %1613 = vset.pattern.permute.xlu0 0
        %1614 = vperm.xlu0 %1613, %v1596
        %v1615 = vpop.permute.xlu0 %1614
        %1618 = vset.pattern.permute.xlu0 0
        %1619 = vperm.xlu0 %1618, %v1597
        %v1620 = vpop.permute.xlu0 %1619
        %1623 = vset.pattern.permute.xlu0 0
        %1624 = vperm.xlu0 %1623, %v1598
        %v1625 = vpop.permute.xlu0 %1624
        %1628 = vset.pattern.permute.xlu0 0
        %1629 = vperm.xlu0 %1628, %v1599
        %v1630 = vpop.permute.xlu0 %1629
        %1633 = vset.pattern.permute.xlu0 0
        %1634 = vperm.xlu0 %1633, %v1600
        %v1635 = vpop.permute.xlu0 %1634
        %1638 = vset.pattern.permute.xlu0 0
        %1639 = vperm.xlu0 %1638, %v1601
        %v1640 = vpop.permute.xlu0 %1639
        %v1642 = vmul.f32 %v1605, %v1401
        %v1643 = vmul.f32 %v1610, %v1403
        %v1644 = vmul.f32 %v1615, %v1405
        %v1645 = vmul.f32 %v1620, %v1407
        %v1646 = vmul.f32 %v1625, %v1409
        %v1647 = vmul.f32 %v1630, %v1411
        %v1648 = vmul.f32 %v1635, %v1413
        %v1649 = vmul.f32 %v1640, %v1415
        %1658 = vrot.lane.b32.xlu0 %v1642, 126
        %v1659 = vpop.permute.xlu0 %1658
        %1660 = vrot.lane.b32.xlu0 %v1643, 126
        %v1661 = vpop.permute.xlu0 %1660
        %1662 = vrot.lane.b32.xlu0 %v1644, 126
        %v1663 = vpop.permute.xlu0 %1662
        %1664 = vrot.lane.b32.xlu0 %v1645, 126
        %v1665 = vpop.permute.xlu0 %1664
        %1666 = vrot.lane.b32.xlu0 %v1646, 126
        %v1667 = vpop.permute.xlu0 %1666
        %1668 = vrot.lane.b32.xlu0 %v1647, 126
        %v1669 = vpop.permute.xlu0 %1668
        %1670 = vrot.lane.b32.xlu0 %v1648, 126
        %v1671 = vpop.permute.xlu0 %1670
        %1672 = vrot.lane.b32.xlu0 %v1649, 126
        %v1673 = vpop.permute.xlu0 %1672
        %v1682 = vadd.f32 %v1577, %v1659
        %v1683 = vadd.f32 %v1578, %v1659
        %v1684 = vadd.f32 %v1579, %v1661
        %v1685 = vadd.f32 %v1580, %v1661
        %v1686 = vadd.f32 %v1581, %v1663
        %v1687 = vadd.f32 %v1582, %v1663
        %v1688 = vadd.f32 %v1583, %v1665
        %v1689 = vadd.f32 %v1584, %v1665
        %v1690 = vadd.f32 %v1585, %v1667
        %v1691 = vadd.f32 %v1586, %v1667
        %v1692 = vadd.f32 %v1587, %v1669
        %v1693 = vadd.f32 %v1588, %v1669
        %v1694 = vadd.f32 %v1589, %v1671
        %v1695 = vadd.f32 %v1590, %v1671
        %v1696 = vadd.f32 %v1591, %v1673
        %v1697 = vadd.f32 %v1592, %v1673
        %v1698 = vld [vmem:[%s12] sm:$0xff]
        %v1699 = vld [vmem:[%s12 + $0x8] sm:$0xff]
        %v1700 = vld [vmem:[%s12 + $0x10] sm:$0xff]
        %v1701 = vld [vmem:[%s12 + $0x18] sm:$0xff]
        %v1702 = vld [vmem:[%s12 + $0x20] sm:$0xff]
        %v1703 = vld [vmem:[%s12 + $0x28] sm:$0xff]
        %v1704 = vld [vmem:[%s12 + $0x30] sm:$0xff]
        %v1705 = vld [vmem:[%s12 + $0x38] sm:$0xff]
        %1707 = vset.pattern.permute.xlu0 0
        %1708 = vperm.xlu0 %1707, %v1698
        %v1709 = vpop.permute.xlu0 %1708
        %1712 = vset.pattern.permute.xlu0 0
        %1713 = vperm.xlu0 %1712, %v1699
        %v1714 = vpop.permute.xlu0 %1713
        %1717 = vset.pattern.permute.xlu0 0
        %1718 = vperm.xlu0 %1717, %v1700
        %v1719 = vpop.permute.xlu0 %1718
        %1722 = vset.pattern.permute.xlu0 0
        %1723 = vperm.xlu0 %1722, %v1701
        %v1724 = vpop.permute.xlu0 %1723
        %1727 = vset.pattern.permute.xlu0 0
        %1728 = vperm.xlu0 %1727, %v1702
        %v1729 = vpop.permute.xlu0 %1728
        %1732 = vset.pattern.permute.xlu0 0
        %1733 = vperm.xlu0 %1732, %v1703
        %v1734 = vpop.permute.xlu0 %1733
        %1737 = vset.pattern.permute.xlu0 0
        %1738 = vperm.xlu0 %1737, %v1704
        %v1739 = vpop.permute.xlu0 %1738
        %1742 = vset.pattern.permute.xlu0 0
        %1743 = vperm.xlu0 %1742, %v1705
        %v1744 = vpop.permute.xlu0 %1743
        %v1746 = vadd.f32 %v1682, %v1709
        %v1747 = vadd.f32 %v1683, %v1709
        %v1748 = vadd.f32 %v1684, %v1714
        %v1749 = vadd.f32 %v1685, %v1714
        %v1750 = vadd.f32 %v1686, %v1719
        %v1751 = vadd.f32 %v1687, %v1719
        %v1752 = vadd.f32 %v1688, %v1724
        %v1753 = vadd.f32 %v1689, %v1724
        %v1754 = vadd.f32 %v1690, %v1729
        %v1755 = vadd.f32 %v1691, %v1729
        %v1756 = vadd.f32 %v1692, %v1734
        %v1757 = vadd.f32 %v1693, %v1734
        %v1758 = vadd.f32 %v1694, %v1739
        %v1759 = vadd.f32 %v1695, %v1739
        %v1760 = vadd.f32 %v1696, %v1744
        %v1761 = vadd.f32 %v1697, %v1744
        %s1762 = sld [smem:[#allocation4 + $0x1]]
        %vm1763 = vcmp.ge.f32.partialorder %v1746, 0.0
        %vm1764 = vcmp.ge.f32.partialorder %v1747, 0.0
        %vm1765 = vcmp.ge.f32.partialorder %v1748, 0.0
        %vm1766 = vcmp.ge.f32.partialorder %v1749, 0.0
        %vm1767 = vcmp.ge.f32.partialorder %v1750, 0.0
        %vm1768 = vcmp.ge.f32.partialorder %v1751, 0.0
        %vm1769 = vcmp.ge.f32.partialorder %v1752, 0.0
        %vm1770 = vcmp.ge.f32.partialorder %v1753, 0.0
        %vm1771 = vcmp.ge.f32.partialorder %v1754, 0.0
        %vm1772 = vcmp.ge.f32.partialorder %v1755, 0.0
        %vm1773 = vcmp.ge.f32.partialorder %v1756, 0.0
        %vm1774 = vcmp.ge.f32.partialorder %v1757, 0.0
        %vm1775 = vcmp.ge.f32.partialorder %v1758, 0.0
        %vm1776 = vcmp.ge.f32.partialorder %v1759, 0.0
        %vm1777 = vcmp.ge.f32.partialorder %v1760, 0.0
        %vm1778 = vcmp.ge.f32.partialorder %v1761, 0.0
        %v1779 = vstv %s1762
        %v1780 = vmul.f32 %v1779, %v1746
        %v1781 = vmul.f32 %v1779, %v1747
        %v1782 = vmul.f32 %v1779, %v1748
        %v1783 = vmul.f32 %v1779, %v1749
        %v1784 = vmul.f32 %v1779, %v1750
        %v1785 = vmul.f32 %v1779, %v1751
        %v1786 = vmul.f32 %v1779, %v1752
        %v1787 = vmul.f32 %v1779, %v1753
        %v1788 = vmul.f32 %v1779, %v1754
        %v1789 = vmul.f32 %v1779, %v1755
        %v1790 = vmul.f32 %v1779, %v1756
        %v1791 = vmul.f32 %v1779, %v1757
        %v1792 = vmul.f32 %v1779, %v1758
        %v1793 = vmul.f32 %v1779, %v1759
        %v1794 = vmul.f32 %v1779, %v1760
        %v1795 = vmul.f32 %v1779, %v1761
        %v1796 = vsel %vm1763, %v1746, %v1780
        %v1797 = vsel %vm1764, %v1747, %v1781
        %v1798 = vsel %vm1765, %v1748, %v1782
        %v1799 = vsel %vm1766, %v1749, %v1783
        %v1800 = vsel %vm1767, %v1750, %v1784
        %v1801 = vsel %vm1768, %v1751, %v1785
        %v1802 = vsel %vm1769, %v1752, %v1786
        %v1803 = vsel %vm1770, %v1753, %v1787
        %v1804 = vsel %vm1771, %v1754, %v1788
        %v1805 = vsel %vm1772, %v1755, %v1789
        %v1806 = vsel %vm1773, %v1756, %v1790
        %v1807 = vsel %vm1774, %v1757, %v1791
        %v1808 = vsel %vm1775, %v1758, %v1792
        %v1809 = vsel %vm1776, %v1759, %v1793
        %v1810 = vsel %vm1777, %v1760, %v1794
        %v1811 = vsel %vm1778, %v1761, %v1795
        %v1812 = vld [vmem:[%s13] sm:$0xff]
        %v1813 = vld [vmem:[%s13 + $0x8] sm:$0xff]
        %v1814 = vld [vmem:[%s13 + $0x10] sm:$0xff]
        %v1815 = vld [vmem:[%s13 + $0x18] sm:$0xff]
        %v1816 = vld [vmem:[%s13 + $0x20] sm:$0xff]
        %v1817 = vld [vmem:[%s13 + $0x28] sm:$0xff]
        %v1818 = vld [vmem:[%s13 + $0x30] sm:$0xff]
        %v1819 = vld [vmem:[%s13 + $0x38] sm:$0xff]
        %v1820 = vld [vmem:[%s14] sm:$0xff]
        %v1821 = vld [vmem:[%s14 + $0x8] sm:$0xff]
        %v1822 = vld [vmem:[%s14 + $0x10] sm:$0xff]
        %v1823 = vld [vmem:[%s14 + $0x18] sm:$0xff]
        %v1824 = vld [vmem:[%s14 + $0x20] sm:$0xff]
        %v1825 = vld [vmem:[%s14 + $0x28] sm:$0xff]
        %v1826 = vld [vmem:[%s14 + $0x30] sm:$0xff]
        %v1827 = vld [vmem:[%s14 + $0x38] sm:$0xff]
        %1844 = vrot.lane.b32.xlu0 %v1796, 1
        %v1845 = vpop.permute.xlu0 %1844
        %1846 = vrot.lane.b32.xlu0 %v1797, 1
        %v1847 = vpop.permute.xlu0 %1846
        %1848 = vrot.lane.b32.xlu0 %v1798, 1
        %v1849 = vpop.permute.xlu0 %1848
        %1850 = vrot.lane.b32.xlu0 %v1799, 1
        %v1851 = vpop.permute.xlu0 %1850
        %1852 = vrot.lane.b32.xlu0 %v1800, 1
        %v1853 = vpop.permute.xlu0 %1852
        %1854 = vrot.lane.b32.xlu0 %v1801, 1
        %v1855 = vpop.permute.xlu0 %1854
        %1856 = vrot.lane.b32.xlu0 %v1802, 1
        %v1857 = vpop.permute.xlu0 %1856
        %1858 = vrot.lane.b32.xlu0 %v1803, 1
        %v1859 = vpop.permute.xlu0 %1858
        %1860 = vrot.lane.b32.xlu0 %v1804, 1
        %v1861 = vpop.permute.xlu0 %1860
        %1862 = vrot.lane.b32.xlu0 %v1805, 1
        %v1863 = vpop.permute.xlu0 %1862
        %1864 = vrot.lane.b32.xlu0 %v1806, 1
        %v1865 = vpop.permute.xlu0 %1864
        %1866 = vrot.lane.b32.xlu0 %v1807, 1
        %v1867 = vpop.permute.xlu0 %1866
        %1868 = vrot.lane.b32.xlu0 %v1808, 1
        %v1869 = vpop.permute.xlu0 %1868
        %1870 = vrot.lane.b32.xlu0 %v1809, 1
        %v1871 = vpop.permute.xlu0 %1870
        %1872 = vrot.lane.b32.xlu0 %v1810, 1
        %v1873 = vpop.permute.xlu0 %1872
        %1874 = vrot.lane.b32.xlu0 %v1811, 1
        %v1875 = vpop.permute.xlu0 %1874
        %vm1876 = vcmask 7168
        %v1877 = vsel %vm1876, %v1845, %v1847
        %v1878 = vsel %vm1876, %v1849, %v1851
        %v1879 = vsel %vm1876, %v1853, %v1855
        %v1880 = vsel %vm1876, %v1857, %v1859
        %v1881 = vsel %vm1876, %v1861, %v1863
        %v1882 = vsel %vm1876, %v1865, %v1867
        %v1883 = vsel %vm1876, %v1869, %v1871
        %v1884 = vsel %vm1876, %v1873, %v1875
        %v1893 = vsel %vm696, %v1877, 0.0
        %v1894 = vsel %vm696, %v1878, 0.0
        %v1895 = vadd.f32 %v1893, %v1894
        %v1896 = vsel %vm696, %v1879, 0.0
        %v1897 = vadd.f32 %v1895, %v1896
        %v1898 = vsel %vm696, %v1880, 0.0
        %v1899 = vadd.f32 %v1897, %v1898
        %v1900 = vsel %vm696, %v1881, 0.0
        %v1901 = vadd.f32 %v1899, %v1900
        %v1902 = vsel %vm696, %v1882, 0.0
        %v1903 = vadd.f32 %v1901, %v1902
        %v1904 = vsel %vm696, %v1883, 0.0
        %v1905 = vadd.f32 %v1903, %v1904
        %v1906 = vsel %vm696, %v1884, 0.0
        %v1907 = vadd.f32 %v1905, %v1906
        %1908 = vadd.xlane.f32.xlu0 %v1907
        %v1909 = vpop.xlane.xlu0 %1908
        %v1910 = vrot.slane %v1909, 4
        %v1911 = vadd.f32 %v1909, %v1910
        %v1912 = vrot.slane %v1911, 2
        %v1913 = vadd.f32 %v1911, %v1912
        %v1914 = vrot.slane %v1913, 1
        %v1915 = vadd.f32 %v1913, %v1914
        %s1916 = vtos %v1915
        %v1917 = vrcp.pop 768.0
        %v1918 = vmul.f32 768.0, %v1917
        %v1919 = vsub.f32 1.0, %v1918
        %v1920 = vmul.f32 %v1917, %v1919
        %v1921 = vadd.f32 %v1917, %v1920
        %vm1922 = vweird.f32 %v1917
        %v1923 = vsel %vm1922, %v1917, %v1921
        %s1924 = vtos %v1923
        %s1925 = smul.f32 %s1916, %s1924
        %v1926 = vstv %s1925
        %v1927 = vsub.f32 %v1796, %v1926
        %v1928 = vsub.f32 %v1797, %v1926
        %v1929 = vsub.f32 %v1798, %v1926
        %v1930 = vsub.f32 %v1799, %v1926
        %v1931 = vsub.f32 %v1800, %v1926
        %v1932 = vsub.f32 %v1801, %v1926
        %v1933 = vsub.f32 %v1802, %v1926
        %v1934 = vsub.f32 %v1803, %v1926
        %v1935 = vsub.f32 %v1804, %v1926
        %v1936 = vsub.f32 %v1805, %v1926
        %v1937 = vsub.f32 %v1806, %v1926
        %v1938 = vsub.f32 %v1807, %v1926
        %v1939 = vsub.f32 %v1808, %v1926
        %v1940 = vsub.f32 %v1809, %v1926
        %v1941 = vsub.f32 %v1810, %v1926
        %v1942 = vsub.f32 %v1811, %v1926
        %v1943 = vmul.f32 %v1927, %v1927
        %v1944 = vmul.f32 %v1928, %v1928
        %v1945 = vmul.f32 %v1929, %v1929
        %v1946 = vmul.f32 %v1930, %v1930
        %v1947 = vmul.f32 %v1931, %v1931
        %v1948 = vmul.f32 %v1932, %v1932
        %v1949 = vmul.f32 %v1933, %v1933
        %v1950 = vmul.f32 %v1934, %v1934
        %v1951 = vmul.f32 %v1935, %v1935
        %v1952 = vmul.f32 %v1936, %v1936
        %v1953 = vmul.f32 %v1937, %v1937
        %v1954 = vmul.f32 %v1938, %v1938
        %v1955 = vmul.f32 %v1939, %v1939
        %v1956 = vmul.f32 %v1940, %v1940
        %v1957 = vmul.f32 %v1941, %v1941
        %v1958 = vmul.f32 %v1942, %v1942
        %1975 = vrot.lane.b32.xlu0 %v1943, 1
        %v1976 = vpop.permute.xlu0 %1975
        %1977 = vrot.lane.b32.xlu0 %v1944, 1
        %v1978 = vpop.permute.xlu0 %1977
        %1979 = vrot.lane.b32.xlu0 %v1945, 1
        %v1980 = vpop.permute.xlu0 %1979
        %1981 = vrot.lane.b32.xlu0 %v1946, 1
        %v1982 = vpop.permute.xlu0 %1981
        %1983 = vrot.lane.b32.xlu0 %v1947, 1
        %v1984 = vpop.permute.xlu0 %1983
        %1985 = vrot.lane.b32.xlu0 %v1948, 1
        %v1986 = vpop.permute.xlu0 %1985
        %1987 = vrot.lane.b32.xlu0 %v1949, 1
        %v1988 = vpop.permute.xlu0 %1987
        %1989 = vrot.lane.b32.xlu0 %v1950, 1
        %v1990 = vpop.permute.xlu0 %1989
        %1991 = vrot.lane.b32.xlu0 %v1951, 1
        %v1992 = vpop.permute.xlu0 %1991
        %1993 = vrot.lane.b32.xlu0 %v1952, 1
        %v1994 = vpop.permute.xlu0 %1993
        %1995 = vrot.lane.b32.xlu0 %v1953, 1
        %v1996 = vpop.permute.xlu0 %1995
        %1997 = vrot.lane.b32.xlu0 %v1954, 1
        %v1998 = vpop.permute.xlu0 %1997
        %1999 = vrot.lane.b32.xlu0 %v1955, 1
        %v2000 = vpop.permute.xlu0 %1999
        %2001 = vrot.lane.b32.xlu0 %v1956, 1
        %v2002 = vpop.permute.xlu0 %2001
        %2003 = vrot.lane.b32.xlu0 %v1957, 1
        %v2004 = vpop.permute.xlu0 %2003
        %2005 = vrot.lane.b32.xlu0 %v1958, 1
        %v2006 = vpop.permute.xlu0 %2005
        %v2007 = vsel %vm1876, %v1976, %v1978
        %v2008 = vsel %vm1876, %v1980, %v1982
        %v2009 = vsel %vm1876, %v1984, %v1986
        %v2010 = vsel %vm1876, %v1988, %v1990
        %v2011 = vsel %vm1876, %v1992, %v1994
        %v2012 = vsel %vm1876, %v1996, %v1998
        %v2013 = vsel %vm1876, %v2000, %v2002
        %v2014 = vsel %vm1876, %v2004, %v2006
        %v2023 = vsel %vm696, %v2007, 0.0
        %v2024 = vsel %vm696, %v2008, 0.0
        %v2025 = vadd.f32 %v2023, %v2024
        %v2026 = vsel %vm696, %v2009, 0.0
        %v2027 = vadd.f32 %v2025, %v2026
        %v2028 = vsel %vm696, %v2010, 0.0
        %v2029 = vadd.f32 %v2027, %v2028
        %v2030 = vsel %vm696, %v2011, 0.0
        %v2031 = vadd.f32 %v2029, %v2030
        %v2032 = vsel %vm696, %v2012, 0.0
        %v2033 = vadd.f32 %v2031, %v2032
        %v2034 = vsel %vm696, %v2013, 0.0
        %v2035 = vadd.f32 %v2033, %v2034
        %v2036 = vsel %vm696, %v2014, 0.0
        %v2037 = vadd.f32 %v2035, %v2036
        %2038 = vadd.xlane.f32.xlu0 %v2037
        %v2039 = vpop.xlane.xlu0 %2038
        %v2040 = vrot.slane %v2039, 4
        %v2041 = vadd.f32 %v2039, %v2040
        %v2042 = vrot.slane %v2041, 2
        %v2043 = vadd.f32 %v2041, %v2042
        %v2044 = vrot.slane %v2043, 1
        %v2045 = vadd.f32 %v2043, %v2044
        %s2046 = vtos %v2045
        %v2047 = vrcp.pop 768.0
        %v2048 = vmul.f32 768.0, %v2047
        %v2049 = vsub.f32 1.0, %v2048
        %v2050 = vmul.f32 %v2047, %v2049
        %v2051 = vadd.f32 %v2047, %v2050
        %vm2052 = vweird.f32 %v2047
        %v2053 = vsel %vm2052, %v2047, %v2051
        %s2054 = vtos %v2053
        %s2055 = smul.f32 %s2046, %s2054
        %2057 = vset.pattern.permute.xlu0 0
        %2058 = vperm.xlu0 %2057, %v1812
        %v2059 = vpop.permute.xlu0 %2058
        %2062 = vset.pattern.permute.xlu0 0
        %2063 = vperm.xlu0 %2062, %v1813
        %v2064 = vpop.permute.xlu0 %2063
        %2067 = vset.pattern.permute.xlu0 0
        %2068 = vperm.xlu0 %2067, %v1814
        %v2069 = vpop.permute.xlu0 %2068
        %2072 = vset.pattern.permute.xlu0 0
        %2073 = vperm.xlu0 %2072, %v1815
        %v2074 = vpop.permute.xlu0 %2073
        %2077 = vset.pattern.permute.xlu0 0
        %2078 = vperm.xlu0 %2077, %v1816
        %v2079 = vpop.permute.xlu0 %2078
        %2082 = vset.pattern.permute.xlu0 0
        %2083 = vperm.xlu0 %2082, %v1817
        %v2084 = vpop.permute.xlu0 %2083
        %2087 = vset.pattern.permute.xlu0 0
        %2088 = vperm.xlu0 %2087, %v1818
        %v2089 = vpop.permute.xlu0 %2088
        %2092 = vset.pattern.permute.xlu0 0
        %2093 = vperm.xlu0 %2092, %v1819
        %v2094 = vpop.permute.xlu0 %2093
        %v2096 = vmul.f32 %v2059, %v1927
        %v2097 = vmul.f32 %v2059, %v1928
        %v2098 = vmul.f32 %v2064, %v1929
        %v2099 = vmul.f32 %v2064, %v1930
        %v2100 = vmul.f32 %v2069, %v1931
        %v2101 = vmul.f32 %v2069, %v1932
        %v2102 = vmul.f32 %v2074, %v1933
        %v2103 = vmul.f32 %v2074, %v1934
        %v2104 = vmul.f32 %v2079, %v1935
        %v2105 = vmul.f32 %v2079, %v1936
        %v2106 = vmul.f32 %v2084, %v1937
        %v2107 = vmul.f32 %v2084, %v1938
        %v2108 = vmul.f32 %v2089, %v1939
        %v2109 = vmul.f32 %v2089, %v1940
        %v2110 = vmul.f32 %v2094, %v1941
        %v2111 = vmul.f32 %v2094, %v1942
        %s2112 = sadd.f32 %s2055, 1e-08
        %v2113 = vstv %s2112
        %v2114 = vrsqrt.pop %v2113
        %v2115 = vmul.f32 %v2114, %v2113
        %v2116 = vmul.f32 %v2115, %v2114
        %v2117 = vmul.f32 0.5, %v2116
        %v2118 = vsub.f32 1.5, %v2117
        %v2119 = vmul.f32 %v2114, %v2118
        %vm2120 = vweird.f32 %v2113
        %vm2121 = vweird.f32 %v2114
        %vm2122 = vmor %vm2120, %vm2121
        %v2123 = vsel %vm2122, %v2114, %v2119
        %s2124 = vtos %v2123
        %v2125 = vstv %s2124
        %v2126 = vmul.f32 %v2096, %v2125
        %v2127 = vmul.f32 %v2097, %v2125
        %v2128 = vmul.f32 %v2098, %v2125
        %v2129 = vmul.f32 %v2099, %v2125
        %v2130 = vmul.f32 %v2100, %v2125
        %v2131 = vmul.f32 %v2101, %v2125
        %v2132 = vmul.f32 %v2102, %v2125
        %v2133 = vmul.f32 %v2103, %v2125
        %v2134 = vmul.f32 %v2104, %v2125
        %v2135 = vmul.f32 %v2105, %v2125
        %v2136 = vmul.f32 %v2106, %v2125
        %v2137 = vmul.f32 %v2107, %v2125
        %v2138 = vmul.f32 %v2108, %v2125
        %v2139 = vmul.f32 %v2109, %v2125
        %v2140 = vmul.f32 %v2110, %v2125
        %v2141 = vmul.f32 %v2111, %v2125
        %2143 = vset.pattern.permute.xlu0 0
        %2144 = vperm.xlu0 %2143, %v1820
        %v2145 = vpop.permute.xlu0 %2144
        %2148 = vset.pattern.permute.xlu0 0
        %2149 = vperm.xlu0 %2148, %v1821
        %v2150 = vpop.permute.xlu0 %2149
        %2153 = vset.pattern.permute.xlu0 0
        %2154 = vperm.xlu0 %2153, %v1822
        %v2155 = vpop.permute.xlu0 %2154
        %2158 = vset.pattern.permute.xlu0 0
        %2159 = vperm.xlu0 %2158, %v1823
        %v2160 = vpop.permute.xlu0 %2159
        %2163 = vset.pattern.permute.xlu0 0
        %2164 = vperm.xlu0 %2163, %v1824
        %v2165 = vpop.permute.xlu0 %2164
        %2168 = vset.pattern.permute.xlu0 0
        %2169 = vperm.xlu0 %2168, %v1825
        %v2170 = vpop.permute.xlu0 %2169
        %2173 = vset.pattern.permute.xlu0 0
        %2174 = vperm.xlu0 %2173, %v1826
        %v2175 = vpop.permute.xlu0 %2174
        %2178 = vset.pattern.permute.xlu0 0
        %2179 = vperm.xlu0 %2178, %v1827
        %v2180 = vpop.permute.xlu0 %2179
        %v2182 = vadd.f32 %v2126, %v2145
        %v2183 = vadd.f32 %v2127, %v2145
        %v2184 = vadd.f32 %v2128, %v2150
        %v2185 = vadd.f32 %v2129, %v2150
        %v2186 = vadd.f32 %v2130, %v2155
        %v2187 = vadd.f32 %v2131, %v2155
        %v2188 = vadd.f32 %v2132, %v2160
        %v2189 = vadd.f32 %v2133, %v2160
        %v2190 = vadd.f32 %v2134, %v2165
        %v2191 = vadd.f32 %v2135, %v2165
        %v2192 = vadd.f32 %v2136, %v2170
        %v2193 = vadd.f32 %v2137, %v2170
        %v2194 = vadd.f32 %v2138, %v2175
        %v2195 = vadd.f32 %v2139, %v2175
        %v2196 = vadd.f32 %v2140, %v2180
        %v2197 = vadd.f32 %v2141, %v2180
        %v2198 = vld [vmem:[%s15] sm:$0xf]
        %v2199 = vld [vmem:[%s15 + $0x4] sm:$0xf]
        %v2200 = vpack.c.bf16 %v2184, %v2182
        %v2201 = vpack.c.bf16 %v2185, %v2183
        %v2202 = vpack.c.bf16 %v2188, %v2186
        %v2203 = vpack.c.bf16 %v2189, %v2187
        %v2204 = vpack.c.bf16 %v2192, %v2190
        %v2205 = vpack.c.bf16 %v2193, %v2191
        %v2206 = vpack.c.bf16 %v2196, %v2194
        %v2207 = vpack.c.bf16 %v2197, %v2195
        %v2208 = vld [vmem:[%s16] sm:$0xff]
        %v2209 = vld [vmem:[%s16 + $0x8] sm:$0xff]
        %2211 = vset.pattern.permute.xlu0 0
        %2212 = vperm.xlu0 %2211, %v2208
        %v2213 = vpop.permute.xlu0 %2212
        %2216 = vset.pattern.permute.xlu0 0
        %2217 = vperm.xlu0 %2216, %v2209
        %v2218 = vpop.permute.xlu0 %2217
        %v2222 = vunpack.c.l.b16 %v2198
        %v2223 = vunpack.c.l.b16 %v2199
        %v2224 = vpack.c.b16 %v2223, %v2222
        %2233 = vrot.lane.b32.xlu0 %v2200, 1
        %v2234 = vpop.permute.xlu0 %2233
        %2235 = vrot.lane.b32.xlu0 %v2201, 1
        %v2236 = vpop.permute.xlu0 %2235
        %2237 = vrot.lane.b32.xlu0 %v2202, 1
        %v2238 = vpop.permute.xlu0 %2237
        %2239 = vrot.lane.b32.xlu0 %v2203, 1
        %v2240 = vpop.permute.xlu0 %2239
        %2241 = vrot.lane.b32.xlu0 %v2204, 1
        %v2242 = vpop.permute.xlu0 %2241
        %2243 = vrot.lane.b32.xlu0 %v2205, 1
        %v2244 = vpop.permute.xlu0 %2243
        %2245 = vrot.lane.b32.xlu0 %v2206, 1
        %v2246 = vpop.permute.xlu0 %2245
        %2247 = vrot.lane.b32.xlu0 %v2207, 1
        %v2248 = vpop.permute.xlu0 %2247
        %vm2249 = vcmask 7168
        %v2250 = vsel %vm2249, %v2234, %v2236
        %v2251 = vsel %vm2249, %v2238, %v2240
        %v2252 = vsel %vm2249, %v2242, %v2244
        %v2253 = vsel %vm2249, %v2246, %v2248
        %vm2258 = vcmask 523264
        %v2260 = vsel %vm2258, %v2224, 0
        %2262 = vmatpush.bf16.msra.mxu0 0
        %2263 = vmatpush.bf16.msra.mxu0 0
        %2264 = vmatpush.bf16.msra.mxu0 0
        %2265 = vmatpush.bf16.msra.mxu0 0
        %2266 = vmatpush.bf16.msra.mxu0 %v2253
        %2267 = vmatpush.bf16.msra.mxu0 %v2252
        %2268 = vmatpush.bf16.msra.mxu0 %v2251
        %2269 = vmatpush.bf16.msra.mxu0 %v2250
        %2270 = vmatmul.bf16.gmra.mxu0 %v2260
        %v2271 = vpop.f32.mrf.mxu0
        %v2272 = vadd.f32 %v2213, %v2271
        %v2273 = vpop.f32.mrf.mxu0
        %v2274 = vadd.f32 %v2218, %v2273
        %2275 = vdwg.mxu0
        %v2276 = vadd.f32 %v1003, %v2272
        %v2277 = vadd.f32 %v1004, %v2274
        %s2278 = scalar_lea.vmem %s7, 32
        %v2279 = vld [vmem:[%s2278] sm:$0xf]
        %v2280 = vld [vmem:[%s2278 + $0x4] sm:$0xf]
        %v2281 = vld [vmem:[%s2278 + $0x8] sm:$0xf]
        %v2282 = vld [vmem:[%s2278 + $0xc] sm:$0xf]
        %v2283 = vld [vmem:[%s2278 + $0x10] sm:$0xf]
        %v2284 = vld [vmem:[%s2278 + $0x14] sm:$0xf]
        %v2285 = vld [vmem:[%s2278 + $0x18] sm:$0xf]
        %v2286 = vld [vmem:[%s2278 + $0x1c] sm:$0xf]
        %v2287 = vpack.c.bf16 %v2277, %v2276
        %s2288 = scalar_lea.vmem %s8, 64
        %v2289 = vld [vmem:[%s2288] sm:$0xff]
        %v2290 = vld [vmem:[%s2288 + $0x8] sm:$0xff]
        %v2291 = vld [vmem:[%s2288 + $0x10] sm:$0xff]
        %v2292 = vld [vmem:[%s2288 + $0x18] sm:$0xff]
        %v2293 = vld [vmem:[%s2288 + $0x20] sm:$0xff]
        %v2294 = vld [vmem:[%s2288 + $0x28] sm:$0xff]
        %v2295 = vld [vmem:[%s2288 + $0x30] sm:$0xff]
        %v2296 = vld [vmem:[%s2288 + $0x38] sm:$0xff]
        %2298 = vset.pattern.permute.xlu0 0
        %2299 = vperm.xlu0 %2298, %v2289
        %v2300 = vpop.permute.xlu0 %2299
        %2303 = vset.pattern.permute.xlu0 0
        %2304 = vperm.xlu0 %2303, %v2290
        %v2305 = vpop.permute.xlu0 %2304
        %2308 = vset.pattern.permute.xlu0 0
        %2309 = vperm.xlu0 %2308, %v2291
        %v2310 = vpop.permute.xlu0 %2309
        %2313 = vset.pattern.permute.xlu0 0
        %2314 = vperm.xlu0 %2313, %v2292
        %v2315 = vpop.permute.xlu0 %2314
        %2318 = vset.pattern.permute.xlu0 0
        %2319 = vperm.xlu0 %2318, %v2293
        %v2320 = vpop.permute.xlu0 %2319
        %2323 = vset.pattern.permute.xlu0 0
        %2324 = vperm.xlu0 %2323, %v2294
        %v2325 = vpop.permute.xlu0 %2324
        %2328 = vset.pattern.permute.xlu0 0
        %2329 = vperm.xlu0 %2328, %v2295
        %v2330 = vpop.permute.xlu0 %2329
        %2333 = vset.pattern.permute.xlu0 0
        %2334 = vperm.xlu0 %2333, %v2296
        %v2335 = vpop.permute.xlu0 %2334
        %v2345 = vunpack.c.l.b16 %v2279
        %v2346 = vunpack.c.l.b16 %v2280
        %v2347 = vunpack.c.l.b16 %v2281
        %v2348 = vunpack.c.l.b16 %v2282
        %v2349 = vunpack.c.l.b16 %v2283
        %v2350 = vunpack.c.l.b16 %v2284
        %v2351 = vunpack.c.l.b16 %v2285
        %v2352 = vunpack.c.l.b16 %v2286
        %v2353 = vpack.c.b16 %v2346, %v2345
        %v2354 = vpack.c.b16 %v2348, %v2347
        %v2355 = vpack.c.b16 %v2350, %v2349
        %v2356 = vpack.c.b16 %v2352, %v2351
        %v2358 = vsel %vm662, %v2353, 0
        %v2361 = vsel %vm662, %v2354, 0
        %v2364 = vsel %vm662, %v2355, 0
        %v2367 = vsel %vm662, %v2356, 0
        %2369 = vmatpush.bf16.msra.mxu0 0
        %2370 = vmatpush.bf16.msra.mxu0 0
        %2371 = vmatpush.bf16.msra.mxu0 0
        %2372 = vmatpush.bf16.msra.mxu0 0
        %2373 = vmatpush.bf16.msra.mxu0 0
        %2374 = vmatpush.bf16.msra.mxu0 0
        %2375 = vmatpush.bf16.msra.mxu0 0
        %2376 = vmatpush.bf16.msra.mxu0 %v2287
        %2377 = vmatmul.bf16.gmra.mxu0 %v2358
        %v2378 = vpop.f32.mrf.mxu0
        %v2379 = vadd.f32 %v2300, %v2378
        %v2380 = vpop.f32.mrf.mxu0
        %v2381 = vadd.f32 %v2305, %v2380
        %2382 = vmatmul.bf16.gmra.mxu0 %v2361
        %v2383 = vpop.f32.mrf.mxu0
        %v2384 = vadd.f32 %v2310, %v2383
        %v2385 = vpop.f32.mrf.mxu0
        %v2386 = vadd.f32 %v2315, %v2385
        %2387 = vmatmul.bf16.gmra.mxu0 %v2364
        %v2388 = vpop.f32.mrf.mxu0
        %v2389 = vadd.f32 %v2320, %v2388
        %v2390 = vpop.f32.mrf.mxu0
        %v2391 = vadd.f32 %v2325, %v2390
        %2392 = vmatmul.bf16.gmra.mxu0 %v2367
        %v2393 = vpop.f32.mrf.mxu0
        %v2394 = vadd.f32 %v2330, %v2393
        %v2395 = vpop.f32.mrf.mxu0
        %v2396 = vadd.f32 %v2335, %v2395
        %2397 = vdwg.mxu0
        %s2398 = sld [smem:[#allocation4 + $0x2]]
        %vm2399 = vcmp.ge.f32.partialorder %v2379, 0.0
        %vm2400 = vcmp.ge.f32.partialorder %v2381, 0.0
        %vm2401 = vcmp.ge.f32.partialorder %v2384, 0.0
        %vm2402 = vcmp.ge.f32.partialorder %v2386, 0.0
        %vm2403 = vcmp.ge.f32.partialorder %v2389, 0.0
        %vm2404 = vcmp.ge.f32.partialorder %v2391, 0.0
        %vm2405 = vcmp.ge.f32.partialorder %v2394, 0.0
        %vm2406 = vcmp.ge.f32.partialorder %v2396, 0.0
        %v2407 = vstv %s2398
        %v2408 = vmul.f32 %v2407, %v2379
        %v2409 = vmul.f32 %v2407, %v2381
        %v2410 = vmul.f32 %v2407, %v2384
        %v2411 = vmul.f32 %v2407, %v2386
        %v2412 = vmul.f32 %v2407, %v2389
        %v2413 = vmul.f32 %v2407, %v2391
        %v2414 = vmul.f32 %v2407, %v2394
        %v2415 = vmul.f32 %v2407, %v2396
        %v2416 = vsel %vm2399, %v2379, %v2408
        %v2417 = vsel %vm2400, %v2381, %v2409
        %v2418 = vsel %vm2401, %v2384, %v2410
        %v2419 = vsel %vm2402, %v2386, %v2411
        %v2420 = vsel %vm2403, %v2389, %v2412
        %v2421 = vsel %vm2404, %v2391, %v2413
        %v2422 = vsel %vm2405, %v2394, %v2414
        %v2423 = vsel %vm2406, %v2396, %v2415
        %s2424 = scalar_lea.vmem %s9, 64
        %v2425 = vld [vmem:[%s2424] sm:$0xff]
        %v2426 = vld [vmem:[%s2424 + $0x8] sm:$0xff]
        %v2427 = vld [vmem:[%s2424 + $0x10] sm:$0xff]
        %v2428 = vld [vmem:[%s2424 + $0x18] sm:$0xff]
        %v2429 = vld [vmem:[%s2424 + $0x20] sm:$0xff]
        %v2430 = vld [vmem:[%s2424 + $0x28] sm:$0xff]
        %v2431 = vld [vmem:[%s2424 + $0x30] sm:$0xff]
        %v2432 = vld [vmem:[%s2424 + $0x38] sm:$0xff]
        %s2433 = scalar_lea.vmem %s10, 64
        %v2434 = vld [vmem:[%s2433] sm:$0xff]
        %v2435 = vld [vmem:[%s2433 + $0x8] sm:$0xff]
        %v2436 = vld [vmem:[%s2433 + $0x10] sm:$0xff]
        %v2437 = vld [vmem:[%s2433 + $0x18] sm:$0xff]
        %v2438 = vld [vmem:[%s2433 + $0x20] sm:$0xff]
        %v2439 = vld [vmem:[%s2433 + $0x28] sm:$0xff]
        %v2440 = vld [vmem:[%s2433 + $0x30] sm:$0xff]
        %v2441 = vld [vmem:[%s2433 + $0x38] sm:$0xff]
        %v2442 = vsel %vm696, %v2416, 0.0
        %v2443 = vsel %vm696, %v2417, 0.0
        %v2444 = vadd.f32 %v2442, %v2443
        %v2445 = vsel %vm696, %v2418, 0.0
        %v2446 = vadd.f32 %v2444, %v2445
        %v2447 = vsel %vm696, %v2419, 0.0
        %v2448 = vadd.f32 %v2446, %v2447
        %v2449 = vsel %vm696, %v2420, 0.0
        %v2450 = vadd.f32 %v2448, %v2449
        %v2451 = vsel %vm696, %v2421, 0.0
        %v2452 = vadd.f32 %v2450, %v2451
        %v2453 = vsel %vm696, %v2422, 0.0
        %v2454 = vadd.f32 %v2452, %v2453
        %v2455 = vsel %vm696, %v2423, 0.0
        %v2456 = vadd.f32 %v2454, %v2455
        %2457 = vadd.xlane.f32.xlu0 %v2456
        %v2458 = vpop.xlane.xlu0 %2457
        %v2459 = vrot.slane %v2458, 4
        %v2460 = vadd.f32 %v2458, %v2459
        %v2461 = vrot.slane %v2460, 2
        %v2462 = vadd.f32 %v2460, %v2461
        %v2463 = vrot.slane %v2462, 1
        %v2464 = vadd.f32 %v2462, %v2463
        %s2465 = vtos %v2464
        %v2466 = vrcp.pop 768.0
        %v2467 = vmul.f32 768.0, %v2466
        %v2468 = vsub.f32 1.0, %v2467
        %v2469 = vmul.f32 %v2466, %v2468
        %v2470 = vadd.f32 %v2466, %v2469
        %vm2471 = vweird.f32 %v2466
        %v2472 = vsel %vm2471, %v2466, %v2470
        %s2473 = vtos %v2472
        %s2474 = smul.f32 %s2465, %s2473
        %v2475 = vstv %s2474
        %v2476 = vsub.f32 %v2416, %v2475
        %v2477 = vsub.f32 %v2417, %v2475
        %v2478 = vsub.f32 %v2418, %v2475
        %v2479 = vsub.f32 %v2419, %v2475
        %v2480 = vsub.f32 %v2420, %v2475
        %v2481 = vsub.f32 %v2421, %v2475
        %v2482 = vsub.f32 %v2422, %v2475
        %v2483 = vsub.f32 %v2423, %v2475
        %v2484 = vmul.f32 %v2476, %v2476
        %v2485 = vmul.f32 %v2477, %v2477
        %v2486 = vmul.f32 %v2478, %v2478
        %v2487 = vmul.f32 %v2479, %v2479
        %v2488 = vmul.f32 %v2480, %v2480
        %v2489 = vmul.f32 %v2481, %v2481
        %v2490 = vmul.f32 %v2482, %v2482
        %v2491 = vmul.f32 %v2483, %v2483
        %v2492 = vsel %vm696, %v2484, 0.0
        %v2493 = vsel %vm696, %v2485, 0.0
        %v2494 = vadd.f32 %v2492, %v2493
        %v2495 = vsel %vm696, %v2486, 0.0
        %v2496 = vadd.f32 %v2494, %v2495
        %v2497 = vsel %vm696, %v2487, 0.0
        %v2498 = vadd.f32 %v2496, %v2497
        %v2499 = vsel %vm696, %v2488, 0.0
        %v2500 = vadd.f32 %v2498, %v2499
        %v2501 = vsel %vm696, %v2489, 0.0
        %v2502 = vadd.f32 %v2500, %v2501
        %v2503 = vsel %vm696, %v2490, 0.0
        %v2504 = vadd.f32 %v2502, %v2503
        %v2505 = vsel %vm696, %v2491, 0.0
        %v2506 = vadd.f32 %v2504, %v2505
        %2507 = vadd.xlane.f32.xlu0 %v2506
        %v2508 = vpop.xlane.xlu0 %2507
        %v2509 = vrot.slane %v2508, 4
        %v2510 = vadd.f32 %v2508, %v2509
        %v2511 = vrot.slane %v2510, 2
        %v2512 = vadd.f32 %v2510, %v2511
        %v2513 = vrot.slane %v2512, 1
        %v2514 = vadd.f32 %v2512, %v2513
        %s2515 = vtos %v2514
        %v2516 = vrcp.pop 768.0
        %v2517 = vmul.f32 768.0, %v2516
        %v2518 = vsub.f32 1.0, %v2517
        %v2519 = vmul.f32 %v2516, %v2518
        %v2520 = vadd.f32 %v2516, %v2519
        %vm2521 = vweird.f32 %v2516
        %v2522 = vsel %vm2521, %v2516, %v2520
        %s2523 = vtos %v2522
        %s2524 = smul.f32 %s2515, %s2523
        %2526 = vset.pattern.permute.xlu0 0
        %2527 = vperm.xlu0 %2526, %v2425
        %v2528 = vpop.permute.xlu0 %2527
        %2531 = vset.pattern.permute.xlu0 0
        %2532 = vperm.xlu0 %2531, %v2426
        %v2533 = vpop.permute.xlu0 %2532
        %2536 = vset.pattern.permute.xlu0 0
        %2537 = vperm.xlu0 %2536, %v2427
        %v2538 = vpop.permute.xlu0 %2537
        %2541 = vset.pattern.permute.xlu0 0
        %2542 = vperm.xlu0 %2541, %v2428
        %v2543 = vpop.permute.xlu0 %2542
        %2546 = vset.pattern.permute.xlu0 0
        %2547 = vperm.xlu0 %2546, %v2429
        %v2548 = vpop.permute.xlu0 %2547
        %2551 = vset.pattern.permute.xlu0 0
        %2552 = vperm.xlu0 %2551, %v2430
        %v2553 = vpop.permute.xlu0 %2552
        %2556 = vset.pattern.permute.xlu0 0
        %2557 = vperm.xlu0 %2556, %v2431
        %v2558 = vpop.permute.xlu0 %2557
        %2561 = vset.pattern.permute.xlu0 0
        %2562 = vperm.xlu0 %2561, %v2432
        %v2563 = vpop.permute.xlu0 %2562
        %v2565 = vmul.f32 %v2528, %v2476
        %v2566 = vmul.f32 %v2533, %v2477
        %v2567 = vmul.f32 %v2538, %v2478
        %v2568 = vmul.f32 %v2543, %v2479
        %v2569 = vmul.f32 %v2548, %v2480
        %v2570 = vmul.f32 %v2553, %v2481
        %v2571 = vmul.f32 %v2558, %v2482
        %v2572 = vmul.f32 %v2563, %v2483
        %s2573 = sadd.f32 %s2524, 1e-08
        %v2574 = vstv %s2573
        %v2575 = vrsqrt.pop %v2574
        %v2576 = vmul.f32 %v2575, %v2574
        %v2577 = vmul.f32 %v2576, %v2575
        %v2578 = vmul.f32 0.5, %v2577
        %v2579 = vsub.f32 1.5, %v2578
        %v2580 = vmul.f32 %v2575, %v2579
        %vm2581 = vweird.f32 %v2574
        %vm2582 = vweird.f32 %v2575
        %vm2583 = vmor %vm2581, %vm2582
        %v2584 = vsel %vm2583, %v2575, %v2580
        %s2585 = vtos %v2584
        %v2586 = vstv %s2585
        %v2587 = vmul.f32 %v2565, %v2586
        %v2588 = vmul.f32 %v2566, %v2586
        %v2589 = vmul.f32 %v2567, %v2586
        %v2590 = vmul.f32 %v2568, %v2586
        %v2591 = vmul.f32 %v2569, %v2586
        %v2592 = vmul.f32 %v2570, %v2586
        %v2593 = vmul.f32 %v2571, %v2586
        %v2594 = vmul.f32 %v2572, %v2586
        %2596 = vset.pattern.permute.xlu0 0
        %2597 = vperm.xlu0 %2596, %v2434
        %v2598 = vpop.permute.xlu0 %2597
        %2601 = vset.pattern.permute.xlu0 0
        %2602 = vperm.xlu0 %2601, %v2435
        %v2603 = vpop.permute.xlu0 %2602
        %2606 = vset.pattern.permute.xlu0 0
        %2607 = vperm.xlu0 %2606, %v2436
        %v2608 = vpop.permute.xlu0 %2607
        %2611 = vset.pattern.permute.xlu0 0
        %2612 = vperm.xlu0 %2611, %v2437
        %v2613 = vpop.permute.xlu0 %2612
        %2616 = vset.pattern.permute.xlu0 0
        %2617 = vperm.xlu0 %2616, %v2438
        %v2618 = vpop.permute.xlu0 %2617
        %2621 = vset.pattern.permute.xlu0 0
        %2622 = vperm.xlu0 %2621, %v2439
        %v2623 = vpop.permute.xlu0 %2622
        %2626 = vset.pattern.permute.xlu0 0
        %2627 = vperm.xlu0 %2626, %v2440
        %v2628 = vpop.permute.xlu0 %2627
        %2631 = vset.pattern.permute.xlu0 0
        %2632 = vperm.xlu0 %2631, %v2441
        %v2633 = vpop.permute.xlu0 %2632
        %v2635 = vadd.f32 %v2587, %v2598
        %v2636 = vadd.f32 %v2588, %v2603
        %v2637 = vadd.f32 %v2589, %v2608
        %v2638 = vadd.f32 %v2590, %v2613
        %v2639 = vadd.f32 %v2591, %v2618
        %v2640 = vadd.f32 %v2592, %v2623
        %v2641 = vadd.f32 %v2593, %v2628
        %v2642 = vadd.f32 %v2594, %v2633
        %2643 = vst.msk [vmem:[#allocation3 + $0x8] sm:$0xff] %vm696, %v2635
        %2644 = vst.msk [vmem:[#allocation3 + $0x18] sm:$0xff] %vm696, %v2636
        %2645 = vst.msk [vmem:[#allocation3 + $0x28] sm:$0xff] %vm696, %v2637
        %2646 = vst.msk [vmem:[#allocation3 + $0x38] sm:$0xff] %vm696, %v2638
        %2647 = vst.msk [vmem:[#allocation3 + $0x48] sm:$0xff] %vm696, %v2639
        %2648 = vst.msk [vmem:[#allocation3 + $0x58] sm:$0xff] %vm696, %v2640
        %2649 = vst.msk [vmem:[#allocation3 + $0x68] sm:$0xff] %vm696, %v2641
        %2650 = vst.msk [vmem:[#allocation3 + $0x78] sm:$0xff] %vm696, %v2642
        %s2651 = scalar_lea.vmem %s11, 192
        %v2652 = vld [vmem:[%s2651] sm:$0xff]
        %v2653 = vld [vmem:[%s2651 + $0x8] sm:$0xff]
        %v2654 = vld [vmem:[%s2651 + $0x10] sm:$0xff]
        %v2655 = vld [vmem:[%s2651 + $0x18] sm:$0xff]
        %v2656 = vld [vmem:[%s2651 + $0x20] sm:$0xff]
        %v2657 = vld [vmem:[%s2651 + $0x28] sm:$0xff]
        %v2658 = vld [vmem:[%s2651 + $0x30] sm:$0xff]
        %v2659 = vld [vmem:[%s2651 + $0x38] sm:$0xff]
        %v2660 = vld [vmem:[#allocation3] sm:$0xff]
        %v2661 = vld [vmem:[#allocation3 + $0x8] sm:$0xff]
        %v2662 = vld [vmem:[#allocation3 + $0x10] sm:$0xff]
        %v2663 = vld [vmem:[#allocation3 + $0x18] sm:$0xff]
        %v2664 = vld [vmem:[#allocation3 + $0x20] sm:$0xff]
        %v2665 = vld [vmem:[#allocation3 + $0x28] sm:$0xff]
        %v2666 = vld [vmem:[#allocation3 + $0x30] sm:$0xff]
        %v2667 = vld [vmem:[#allocation3 + $0x38] sm:$0xff]
        %v2668 = vld [vmem:[#allocation3 + $0x40] sm:$0xff]
        %v2669 = vld [vmem:[#allocation3 + $0x48] sm:$0xff]
        %v2670 = vld [vmem:[#allocation3 + $0x50] sm:$0xff]
        %v2671 = vld [vmem:[#allocation3 + $0x58] sm:$0xff]
        %v2672 = vld [vmem:[#allocation3 + $0x60] sm:$0xff]
        %v2673 = vld [vmem:[#allocation3 + $0x68] sm:$0xff]
        %v2674 = vld [vmem:[#allocation3 + $0x70] sm:$0xff]
        %v2675 = vld [vmem:[#allocation3 + $0x78] sm:$0xff]
        %2677 = vset.pattern.permute.xlu0 0
        %2678 = vperm.xlu0 %2677, %v2652
        %v2679 = vpop.permute.xlu0 %2678
        %2682 = vset.pattern.permute.xlu0 0
        %2683 = vperm.xlu0 %2682, %v2653
        %v2684 = vpop.permute.xlu0 %2683
        %2687 = vset.pattern.permute.xlu0 0
        %2688 = vperm.xlu0 %2687, %v2654
        %v2689 = vpop.permute.xlu0 %2688
        %2692 = vset.pattern.permute.xlu0 0
        %2693 = vperm.xlu0 %2692, %v2655
        %v2694 = vpop.permute.xlu0 %2693
        %2697 = vset.pattern.permute.xlu0 0
        %2698 = vperm.xlu0 %2697, %v2656
        %v2699 = vpop.permute.xlu0 %2698
        %2702 = vset.pattern.permute.xlu0 0
        %2703 = vperm.xlu0 %2702, %v2657
        %v2704 = vpop.permute.xlu0 %2703
        %2707 = vset.pattern.permute.xlu0 0
        %2708 = vperm.xlu0 %2707, %v2658
        %v2709 = vpop.permute.xlu0 %2708
        %2712 = vset.pattern.permute.xlu0 0
        %2713 = vperm.xlu0 %2712, %v2659
        %v2714 = vpop.permute.xlu0 %2713
        %v2716 = vmul.f32 %v2679, %v2660
        %v2717 = vmul.f32 %v2679, %v2661
        %v2718 = vmul.f32 %v2684, %v2662
        %v2719 = vmul.f32 %v2684, %v2663
        %v2720 = vmul.f32 %v2689, %v2664
        %v2721 = vmul.f32 %v2689, %v2665
        %v2722 = vmul.f32 %v2694, %v2666
        %v2723 = vmul.f32 %v2694, %v2667
        %v2724 = vmul.f32 %v2699, %v2668
        %v2725 = vmul.f32 %v2699, %v2669
        %v2726 = vmul.f32 %v2704, %v2670
        %v2727 = vmul.f32 %v2704, %v2671
        %v2728 = vmul.f32 %v2709, %v2672
        %v2729 = vmul.f32 %v2709, %v2673
        %v2730 = vmul.f32 %v2714, %v2674
        %v2731 = vmul.f32 %v2714, %v2675
        %v2732 = vadd.f32 %v2716, 0.0
        %v2733 = vadd.f32 %v2717, 0.0
        %v2734 = vadd.f32 %v2718, 0.0
        %v2735 = vadd.f32 %v2719, 0.0
        %v2736 = vadd.f32 %v2720, 0.0
        %v2737 = vadd.f32 %v2721, 0.0
        %v2738 = vadd.f32 %v2722, 0.0
        %v2739 = vadd.f32 %v2723, 0.0
        %v2740 = vadd.f32 %v2724, 0.0
        %v2741 = vadd.f32 %v2725, 0.0
        %v2742 = vadd.f32 %v2726, 0.0
        %v2743 = vadd.f32 %v2727, 0.0
        %v2744 = vadd.f32 %v2728, 0.0
        %v2745 = vadd.f32 %v2729, 0.0
        %v2746 = vadd.f32 %v2730, 0.0
        %v2747 = vadd.f32 %v2731, 0.0
        %s2748 = scalar_lea.vmem %s11, 256
        %v2749 = vld [vmem:[%s2748] sm:$0xff]
        %v2750 = vld [vmem:[%s2748 + $0x8] sm:$0xff]
        %v2751 = vld [vmem:[%s2748 + $0x10] sm:$0xff]
        %v2752 = vld [vmem:[%s2748 + $0x18] sm:$0xff]
        %v2753 = vld [vmem:[%s2748 + $0x20] sm:$0xff]
        %v2754 = vld [vmem:[%s2748 + $0x28] sm:$0xff]
        %v2755 = vld [vmem:[%s2748 + $0x30] sm:$0xff]
        %v2756 = vld [vmem:[%s2748 + $0x38] sm:$0xff]
        %2758 = vset.pattern.permute.xlu0 0
        %2759 = vperm.xlu0 %2758, %v2749
        %v2760 = vpop.permute.xlu0 %2759
        %2763 = vset.pattern.permute.xlu0 0
        %2764 = vperm.xlu0 %2763, %v2750
        %v2765 = vpop.permute.xlu0 %2764
        %2768 = vset.pattern.permute.xlu0 0
        %2769 = vperm.xlu0 %2768, %v2751
        %v2770 = vpop.permute.xlu0 %2769
        %2773 = vset.pattern.permute.xlu0 0
        %2774 = vperm.xlu0 %2773, %v2752
        %v2775 = vpop.permute.xlu0 %2774
        %2778 = vset.pattern.permute.xlu0 0
        %2779 = vperm.xlu0 %2778, %v2753
        %v2780 = vpop.permute.xlu0 %2779
        %2783 = vset.pattern.permute.xlu0 0
        %2784 = vperm.xlu0 %2783, %v2754
        %v2785 = vpop.permute.xlu0 %2784
        %2788 = vset.pattern.permute.xlu0 0
        %2789 = vperm.xlu0 %2788, %v2755
        %v2790 = vpop.permute.xlu0 %2789
        %2793 = vset.pattern.permute.xlu0 0
        %2794 = vperm.xlu0 %2793, %v2756
        %v2795 = vpop.permute.xlu0 %2794
        %v2797 = vmul.f32 %v2760, %v2661
        %v2798 = vmul.f32 %v2765, %v2663
        %v2799 = vmul.f32 %v2770, %v2665
        %v2800 = vmul.f32 %v2775, %v2667
        %v2801 = vmul.f32 %v2780, %v2669
        %v2802 = vmul.f32 %v2785, %v2671
        %v2803 = vmul.f32 %v2790, %v2673
        %v2804 = vmul.f32 %v2795, %v2675
        %2813 = vrot.lane.b32.xlu0 %v2797, 126
        %v2814 = vpop.permute.xlu0 %2813
        %2815 = vrot.lane.b32.xlu0 %v2798, 126
        %v2816 = vpop.permute.xlu0 %2815
        %2817 = vrot.lane.b32.xlu0 %v2799, 126
        %v2818 = vpop.permute.xlu0 %2817
        %2819 = vrot.lane.b32.xlu0 %v2800, 126
        %v2820 = vpop.permute.xlu0 %2819
        %2821 = vrot.lane.b32.xlu0 %v2801, 126
        %v2822 = vpop.permute.xlu0 %2821
        %2823 = vrot.lane.b32.xlu0 %v2802, 126
        %v2824 = vpop.permute.xlu0 %2823
        %2825 = vrot.lane.b32.xlu0 %v2803, 126
        %v2826 = vpop.permute.xlu0 %2825
        %2827 = vrot.lane.b32.xlu0 %v2804, 126
        %v2828 = vpop.permute.xlu0 %2827
        %v2837 = vadd.f32 %v2732, %v2814
        %v2838 = vadd.f32 %v2733, %v2814
        %v2839 = vadd.f32 %v2734, %v2816
        %v2840 = vadd.f32 %v2735, %v2816
        %v2841 = vadd.f32 %v2736, %v2818
        %v2842 = vadd.f32 %v2737, %v2818
        %v2843 = vadd.f32 %v2738, %v2820
        %v2844 = vadd.f32 %v2739, %v2820
        %v2845 = vadd.f32 %v2740, %v2822
        %v2846 = vadd.f32 %v2741, %v2822
        %v2847 = vadd.f32 %v2742, %v2824
        %v2848 = vadd.f32 %v2743, %v2824
        %v2849 = vadd.f32 %v2744, %v2826
        %v2850 = vadd.f32 %v2745, %v2826
        %v2851 = vadd.f32 %v2746, %v2828
        %v2852 = vadd.f32 %v2747, %v2828
        %s2853 = scalar_lea.vmem %s11, 320
        %v2854 = vld [vmem:[%s2853] sm:$0xff]
        %v2855 = vld [vmem:[%s2853 + $0x8] sm:$0xff]
        %v2856 = vld [vmem:[%s2853 + $0x10] sm:$0xff]
        %v2857 = vld [vmem:[%s2853 + $0x18] sm:$0xff]
        %v2858 = vld [vmem:[%s2853 + $0x20] sm:$0xff]
        %v2859 = vld [vmem:[%s2853 + $0x28] sm:$0xff]
        %v2860 = vld [vmem:[%s2853 + $0x30] sm:$0xff]
        %v2861 = vld [vmem:[%s2853 + $0x38] sm:$0xff]
        %2863 = vset.pattern.permute.xlu0 0
        %2864 = vperm.xlu0 %2863, %v2854
        %v2865 = vpop.permute.xlu0 %2864
        %2868 = vset.pattern.permute.xlu0 0
        %2869 = vperm.xlu0 %2868, %v2855
        %v2870 = vpop.permute.xlu0 %2869
        %2873 = vset.pattern.permute.xlu0 0
        %2874 = vperm.xlu0 %2873, %v2856
        %v2875 = vpop.permute.xlu0 %2874
        %2878 = vset.pattern.permute.xlu0 0
        %2879 = vperm.xlu0 %2878, %v2857
        %v2880 = vpop.permute.xlu0 %2879
        %2883 = vset.pattern.permute.xlu0 0
        %2884 = vperm.xlu0 %2883, %v2858
        %v2885 = vpop.permute.xlu0 %2884
        %2888 = vset.pattern.permute.xlu0 0
        %2889 = vperm.xlu0 %2888, %v2859
        %v2890 = vpop.permute.xlu0 %2889
        %2893 = vset.pattern.permute.xlu0 0
        %2894 = vperm.xlu0 %2893, %v2860
        %v2895 = vpop.permute.xlu0 %2894
        %2898 = vset.pattern.permute.xlu0 0
        %2899 = vperm.xlu0 %2898, %v2861
        %v2900 = vpop.permute.xlu0 %2899
        %v2902 = vmul.f32 %v2865, %v2661
        %v2903 = vmul.f32 %v2870, %v2663
        %v2904 = vmul.f32 %v2875, %v2665
        %v2905 = vmul.f32 %v2880, %v2667
        %v2906 = vmul.f32 %v2885, %v2669
        %v2907 = vmul.f32 %v2890, %v2671
        %v2908 = vmul.f32 %v2895, %v2673
        %v2909 = vmul.f32 %v2900, %v2675
        %2918 = vrot.lane.b32.xlu0 %v2902, 124
        %v2919 = vpop.permute.xlu0 %2918
        %2920 = vrot.lane.b32.xlu0 %v2903, 124
        %v2921 = vpop.permute.xlu0 %2920
        %2922 = vrot.lane.b32.xlu0 %v2904, 124
        %v2923 = vpop.permute.xlu0 %2922
        %2924 = vrot.lane.b32.xlu0 %v2905, 124
        %v2925 = vpop.permute.xlu0 %2924
        %2926 = vrot.lane.b32.xlu0 %v2906, 124
        %v2927 = vpop.permute.xlu0 %2926
        %2928 = vrot.lane.b32.xlu0 %v2907, 124
        %v2929 = vpop.permute.xlu0 %2928
        %2930 = vrot.lane.b32.xlu0 %v2908, 124
        %v2931 = vpop.permute.xlu0 %2930
        %2932 = vrot.lane.b32.xlu0 %v2909, 124
        %v2933 = vpop.permute.xlu0 %2932
        %v2942 = vadd.f32 %v2837, %v2919
        %v2943 = vadd.f32 %v2838, %v2919
        %v2944 = vadd.f32 %v2839, %v2921
        %v2945 = vadd.f32 %v2840, %v2921
        %v2946 = vadd.f32 %v2841, %v2923
        %v2947 = vadd.f32 %v2842, %v2923
        %v2948 = vadd.f32 %v2843, %v2925
        %v2949 = vadd.f32 %v2844, %v2925
        %v2950 = vadd.f32 %v2845, %v2927
        %v2951 = vadd.f32 %v2846, %v2927
        %v2952 = vadd.f32 %v2847, %v2929
        %v2953 = vadd.f32 %v2848, %v2929
        %v2954 = vadd.f32 %v2849, %v2931
        %v2955 = vadd.f32 %v2850, %v2931
        %v2956 = vadd.f32 %v2851, %v2933
        %v2957 = vadd.f32 %v2852, %v2933
        %s2958 = scalar_lea.vmem %s12, 64
        %v2959 = vld [vmem:[%s2958] sm:$0xff]
        %v2960 = vld [vmem:[%s2958 + $0x8] sm:$0xff]
        %v2961 = vld [vmem:[%s2958 + $0x10] sm:$0xff]
        %v2962 = vld [vmem:[%s2958 + $0x18] sm:$0xff]
        %v2963 = vld [vmem:[%s2958 + $0x20] sm:$0xff]
        %v2964 = vld [vmem:[%s2958 + $0x28] sm:$0xff]
        %v2965 = vld [vmem:[%s2958 + $0x30] sm:$0xff]
        %v2966 = vld [vmem:[%s2958 + $0x38] sm:$0xff]
        %2968 = vset.pattern.permute.xlu0 0
        %2969 = vperm.xlu0 %2968, %v2959
        %v2970 = vpop.permute.xlu0 %2969
        %2973 = vset.pattern.permute.xlu0 0
        %2974 = vperm.xlu0 %2973, %v2960
        %v2975 = vpop.permute.xlu0 %2974
        %2978 = vset.pattern.permute.xlu0 0
        %2979 = vperm.xlu0 %2978, %v2961
        %v2980 = vpop.permute.xlu0 %2979
        %2983 = vset.pattern.permute.xlu0 0
        %2984 = vperm.xlu0 %2983, %v2962
        %v2985 = vpop.permute.xlu0 %2984
        %2988 = vset.pattern.permute.xlu0 0
        %2989 = vperm.xlu0 %2988, %v2963
        %v2990 = vpop.permute.xlu0 %2989
        %2993 = vset.pattern.permute.xlu0 0
        %2994 = vperm.xlu0 %2993, %v2964
        %v2995 = vpop.permute.xlu0 %2994
        %2998 = vset.pattern.permute.xlu0 0
        %2999 = vperm.xlu0 %2998, %v2965
        %v3000 = vpop.permute.xlu0 %2999
        %3003 = vset.pattern.permute.xlu0 0
        %3004 = vperm.xlu0 %3003, %v2966
        %v3005 = vpop.permute.xlu0 %3004
        %v3007 = vadd.f32 %v2942, %v2970
        %v3008 = vadd.f32 %v2943, %v2970
        %v3009 = vadd.f32 %v2944, %v2975
        %v3010 = vadd.f32 %v2945, %v2975
        %v3011 = vadd.f32 %v2946, %v2980
        %v3012 = vadd.f32 %v2947, %v2980
        %v3013 = vadd.f32 %v2948, %v2985
        %v3014 = vadd.f32 %v2949, %v2985
        %v3015 = vadd.f32 %v2950, %v2990
        %v3016 = vadd.f32 %v2951, %v2990
        %v3017 = vadd.f32 %v2952, %v2995
        %v3018 = vadd.f32 %v2953, %v2995
        %v3019 = vadd.f32 %v2954, %v3000
        %v3020 = vadd.f32 %v2955, %v3000
        %v3021 = vadd.f32 %v2956, %v3005
        %v3022 = vadd.f32 %v2957, %v3005
        %s3023 = sld [smem:[#allocation4 + $0x3]]
        %vm3024 = vcmp.ge.f32.partialorder %v3007, 0.0
        %vm3025 = vcmp.ge.f32.partialorder %v3008, 0.0
        %vm3026 = vcmp.ge.f32.partialorder %v3009, 0.0
        %vm3027 = vcmp.ge.f32.partialorder %v3010, 0.0
        %vm3028 = vcmp.ge.f32.partialorder %v3011, 0.0
        %vm3029 = vcmp.ge.f32.partialorder %v3012, 0.0
        %vm3030 = vcmp.ge.f32.partialorder %v3013, 0.0
        %vm3031 = vcmp.ge.f32.partialorder %v3014, 0.0
        %vm3032 = vcmp.ge.f32.partialorder %v3015, 0.0
        %vm3033 = vcmp.ge.f32.partialorder %v3016, 0.0
        %vm3034 = vcmp.ge.f32.partialorder %v3017, 0.0
        %vm3035 = vcmp.ge.f32.partialorder %v3018, 0.0
        %vm3036 = vcmp.ge.f32.partialorder %v3019, 0.0
        %vm3037 = vcmp.ge.f32.partialorder %v3020, 0.0
        %vm3038 = vcmp.ge.f32.partialorder %v3021, 0.0
        %vm3039 = vcmp.ge.f32.partialorder %v3022, 0.0
        %v3040 = vstv %s3023
        %v3041 = vmul.f32 %v3040, %v3007
        %v3042 = vmul.f32 %v3040, %v3008
        %v3043 = vmul.f32 %v3040, %v3009
        %v3044 = vmul.f32 %v3040, %v3010
        %v3045 = vmul.f32 %v3040, %v3011
        %v3046 = vmul.f32 %v3040, %v3012
        %v3047 = vmul.f32 %v3040, %v3013
        %v3048 = vmul.f32 %v3040, %v3014
        %v3049 = vmul.f32 %v3040, %v3015
        %v3050 = vmul.f32 %v3040, %v3016
        %v3051 = vmul.f32 %v3040, %v3017
        %v3052 = vmul.f32 %v3040, %v3018
        %v3053 = vmul.f32 %v3040, %v3019
        %v3054 = vmul.f32 %v3040, %v3020
        %v3055 = vmul.f32 %v3040, %v3021
        %v3056 = vmul.f32 %v3040, %v3022
        %v3057 = vsel %vm3024, %v3007, %v3041
        %v3058 = vsel %vm3025, %v3008, %v3042
        %v3059 = vsel %vm3026, %v3009, %v3043
        %v3060 = vsel %vm3027, %v3010, %v3044
        %v3061 = vsel %vm3028, %v3011, %v3045
        %v3062 = vsel %vm3029, %v3012, %v3046
        %v3063 = vsel %vm3030, %v3013, %v3047
        %v3064 = vsel %vm3031, %v3014, %v3048
        %v3065 = vsel %vm3032, %v3015, %v3049
        %v3066 = vsel %vm3033, %v3016, %v3050
        %v3067 = vsel %vm3034, %v3017, %v3051
        %v3068 = vsel %vm3035, %v3018, %v3052
        %v3069 = vsel %vm3036, %v3019, %v3053
        %v3070 = vsel %vm3037, %v3020, %v3054
        %v3071 = vsel %vm3038, %v3021, %v3055
        %v3072 = vsel %vm3039, %v3022, %v3056
        %s3073 = scalar_lea.vmem %s13, 64
        %v3074 = vld [vmem:[%s3073] sm:$0xff]
        %v3075 = vld [vmem:[%s3073 + $0x8] sm:$0xff]
        %v3076 = vld [vmem:[%s3073 + $0x10] sm:$0xff]
        %v3077 = vld [vmem:[%s3073 + $0x18] sm:$0xff]
        %v3078 = vld [vmem:[%s3073 + $0x20] sm:$0xff]
        %v3079 = vld [vmem:[%s3073 + $0x28] sm:$0xff]
        %v3080 = vld [vmem:[%s3073 + $0x30] sm:$0xff]
        %v3081 = vld [vmem:[%s3073 + $0x38] sm:$0xff]
        %s3082 = scalar_lea.vmem %s14, 64
        %v3083 = vld [vmem:[%s3082] sm:$0xff]
        %v3084 = vld [vmem:[%s3082 + $0x8] sm:$0xff]
        %v3085 = vld [vmem:[%s3082 + $0x10] sm:$0xff]
        %v3086 = vld [vmem:[%s3082 + $0x18] sm:$0xff]
        %v3087 = vld [vmem:[%s3082 + $0x20] sm:$0xff]
        %v3088 = vld [vmem:[%s3082 + $0x28] sm:$0xff]
        %v3089 = vld [vmem:[%s3082 + $0x30] sm:$0xff]
        %v3090 = vld [vmem:[%s3082 + $0x38] sm:$0xff]
        %3107 = vrot.lane.b32.xlu0 %v3057, 2
        %v3108 = vpop.permute.xlu0 %3107
        %3109 = vrot.lane.b32.xlu0 %v3058, 2
        %v3110 = vpop.permute.xlu0 %3109
        %3111 = vrot.lane.b32.xlu0 %v3059, 2
        %v3112 = vpop.permute.xlu0 %3111
        %3113 = vrot.lane.b32.xlu0 %v3060, 2
        %v3114 = vpop.permute.xlu0 %3113
        %3115 = vrot.lane.b32.xlu0 %v3061, 2
        %v3116 = vpop.permute.xlu0 %3115
        %3117 = vrot.lane.b32.xlu0 %v3062, 2
        %v3118 = vpop.permute.xlu0 %3117
        %3119 = vrot.lane.b32.xlu0 %v3063, 2
        %v3120 = vpop.permute.xlu0 %3119
        %3121 = vrot.lane.b32.xlu0 %v3064, 2
        %v3122 = vpop.permute.xlu0 %3121
        %3123 = vrot.lane.b32.xlu0 %v3065, 2
        %v3124 = vpop.permute.xlu0 %3123
        %3125 = vrot.lane.b32.xlu0 %v3066, 2
        %v3126 = vpop.permute.xlu0 %3125
        %3127 = vrot.lane.b32.xlu0 %v3067, 2
        %v3128 = vpop.permute.xlu0 %3127
        %3129 = vrot.lane.b32.xlu0 %v3068, 2
        %v3130 = vpop.permute.xlu0 %3129
        %3131 = vrot.lane.b32.xlu0 %v3069, 2
        %v3132 = vpop.permute.xlu0 %3131
        %3133 = vrot.lane.b32.xlu0 %v3070, 2
        %v3134 = vpop.permute.xlu0 %3133
        %3135 = vrot.lane.b32.xlu0 %v3071, 2
        %v3136 = vpop.permute.xlu0 %3135
        %3137 = vrot.lane.b32.xlu0 %v3072, 2
        %v3138 = vpop.permute.xlu0 %3137
        %vm3139 = vcmask 15360
        %v3140 = vsel %vm3139, %v3108, %v3110
        %v3141 = vsel %vm3139, %v3112, %v3114
        %v3142 = vsel %vm3139, %v3116, %v3118
        %v3143 = vsel %vm3139, %v3120, %v3122
        %v3144 = vsel %vm3139, %v3124, %v3126
        %v3145 = vsel %vm3139, %v3128, %v3130
        %v3146 = vsel %vm3139, %v3132, %v3134
        %v3147 = vsel %vm3139, %v3136, %v3138
        %v3156 = vsel %vm696, %v3140, 0.0
        %v3157 = vsel %vm696, %v3141, 0.0
        %v3158 = vadd.f32 %v3156, %v3157
        %v3159 = vsel %vm696, %v3142, 0.0
        %v3160 = vadd.f32 %v3158, %v3159
        %v3161 = vsel %vm696, %v3143, 0.0
        %v3162 = vadd.f32 %v3160, %v3161
        %v3163 = vsel %vm696, %v3144, 0.0
        %v3164 = vadd.f32 %v3162, %v3163
        %v3165 = vsel %vm696, %v3145, 0.0
        %v3166 = vadd.f32 %v3164, %v3165
        %v3167 = vsel %vm696, %v3146, 0.0
        %v3168 = vadd.f32 %v3166, %v3167
        %v3169 = vsel %vm696, %v3147, 0.0
        %v3170 = vadd.f32 %v3168, %v3169
        %3171 = vadd.xlane.f32.xlu0 %v3170
        %v3172 = vpop.xlane.xlu0 %3171
        %v3173 = vrot.slane %v3172, 4
        %v3174 = vadd.f32 %v3172, %v3173
        %v3175 = vrot.slane %v3174, 2
        %v3176 = vadd.f32 %v3174, %v3175
        %v3177 = vrot.slane %v3176, 1
        %v3178 = vadd.f32 %v3176, %v3177
        %s3179 = vtos %v3178
        %v3180 = vrcp.pop 768.0
        %v3181 = vmul.f32 768.0, %v3180
        %v3182 = vsub.f32 1.0, %v3181
        %v3183 = vmul.f32 %v3180, %v3182
        %v3184 = vadd.f32 %v3180, %v3183
        %vm3185 = vweird.f32 %v3180
        %v3186 = vsel %vm3185, %v3180, %v3184
        %s3187 = vtos %v3186
        %s3188 = smul.f32 %s3179, %s3187
        %v3189 = vstv %s3188
        %v3190 = vsub.f32 %v3057, %v3189
        %v3191 = vsub.f32 %v3058, %v3189
        %v3192 = vsub.f32 %v3059, %v3189
        %v3193 = vsub.f32 %v3060, %v3189
        %v3194 = vsub.f32 %v3061, %v3189
        %v3195 = vsub.f32 %v3062, %v3189
        %v3196 = vsub.f32 %v3063, %v3189
        %v3197 = vsub.f32 %v3064, %v3189
        %v3198 = vsub.f32 %v3065, %v3189
        %v3199 = vsub.f32 %v3066, %v3189
        %v3200 = vsub.f32 %v3067, %v3189
        %v3201 = vsub.f32 %v3068, %v3189
        %v3202 = vsub.f32 %v3069, %v3189
        %v3203 = vsub.f32 %v3070, %v3189
        %v3204 = vsub.f32 %v3071, %v3189
        %v3205 = vsub.f32 %v3072, %v3189
        %v3206 = vmul.f32 %v3190, %v3190
        %v3207 = vmul.f32 %v3191, %v3191
        %v3208 = vmul.f32 %v3192, %v3192
        %v3209 = vmul.f32 %v3193, %v3193
        %v3210 = vmul.f32 %v3194, %v3194
        %v3211 = vmul.f32 %v3195, %v3195
        %v3212 = vmul.f32 %v3196, %v3196
        %v3213 = vmul.f32 %v3197, %v3197
        %v3214 = vmul.f32 %v3198, %v3198
        %v3215 = vmul.f32 %v3199, %v3199
        %v3216 = vmul.f32 %v3200, %v3200
        %v3217 = vmul.f32 %v3201, %v3201
        %v3218 = vmul.f32 %v3202, %v3202
        %v3219 = vmul.f32 %v3203, %v3203
        %v3220 = vmul.f32 %v3204, %v3204
        %v3221 = vmul.f32 %v3205, %v3205
        %3238 = vrot.lane.b32.xlu0 %v3206, 2
        %v3239 = vpop.permute.xlu0 %3238
        %3240 = vrot.lane.b32.xlu0 %v3207, 2
        %v3241 = vpop.permute.xlu0 %3240
        %3242 = vrot.lane.b32.xlu0 %v3208, 2
        %v3243 = vpop.permute.xlu0 %3242
        %3244 = vrot.lane.b32.xlu0 %v3209, 2
        %v3245 = vpop.permute.xlu0 %3244
        %3246 = vrot.lane.b32.xlu0 %v3210, 2
        %v3247 = vpop.permute.xlu0 %3246
        %3248 = vrot.lane.b32.xlu0 %v3211, 2
        %v3249 = vpop.permute.xlu0 %3248
        %3250 = vrot.lane.b32.xlu0 %v3212, 2
        %v3251 = vpop.permute.xlu0 %3250
        %3252 = vrot.lane.b32.xlu0 %v3213, 2
        %v3253 = vpop.permute.xlu0 %3252
        %3254 = vrot.lane.b32.xlu0 %v3214, 2
        %v3255 = vpop.permute.xlu0 %3254
        %3256 = vrot.lane.b32.xlu0 %v3215, 2
        %v3257 = vpop.permute.xlu0 %3256
        %3258 = vrot.lane.b32.xlu0 %v3216, 2
        %v3259 = vpop.permute.xlu0 %3258
        %3260 = vrot.lane.b32.xlu0 %v3217, 2
        %v3261 = vpop.permute.xlu0 %3260
        %3262 = vrot.lane.b32.xlu0 %v3218, 2
        %v3263 = vpop.permute.xlu0 %3262
        %3264 = vrot.lane.b32.xlu0 %v3219, 2
        %v3265 = vpop.permute.xlu0 %3264
        %3266 = vrot.lane.b32.xlu0 %v3220, 2
        %v3267 = vpop.permute.xlu0 %3266
        %3268 = vrot.lane.b32.xlu0 %v3221, 2
        %v3269 = vpop.permute.xlu0 %3268
        %v3270 = vsel %vm3139, %v3239, %v3241
        %v3271 = vsel %vm3139, %v3243, %v3245
        %v3272 = vsel %vm3139, %v3247, %v3249
        %v3273 = vsel %vm3139, %v3251, %v3253
        %v3274 = vsel %vm3139, %v3255, %v3257
        %v3275 = vsel %vm3139, %v3259, %v3261
        %v3276 = vsel %vm3139, %v3263, %v3265
        %v3277 = vsel %vm3139, %v3267, %v3269
        %v3286 = vsel %vm696, %v3270, 0.0
        %v3287 = vsel %vm696, %v3271, 0.0
        %v3288 = vadd.f32 %v3286, %v3287
        %v3289 = vsel %vm696, %v3272, 0.0
        %v3290 = vadd.f32 %v3288, %v3289
        %v3291 = vsel %vm696, %v3273, 0.0
        %v3292 = vadd.f32 %v3290, %v3291
        %v3293 = vsel %vm696, %v3274, 0.0
        %v3294 = vadd.f32 %v3292, %v3293
        %v3295 = vsel %vm696, %v3275, 0.0
        %v3296 = vadd.f32 %v3294, %v3295
        %v3297 = vsel %vm696, %v3276, 0.0
        %v3298 = vadd.f32 %v3296, %v3297
        %v3299 = vsel %vm696, %v3277, 0.0
        %v3300 = vadd.f32 %v3298, %v3299
        %3301 = vadd.xlane.f32.xlu0 %v3300
        %v3302 = vpop.xlane.xlu0 %3301
        %v3303 = vrot.slane %v3302, 4
        %v3304 = vadd.f32 %v3302, %v3303
        %v3305 = vrot.slane %v3304, 2
        %v3306 = vadd.f32 %v3304, %v3305
        %v3307 = vrot.slane %v3306, 1
        %v3308 = vadd.f32 %v3306, %v3307
        %s3309 = vtos %v3308
        %v3310 = vrcp.pop 768.0
        %v3311 = vmul.f32 768.0, %v3310
        %v3312 = vsub.f32 1.0, %v3311
        %v3313 = vmul.f32 %v3310, %v3312
        %v3314 = vadd.f32 %v3310, %v3313
        %vm3315 = vweird.f32 %v3310
        %v3316 = vsel %vm3315, %v3310, %v3314
        %s3317 = vtos %v3316
        %s3318 = smul.f32 %s3309, %s3317
        %3320 = vset.pattern.permute.xlu0 0
        %3321 = vperm.xlu0 %3320, %v3074
        %v3322 = vpop.permute.xlu0 %3321
        %3325 = vset.pattern.permute.xlu0 0
        %3326 = vperm.xlu0 %3325, %v3075
        %v3327 = vpop.permute.xlu0 %3326
        %3330 = vset.pattern.permute.xlu0 0
        %3331 = vperm.xlu0 %3330, %v3076
        %v3332 = vpop.permute.xlu0 %3331
        %3335 = vset.pattern.permute.xlu0 0
        %3336 = vperm.xlu0 %3335, %v3077
        %v3337 = vpop.permute.xlu0 %3336
        %3340 = vset.pattern.permute.xlu0 0
        %3341 = vperm.xlu0 %3340, %v3078
        %v3342 = vpop.permute.xlu0 %3341
        %3345 = vset.pattern.permute.xlu0 0
        %3346 = vperm.xlu0 %3345, %v3079
        %v3347 = vpop.permute.xlu0 %3346
        %3350 = vset.pattern.permute.xlu0 0
        %3351 = vperm.xlu0 %3350, %v3080
        %v3352 = vpop.permute.xlu0 %3351
        %3355 = vset.pattern.permute.xlu0 0
        %3356 = vperm.xlu0 %3355, %v3081
        %v3357 = vpop.permute.xlu0 %3356
        %v3359 = vmul.f32 %v3322, %v3190
        %v3360 = vmul.f32 %v3322, %v3191
        %v3361 = vmul.f32 %v3327, %v3192
        %v3362 = vmul.f32 %v3327, %v3193
        %v3363 = vmul.f32 %v3332, %v3194
        %v3364 = vmul.f32 %v3332, %v3195
        %v3365 = vmul.f32 %v3337, %v3196
        %v3366 = vmul.f32 %v3337, %v3197
        %v3367 = vmul.f32 %v3342, %v3198
        %v3368 = vmul.f32 %v3342, %v3199
        %v3369 = vmul.f32 %v3347, %v3200
        %v3370 = vmul.f32 %v3347, %v3201
        %v3371 = vmul.f32 %v3352, %v3202
        %v3372 = vmul.f32 %v3352, %v3203
        %v3373 = vmul.f32 %v3357, %v3204
        %v3374 = vmul.f32 %v3357, %v3205
        %s3375 = sadd.f32 %s3318, 1e-08
        %v3376 = vstv %s3375
        %v3377 = vrsqrt.pop %v3376
        %v3378 = vmul.f32 %v3377, %v3376
        %v3379 = vmul.f32 %v3378, %v3377
        %v3380 = vmul.f32 0.5, %v3379
        %v3381 = vsub.f32 1.5, %v3380
        %v3382 = vmul.f32 %v3377, %v3381
        %vm3383 = vweird.f32 %v3376
        %vm3384 = vweird.f32 %v3377
        %vm3385 = vmor %vm3383, %vm3384
        %v3386 = vsel %vm3385, %v3377, %v3382
        %s3387 = vtos %v3386
        %v3388 = vstv %s3387
        %v3389 = vmul.f32 %v3359, %v3388
        %v3390 = vmul.f32 %v3360, %v3388
        %v3391 = vmul.f32 %v3361, %v3388
        %v3392 = vmul.f32 %v3362, %v3388
        %v3393 = vmul.f32 %v3363, %v3388
        %v3394 = vmul.f32 %v3364, %v3388
        %v3395 = vmul.f32 %v3365, %v3388
        %v3396 = vmul.f32 %v3366, %v3388
        %v3397 = vmul.f32 %v3367, %v3388
        %v3398 = vmul.f32 %v3368, %v3388
        %v3399 = vmul.f32 %v3369, %v3388
        %v3400 = vmul.f32 %v3370, %v3388
        %v3401 = vmul.f32 %v3371, %v3388
        %v3402 = vmul.f32 %v3372, %v3388
        %v3403 = vmul.f32 %v3373, %v3388
        %v3404 = vmul.f32 %v3374, %v3388
        %3406 = vset.pattern.permute.xlu0 0
        %3407 = vperm.xlu0 %3406, %v3083
        %v3408 = vpop.permute.xlu0 %3407
        %3411 = vset.pattern.permute.xlu0 0
        %3412 = vperm.xlu0 %3411, %v3084
        %v3413 = vpop.permute.xlu0 %3412
        %3416 = vset.pattern.permute.xlu0 0
        %3417 = vperm.xlu0 %3416, %v3085
        %v3418 = vpop.permute.xlu0 %3417
        %3421 = vset.pattern.permute.xlu0 0
        %3422 = vperm.xlu0 %3421, %v3086
        %v3423 = vpop.permute.xlu0 %3422
        %3426 = vset.pattern.permute.xlu0 0
        %3427 = vperm.xlu0 %3426, %v3087
        %v3428 = vpop.permute.xlu0 %3427
        %3431 = vset.pattern.permute.xlu0 0
        %3432 = vperm.xlu0 %3431, %v3088
        %v3433 = vpop.permute.xlu0 %3432
        %3436 = vset.pattern.permute.xlu0 0
        %3437 = vperm.xlu0 %3436, %v3089
        %v3438 = vpop.permute.xlu0 %3437
        %3441 = vset.pattern.permute.xlu0 0
        %3442 = vperm.xlu0 %3441, %v3090
        %v3443 = vpop.permute.xlu0 %3442
        %v3445 = vadd.f32 %v3389, %v3408
        %v3446 = vadd.f32 %v3390, %v3408
        %v3447 = vadd.f32 %v3391, %v3413
        %v3448 = vadd.f32 %v3392, %v3413
        %v3449 = vadd.f32 %v3393, %v3418
        %v3450 = vadd.f32 %v3394, %v3418
        %v3451 = vadd.f32 %v3395, %v3423
        %v3452 = vadd.f32 %v3396, %v3423
        %v3453 = vadd.f32 %v3397, %v3428
        %v3454 = vadd.f32 %v3398, %v3428
        %v3455 = vadd.f32 %v3399, %v3433
        %v3456 = vadd.f32 %v3400, %v3433
        %v3457 = vadd.f32 %v3401, %v3438
        %v3458 = vadd.f32 %v3402, %v3438
        %v3459 = vadd.f32 %v3403, %v3443
        %v3460 = vadd.f32 %v3404, %v3443
        %s3461 = scalar_lea.vmem %s15, 8
        %v3462 = vld [vmem:[%s3461] sm:$0xf]
        %v3463 = vld [vmem:[%s3461 + $0x4] sm:$0xf]
        %v3464 = vpack.c.bf16 %v3447, %v3445
        %v3465 = vpack.c.bf16 %v3448, %v3446
        %v3466 = vpack.c.bf16 %v3451, %v3449
        %v3467 = vpack.c.bf16 %v3452, %v3450
        %v3468 = vpack.c.bf16 %v3455, %v3453
        %v3469 = vpack.c.bf16 %v3456, %v3454
        %v3470 = vpack.c.bf16 %v3459, %v3457
        %v3471 = vpack.c.bf16 %v3460, %v3458
        %s3472 = scalar_lea.vmem %s16, 16
        %v3473 = vld [vmem:[%s3472] sm:$0xff]
        %v3474 = vld [vmem:[%s3472 + $0x8] sm:$0xff]
        %3476 = vset.pattern.permute.xlu0 0
        %3477 = vperm.xlu0 %3476, %v3473
        %v3478 = vpop.permute.xlu0 %3477
        %3481 = vset.pattern.permute.xlu0 0
        %3482 = vperm.xlu0 %3481, %v3474
        %v3483 = vpop.permute.xlu0 %3482
        %v3487 = vunpack.c.l.b16 %v3462
        %v3488 = vunpack.c.l.b16 %v3463
        %v3489 = vpack.c.b16 %v3488, %v3487
        %3498 = vrot.lane.b32.xlu0 %v3464, 2
        %v3499 = vpop.permute.xlu0 %3498
        %3500 = vrot.lane.b32.xlu0 %v3465, 2
        %v3501 = vpop.permute.xlu0 %3500
        %3502 = vrot.lane.b32.xlu0 %v3466, 2
        %v3503 = vpop.permute.xlu0 %3502
        %3504 = vrot.lane.b32.xlu0 %v3467, 2
        %v3505 = vpop.permute.xlu0 %3504
        %3506 = vrot.lane.b32.xlu0 %v3468, 2
        %v3507 = vpop.permute.xlu0 %3506
        %3508 = vrot.lane.b32.xlu0 %v3469, 2
        %v3509 = vpop.permute.xlu0 %3508
        %3510 = vrot.lane.b32.xlu0 %v3470, 2
        %v3511 = vpop.permute.xlu0 %3510
        %3512 = vrot.lane.b32.xlu0 %v3471, 2
        %v3513 = vpop.permute.xlu0 %3512
        %vm3514 = vcmask 15360
        %v3515 = vsel %vm3514, %v3499, %v3501
        %v3516 = vsel %vm3514, %v3503, %v3505
        %v3517 = vsel %vm3514, %v3507, %v3509
        %v3518 = vsel %vm3514, %v3511, %v3513
        %v3524 = vsel %vm2258, %v3489, 0
        %3526 = vmatpush.bf16.msra.mxu0 0
        %3527 = vmatpush.bf16.msra.mxu0 0
        %3528 = vmatpush.bf16.msra.mxu0 0
        %3529 = vmatpush.bf16.msra.mxu0 0
        %3530 = vmatpush.bf16.msra.mxu0 %v3518
        %3531 = vmatpush.bf16.msra.mxu0 %v3517
        %3532 = vmatpush.bf16.msra.mxu0 %v3516
        %3533 = vmatpush.bf16.msra.mxu0 %v3515
        %3534 = vmatmul.bf16.gmra.mxu0 %v3524
        %v3535 = vpop.f32.mrf.mxu0
        %v3536 = vadd.f32 %v3478, %v3535
        %v3537 = vpop.f32.mrf.mxu0
        %v3538 = vadd.f32 %v3483, %v3537
        %3539 = vdwg.mxu0
        %v3540 = vadd.f32 %v2276, %v3536
        %v3541 = vadd.f32 %v2277, %v3538
        %s3542 = scalar_lea.vmem %s7, 64
        %v3543 = vld [vmem:[%s3542] sm:$0xf]
        %v3544 = vld [vmem:[%s3542 + $0x4] sm:$0xf]
        %v3545 = vld [vmem:[%s3542 + $0x8] sm:$0xf]
        %v3546 = vld [vmem:[%s3542 + $0xc] sm:$0xf]
        %v3547 = vld [vmem:[%s3542 + $0x10] sm:$0xf]
        %v3548 = vld [vmem:[%s3542 + $0x14] sm:$0xf]
        %v3549 = vld [vmem:[%s3542 + $0x18] sm:$0xf]
        %v3550 = vld [vmem:[%s3542 + $0x1c] sm:$0xf]
        %v3551 = vpack.c.bf16 %v3541, %v3540
        %s3552 = scalar_lea.vmem %s8, 128
        %v3553 = vld [vmem:[%s3552] sm:$0xff]
        %v3554 = vld [vmem:[%s3552 + $0x8] sm:$0xff]
        %v3555 = vld [vmem:[%s3552 + $0x10] sm:$0xff]
        %v3556 = vld [vmem:[%s3552 + $0x18] sm:$0xff]
        %v3557 = vld [vmem:[%s3552 + $0x20] sm:$0xff]
        %v3558 = vld [vmem:[%s3552 + $0x28] sm:$0xff]
        %v3559 = vld [vmem:[%s3552 + $0x30] sm:$0xff]
        %v3560 = vld [vmem:[%s3552 + $0x38] sm:$0xff]
        %3562 = vset.pattern.permute.xlu0 0
        %3563 = vperm.xlu0 %3562, %v3553
        %v3564 = vpop.permute.xlu0 %3563
        %3567 = vset.pattern.permute.xlu0 0
        %3568 = vperm.xlu0 %3567, %v3554
        %v3569 = vpop.permute.xlu0 %3568
        %3572 = vset.pattern.permute.xlu0 0
        %3573 = vperm.xlu0 %3572, %v3555
        %v3574 = vpop.permute.xlu0 %3573
        %3577 = vset.pattern.permute.xlu0 0
        %3578 = vperm.xlu0 %3577, %v3556
        %v3579 = vpop.permute.xlu0 %3578
        %3582 = vset.pattern.permute.xlu0 0
        %3583 = vperm.xlu0 %3582, %v3557
        %v3584 = vpop.permute.xlu0 %3583
        %3587 = vset.pattern.permute.xlu0 0
        %3588 = vperm.xlu0 %3587, %v3558
        %v3589 = vpop.permute.xlu0 %3588
        %3592 = vset.pattern.permute.xlu0 0
        %3593 = vperm.xlu0 %3592, %v3559
        %v3594 = vpop.permute.xlu0 %3593
        %3597 = vset.pattern.permute.xlu0 0
        %3598 = vperm.xlu0 %3597, %v3560
        %v3599 = vpop.permute.xlu0 %3598
        %v3609 = vunpack.c.l.b16 %v3543
        %v3610 = vunpack.c.l.b16 %v3544
        %v3611 = vunpack.c.l.b16 %v3545
        %v3612 = vunpack.c.l.b16 %v3546
        %v3613 = vunpack.c.l.b16 %v3547
        %v3614 = vunpack.c.l.b16 %v3548
        %v3615 = vunpack.c.l.b16 %v3549
        %v3616 = vunpack.c.l.b16 %v3550
        %v3617 = vpack.c.b16 %v3610, %v3609
        %v3618 = vpack.c.b16 %v3612, %v3611
        %v3619 = vpack.c.b16 %v3614, %v3613
        %v3620 = vpack.c.b16 %v3616, %v3615
        %v3622 = vsel %vm662, %v3617, 0
        %v3625 = vsel %vm662, %v3618, 0
        %v3628 = vsel %vm662, %v3619, 0
        %v3631 = vsel %vm662, %v3620, 0
        %3633 = vmatpush.bf16.msra.mxu0 0
        %3634 = vmatpush.bf16.msra.mxu0 0
        %3635 = vmatpush.bf16.msra.mxu0 0
        %3636 = vmatpush.bf16.msra.mxu0 0
        %3637 = vmatpush.bf16.msra.mxu0 0
        %3638 = vmatpush.bf16.msra.mxu0 0
        %3639 = vmatpush.bf16.msra.mxu0 0
        %3640 = vmatpush.bf16.msra.mxu0 %v3551
        %3641 = vmatmul.bf16.gmra.mxu0 %v3622
        %v3642 = vpop.f32.mrf.mxu0
        %v3643 = vadd.f32 %v3564, %v3642
        %v3644 = vpop.f32.mrf.mxu0
        %v3645 = vadd.f32 %v3569, %v3644
        %3646 = vmatmul.bf16.gmra.mxu0 %v3625
        %v3647 = vpop.f32.mrf.mxu0
        %v3648 = vadd.f32 %v3574, %v3647
        %v3649 = vpop.f32.mrf.mxu0
        %v3650 = vadd.f32 %v3579, %v3649
        %3651 = vmatmul.bf16.gmra.mxu0 %v3628
        %v3652 = vpop.f32.mrf.mxu0
        %v3653 = vadd.f32 %v3584, %v3652
        %v3654 = vpop.f32.mrf.mxu0
        %v3655 = vadd.f32 %v3589, %v3654
        %3656 = vmatmul.bf16.gmra.mxu0 %v3631
        %v3657 = vpop.f32.mrf.mxu0
        %v3658 = vadd.f32 %v3594, %v3657
        %v3659 = vpop.f32.mrf.mxu0
        %v3660 = vadd.f32 %v3599, %v3659
        %3661 = vdwg.mxu0
        %s3662 = sld [smem:[#allocation4 + $0x4]]
        %vm3663 = vcmp.ge.f32.partialorder %v3643, 0.0
        %vm3664 = vcmp.ge.f32.partialorder %v3645, 0.0
        %vm3665 = vcmp.ge.f32.partialorder %v3648, 0.0
        %vm3666 = vcmp.ge.f32.partialorder %v3650, 0.0
        %vm3667 = vcmp.ge.f32.partialorder %v3653, 0.0
        %vm3668 = vcmp.ge.f32.partialorder %v3655, 0.0
        %vm3669 = vcmp.ge.f32.partialorder %v3658, 0.0
        %vm3670 = vcmp.ge.f32.partialorder %v3660, 0.0
        %v3671 = vstv %s3662
        %v3672 = vmul.f32 %v3671, %v3643
        %v3673 = vmul.f32 %v3671, %v3645
        %v3674 = vmul.f32 %v3671, %v3648
        %v3675 = vmul.f32 %v3671, %v3650
        %v3676 = vmul.f32 %v3671, %v3653
        %v3677 = vmul.f32 %v3671, %v3655
        %v3678 = vmul.f32 %v3671, %v3658
        %v3679 = vmul.f32 %v3671, %v3660
        %v3680 = vsel %vm3663, %v3643, %v3672
        %v3681 = vsel %vm3664, %v3645, %v3673
        %v3682 = vsel %vm3665, %v3648, %v3674
        %v3683 = vsel %vm3666, %v3650, %v3675
        %v3684 = vsel %vm3667, %v3653, %v3676
        %v3685 = vsel %vm3668, %v3655, %v3677
        %v3686 = vsel %vm3669, %v3658, %v3678
        %v3687 = vsel %vm3670, %v3660, %v3679
        %s3688 = scalar_lea.vmem %s9, 128
        %v3689 = vld [vmem:[%s3688] sm:$0xff]
        %v3690 = vld [vmem:[%s3688 + $0x8] sm:$0xff]
        %v3691 = vld [vmem:[%s3688 + $0x10] sm:$0xff]
        %v3692 = vld [vmem:[%s3688 + $0x18] sm:$0xff]
        %v3693 = vld [vmem:[%s3688 + $0x20] sm:$0xff]
        %v3694 = vld [vmem:[%s3688 + $0x28] sm:$0xff]
        %v3695 = vld [vmem:[%s3688 + $0x30] sm:$0xff]
        %v3696 = vld [vmem:[%s3688 + $0x38] sm:$0xff]
        %s3697 = scalar_lea.vmem %s10, 128
        %v3698 = vld [vmem:[%s3697] sm:$0xff]
        %v3699 = vld [vmem:[%s3697 + $0x8] sm:$0xff]
        %v3700 = vld [vmem:[%s3697 + $0x10] sm:$0xff]
        %v3701 = vld [vmem:[%s3697 + $0x18] sm:$0xff]
        %v3702 = vld [vmem:[%s3697 + $0x20] sm:$0xff]
        %v3703 = vld [vmem:[%s3697 + $0x28] sm:$0xff]
        %v3704 = vld [vmem:[%s3697 + $0x30] sm:$0xff]
        %v3705 = vld [vmem:[%s3697 + $0x38] sm:$0xff]
        %v3706 = vsel %vm696, %v3680, 0.0
        %v3707 = vsel %vm696, %v3681, 0.0
        %v3708 = vadd.f32 %v3706, %v3707
        %v3709 = vsel %vm696, %v3682, 0.0
        %v3710 = vadd.f32 %v3708, %v3709
        %v3711 = vsel %vm696, %v3683, 0.0
        %v3712 = vadd.f32 %v3710, %v3711
        %v3713 = vsel %vm696, %v3684, 0.0
        %v3714 = vadd.f32 %v3712, %v3713
        %v3715 = vsel %vm696, %v3685, 0.0
        %v3716 = vadd.f32 %v3714, %v3715
        %v3717 = vsel %vm696, %v3686, 0.0
        %v3718 = vadd.f32 %v3716, %v3717
        %v3719 = vsel %vm696, %v3687, 0.0
        %v3720 = vadd.f32 %v3718, %v3719
        %3721 = vadd.xlane.f32.xlu0 %v3720
        %v3722 = vpop.xlane.xlu0 %3721
        %v3723 = vrot.slane %v3722, 4
        %v3724 = vadd.f32 %v3722, %v3723
        %v3725 = vrot.slane %v3724, 2
        %v3726 = vadd.f32 %v3724, %v3725
        %v3727 = vrot.slane %v3726, 1
        %v3728 = vadd.f32 %v3726, %v3727
        %s3729 = vtos %v3728
        %v3730 = vrcp.pop 768.0
        %v3731 = vmul.f32 768.0, %v3730
        %v3732 = vsub.f32 1.0, %v3731
        %v3733 = vmul.f32 %v3730, %v3732
        %v3734 = vadd.f32 %v3730, %v3733
        %vm3735 = vweird.f32 %v3730
        %v3736 = vsel %vm3735, %v3730, %v3734
        %s3737 = vtos %v3736
        %s3738 = smul.f32 %s3729, %s3737
        %v3739 = vstv %s3738
        %v3740 = vsub.f32 %v3680, %v3739
        %v3741 = vsub.f32 %v3681, %v3739
        %v3742 = vsub.f32 %v3682, %v3739
        %v3743 = vsub.f32 %v3683, %v3739
        %v3744 = vsub.f32 %v3684, %v3739
        %v3745 = vsub.f32 %v3685, %v3739
        %v3746 = vsub.f32 %v3686, %v3739
        %v3747 = vsub.f32 %v3687, %v3739
        %v3748 = vmul.f32 %v3740, %v3740
        %v3749 = vmul.f32 %v3741, %v3741
        %v3750 = vmul.f32 %v3742, %v3742
        %v3751 = vmul.f32 %v3743, %v3743
        %v3752 = vmul.f32 %v3744, %v3744
        %v3753 = vmul.f32 %v3745, %v3745
        %v3754 = vmul.f32 %v3746, %v3746
        %v3755 = vmul.f32 %v3747, %v3747
        %v3756 = vsel %vm696, %v3748, 0.0
        %v3757 = vsel %vm696, %v3749, 0.0
        %v3758 = vadd.f32 %v3756, %v3757
        %v3759 = vsel %vm696, %v3750, 0.0
        %v3760 = vadd.f32 %v3758, %v3759
        %v3761 = vsel %vm696, %v3751, 0.0
        %v3762 = vadd.f32 %v3760, %v3761
        %v3763 = vsel %vm696, %v3752, 0.0
        %v3764 = vadd.f32 %v3762, %v3763
        %v3765 = vsel %vm696, %v3753, 0.0
        %v3766 = vadd.f32 %v3764, %v3765
        %v3767 = vsel %vm696, %v3754, 0.0
        %v3768 = vadd.f32 %v3766, %v3767
        %v3769 = vsel %vm696, %v3755, 0.0
        %v3770 = vadd.f32 %v3768, %v3769
        %3771 = vadd.xlane.f32.xlu0 %v3770
        %v3772 = vpop.xlane.xlu0 %3771
        %v3773 = vrot.slane %v3772, 4
        %v3774 = vadd.f32 %v3772, %v3773
        %v3775 = vrot.slane %v3774, 2
        %v3776 = vadd.f32 %v3774, %v3775
        %v3777 = vrot.slane %v3776, 1
        %v3778 = vadd.f32 %v3776, %v3777
        %s3779 = vtos %v3778
        %v3780 = vrcp.pop 768.0
        %v3781 = vmul.f32 768.0, %v3780
        %v3782 = vsub.f32 1.0, %v3781
        %v3783 = vmul.f32 %v3780, %v3782
        %v3784 = vadd.f32 %v3780, %v3783
        %vm3785 = vweird.f32 %v3780
        %v3786 = vsel %vm3785, %v3780, %v3784
        %s3787 = vtos %v3786
        %s3788 = smul.f32 %s3779, %s3787
        %3790 = vset.pattern.permute.xlu0 0
        %3791 = vperm.xlu0 %3790, %v3689
        %v3792 = vpop.permute.xlu0 %3791
        %3795 = vset.pattern.permute.xlu0 0
        %3796 = vperm.xlu0 %3795, %v3690
        %v3797 = vpop.permute.xlu0 %3796
        %3800 = vset.pattern.permute.xlu0 0
        %3801 = vperm.xlu0 %3800, %v3691
        %v3802 = vpop.permute.xlu0 %3801
        %3805 = vset.pattern.permute.xlu0 0
        %3806 = vperm.xlu0 %3805, %v3692
        %v3807 = vpop.permute.xlu0 %3806
        %3810 = vset.pattern.permute.xlu0 0
        %3811 = vperm.xlu0 %3810, %v3693
        %v3812 = vpop.permute.xlu0 %3811
        %3815 = vset.pattern.permute.xlu0 0
        %3816 = vperm.xlu0 %3815, %v3694
        %v3817 = vpop.permute.xlu0 %3816
        %3820 = vset.pattern.permute.xlu0 0
        %3821 = vperm.xlu0 %3820, %v3695
        %v3822 = vpop.permute.xlu0 %3821
        %3825 = vset.pattern.permute.xlu0 0
        %3826 = vperm.xlu0 %3825, %v3696
        %v3827 = vpop.permute.xlu0 %3826
        %v3829 = vmul.f32 %v3792, %v3740
        %v3830 = vmul.f32 %v3797, %v3741
        %v3831 = vmul.f32 %v3802, %v3742
        %v3832 = vmul.f32 %v3807, %v3743
        %v3833 = vmul.f32 %v3812, %v3744
        %v3834 = vmul.f32 %v3817, %v3745
        %v3835 = vmul.f32 %v3822, %v3746
        %v3836 = vmul.f32 %v3827, %v3747
        %s3837 = sadd.f32 %s3788, 1e-08
        %v3838 = vstv %s3837
        %v3839 = vrsqrt.pop %v3838
        %v3840 = vmul.f32 %v3839, %v3838
        %v3841 = vmul.f32 %v3840, %v3839
        %v3842 = vmul.f32 0.5, %v3841
        %v3843 = vsub.f32 1.5, %v3842
        %v3844 = vmul.f32 %v3839, %v3843
        %vm3845 = vweird.f32 %v3838
        %vm3846 = vweird.f32 %v3839
        %vm3847 = vmor %vm3845, %vm3846
        %v3848 = vsel %vm3847, %v3839, %v3844
        %s3849 = vtos %v3848
        %v3850 = vstv %s3849
        %v3851 = vmul.f32 %v3829, %v3850
        %v3852 = vmul.f32 %v3830, %v3850
        %v3853 = vmul.f32 %v3831, %v3850
        %v3854 = vmul.f32 %v3832, %v3850
        %v3855 = vmul.f32 %v3833, %v3850
        %v3856 = vmul.f32 %v3834, %v3850
        %v3857 = vmul.f32 %v3835, %v3850
        %v3858 = vmul.f32 %v3836, %v3850
        %3860 = vset.pattern.permute.xlu0 0
        %3861 = vperm.xlu0 %3860, %v3698
        %v3862 = vpop.permute.xlu0 %3861
        %3865 = vset.pattern.permute.xlu0 0
        %3866 = vperm.xlu0 %3865, %v3699
        %v3867 = vpop.permute.xlu0 %3866
        %3870 = vset.pattern.permute.xlu0 0
        %3871 = vperm.xlu0 %3870, %v3700
        %v3872 = vpop.permute.xlu0 %3871
        %3875 = vset.pattern.permute.xlu0 0
        %3876 = vperm.xlu0 %3875, %v3701
        %v3877 = vpop.permute.xlu0 %3876
        %3880 = vset.pattern.permute.xlu0 0
        %3881 = vperm.xlu0 %3880, %v3702
        %v3882 = vpop.permute.xlu0 %3881
        %3885 = vset.pattern.permute.xlu0 0
        %3886 = vperm.xlu0 %3885, %v3703
        %v3887 = vpop.permute.xlu0 %3886
        %3890 = vset.pattern.permute.xlu0 0
        %3891 = vperm.xlu0 %3890, %v3704
        %v3892 = vpop.permute.xlu0 %3891
        %3895 = vset.pattern.permute.xlu0 0
        %3896 = vperm.xlu0 %3895, %v3705
        %v3897 = vpop.permute.xlu0 %3896
        %v3899 = vadd.f32 %v3851, %v3862
        %v3900 = vadd.f32 %v3852, %v3867
        %v3901 = vadd.f32 %v3853, %v3872
        %v3902 = vadd.f32 %v3854, %v3877
        %v3903 = vadd.f32 %v3855, %v3882
        %v3904 = vadd.f32 %v3856, %v3887
        %v3905 = vadd.f32 %v3857, %v3892
        %v3906 = vadd.f32 %v3858, %v3897
        %3907 = vst.msk [vmem:[#allocation3 + $0x8] sm:$0xff] %vm696, %v3899
        %3908 = vst.msk [vmem:[#allocation3 + $0x18] sm:$0xff] %vm696, %v3900
        %3909 = vst.msk [vmem:[#allocation3 + $0x28] sm:$0xff] %vm696, %v3901
        %3910 = vst.msk [vmem:[#allocation3 + $0x38] sm:$0xff] %vm696, %v3902
        %3911 = vst.msk [vmem:[#allocation3 + $0x48] sm:$0xff] %vm696, %v3903
        %3912 = vst.msk [vmem:[#allocation3 + $0x58] sm:$0xff] %vm696, %v3904
        %3913 = vst.msk [vmem:[#allocation3 + $0x68] sm:$0xff] %vm696, %v3905
        %3914 = vst.msk [vmem:[#allocation3 + $0x78] sm:$0xff] %vm696, %v3906
        %s3915 = scalar_lea.vmem %s11, 384
        %v3916 = vld [vmem:[%s3915] sm:$0xff]
        %v3917 = vld [vmem:[%s3915 + $0x8] sm:$0xff]
        %v3918 = vld [vmem:[%s3915 + $0x10] sm:$0xff]
        %v3919 = vld [vmem:[%s3915 + $0x18] sm:$0xff]
        %v3920 = vld [vmem:[%s3915 + $0x20] sm:$0xff]
        %v3921 = vld [vmem:[%s3915 + $0x28] sm:$0xff]
        %v3922 = vld [vmem:[%s3915 + $0x30] sm:$0xff]
        %v3923 = vld [vmem:[%s3915 + $0x38] sm:$0xff]
        %v3924 = vld [vmem:[#allocation3] sm:$0xff]
        %v3925 = vld [vmem:[#allocation3 + $0x8] sm:$0xff]
        %v3926 = vld [vmem:[#allocation3 + $0x10] sm:$0xff]
        %v3927 = vld [vmem:[#allocation3 + $0x18] sm:$0xff]
        %v3928 = vld [vmem:[#allocation3 + $0x20] sm:$0xff]
        %v3929 = vld [vmem:[#allocation3 + $0x28] sm:$0xff]
        %v3930 = vld [vmem:[#allocation3 + $0x30] sm:$0xff]
        %v3931 = vld [vmem:[#allocation3 + $0x38] sm:$0xff]
        %v3932 = vld [vmem:[#allocation3 + $0x40] sm:$0xff]
        %v3933 = vld [vmem:[#allocation3 + $0x48] sm:$0xff]
        %v3934 = vld [vmem:[#allocation3 + $0x50] sm:$0xff]
        %v3935 = vld [vmem:[#allocation3 + $0x58] sm:$0xff]
        %v3936 = vld [vmem:[#allocation3 + $0x60] sm:$0xff]
        %v3937 = vld [vmem:[#allocation3 + $0x68] sm:$0xff]
        %v3938 = vld [vmem:[#allocation3 + $0x70] sm:$0xff]
        %v3939 = vld [vmem:[#allocation3 + $0x78] sm:$0xff]
        %3941 = vset.pattern.permute.xlu0 0
        %3942 = vperm.xlu0 %3941, %v3916
        %v3943 = vpop.permute.xlu0 %3942
        %3946 = vset.pattern.permute.xlu0 0
        %3947 = vperm.xlu0 %3946, %v3917
        %v3948 = vpop.permute.xlu0 %3947
        %3951 = vset.pattern.permute.xlu0 0
        %3952 = vperm.xlu0 %3951, %v3918
        %v3953 = vpop.permute.xlu0 %3952
        %3956 = vset.pattern.permute.xlu0 0
        %3957 = vperm.xlu0 %3956, %v3919
        %v3958 = vpop.permute.xlu0 %3957
        %3961 = vset.pattern.permute.xlu0 0
        %3962 = vperm.xlu0 %3961, %v3920
        %v3963 = vpop.permute.xlu0 %3962
        %3966 = vset.pattern.permute.xlu0 0
        %3967 = vperm.xlu0 %3966, %v3921
        %v3968 = vpop.permute.xlu0 %3967
        %3971 = vset.pattern.permute.xlu0 0
        %3972 = vperm.xlu0 %3971, %v3922
        %v3973 = vpop.permute.xlu0 %3972
        %3976 = vset.pattern.permute.xlu0 0
        %3977 = vperm.xlu0 %3976, %v3923
        %v3978 = vpop.permute.xlu0 %3977
        %v3980 = vmul.f32 %v3943, %v3924
        %v3981 = vmul.f32 %v3943, %v3925
        %v3982 = vmul.f32 %v3948, %v3926
        %v3983 = vmul.f32 %v3948, %v3927
        %v3984 = vmul.f32 %v3953, %v3928
        %v3985 = vmul.f32 %v3953, %v3929
        %v3986 = vmul.f32 %v3958, %v3930
        %v3987 = vmul.f32 %v3958, %v3931
        %v3988 = vmul.f32 %v3963, %v3932
        %v3989 = vmul.f32 %v3963, %v3933
        %v3990 = vmul.f32 %v3968, %v3934
        %v3991 = vmul.f32 %v3968, %v3935
        %v3992 = vmul.f32 %v3973, %v3936
        %v3993 = vmul.f32 %v3973, %v3937
        %v3994 = vmul.f32 %v3978, %v3938
        %v3995 = vmul.f32 %v3978, %v3939
        %v3996 = vadd.f32 %v3980, 0.0
        %v3997 = vadd.f32 %v3981, 0.0
        %v3998 = vadd.f32 %v3982, 0.0
        %v3999 = vadd.f32 %v3983, 0.0
        %v4000 = vadd.f32 %v3984, 0.0
        %v4001 = vadd.f32 %v3985, 0.0
        %v4002 = vadd.f32 %v3986, 0.0
        %v4003 = vadd.f32 %v3987, 0.0
        %v4004 = vadd.f32 %v3988, 0.0
        %v4005 = vadd.f32 %v3989, 0.0
        %v4006 = vadd.f32 %v3990, 0.0
        %v4007 = vadd.f32 %v3991, 0.0
        %v4008 = vadd.f32 %v3992, 0.0
        %v4009 = vadd.f32 %v3993, 0.0
        %v4010 = vadd.f32 %v3994, 0.0
        %v4011 = vadd.f32 %v3995, 0.0
        %s4012 = scalar_lea.vmem %s11, 448
        %v4013 = vld [vmem:[%s4012] sm:$0xff]
        %v4014 = vld [vmem:[%s4012 + $0x8] sm:$0xff]
        %v4015 = vld [vmem:[%s4012 + $0x10] sm:$0xff]
        %v4016 = vld [vmem:[%s4012 + $0x18] sm:$0xff]
        %v4017 = vld [vmem:[%s4012 + $0x20] sm:$0xff]
        %v4018 = vld [vmem:[%s4012 + $0x28] sm:$0xff]
        %v4019 = vld [vmem:[%s4012 + $0x30] sm:$0xff]
        %v4020 = vld [vmem:[%s4012 + $0x38] sm:$0xff]
        %4022 = vset.pattern.permute.xlu0 0
        %4023 = vperm.xlu0 %4022, %v4013
        %v4024 = vpop.permute.xlu0 %4023
        %4027 = vset.pattern.permute.xlu0 0
        %4028 = vperm.xlu0 %4027, %v4014
        %v4029 = vpop.permute.xlu0 %4028
        %4032 = vset.pattern.permute.xlu0 0
        %4033 = vperm.xlu0 %4032, %v4015
        %v4034 = vpop.permute.xlu0 %4033
        %4037 = vset.pattern.permute.xlu0 0
        %4038 = vperm.xlu0 %4037, %v4016
        %v4039 = vpop.permute.xlu0 %4038
        %4042 = vset.pattern.permute.xlu0 0
        %4043 = vperm.xlu0 %4042, %v4017
        %v4044 = vpop.permute.xlu0 %4043
        %4047 = vset.pattern.permute.xlu0 0
        %4048 = vperm.xlu0 %4047, %v4018
        %v4049 = vpop.permute.xlu0 %4048
        %4052 = vset.pattern.permute.xlu0 0
        %4053 = vperm.xlu0 %4052, %v4019
        %v4054 = vpop.permute.xlu0 %4053
        %4057 = vset.pattern.permute.xlu0 0
        %4058 = vperm.xlu0 %4057, %v4020
        %v4059 = vpop.permute.xlu0 %4058
        %v4061 = vmul.f32 %v4024, %v3925
        %v4062 = vmul.f32 %v4029, %v3927
        %v4063 = vmul.f32 %v4034, %v3929
        %v4064 = vmul.f32 %v4039, %v3931
        %v4065 = vmul.f32 %v4044, %v3933
        %v4066 = vmul.f32 %v4049, %v3935
        %v4067 = vmul.f32 %v4054, %v3937
        %v4068 = vmul.f32 %v4059, %v3939
        %4077 = vrot.lane.b32.xlu0 %v4061, 124
        %v4078 = vpop.permute.xlu0 %4077
        %4079 = vrot.lane.b32.xlu0 %v4062, 124
        %v4080 = vpop.permute.xlu0 %4079
        %4081 = vrot.lane.b32.xlu0 %v4063, 124
        %v4082 = vpop.permute.xlu0 %4081
        %4083 = vrot.lane.b32.xlu0 %v4064, 124
        %v4084 = vpop.permute.xlu0 %4083
        %4085 = vrot.lane.b32.xlu0 %v4065, 124
        %v4086 = vpop.permute.xlu0 %4085
        %4087 = vrot.lane.b32.xlu0 %v4066, 124
        %v4088 = vpop.permute.xlu0 %4087
        %4089 = vrot.lane.b32.xlu0 %v4067, 124
        %v4090 = vpop.permute.xlu0 %4089
        %4091 = vrot.lane.b32.xlu0 %v4068, 124
        %v4092 = vpop.permute.xlu0 %4091
        %v4101 = vadd.f32 %v3996, %v4078
        %v4102 = vadd.f32 %v3997, %v4078
        %v4103 = vadd.f32 %v3998, %v4080
        %v4104 = vadd.f32 %v3999, %v4080
        %v4105 = vadd.f32 %v4000, %v4082
        %v4106 = vadd.f32 %v4001, %v4082
        %v4107 = vadd.f32 %v4002, %v4084
        %v4108 = vadd.f32 %v4003, %v4084
        %v4109 = vadd.f32 %v4004, %v4086
        %v4110 = vadd.f32 %v4005, %v4086
        %v4111 = vadd.f32 %v4006, %v4088
        %v4112 = vadd.f32 %v4007, %v4088
        %v4113 = vadd.f32 %v4008, %v4090
        %v4114 = vadd.f32 %v4009, %v4090
        %v4115 = vadd.f32 %v4010, %v4092
        %v4116 = vadd.f32 %v4011, %v4092
        %s4117 = scalar_lea.vmem %s11, 512
        %v4118 = vld [vmem:[%s4117] sm:$0xff]
        %v4119 = vld [vmem:[%s4117 + $0x8] sm:$0xff]
        %v4120 = vld [vmem:[%s4117 + $0x10] sm:$0xff]
        %v4121 = vld [vmem:[%s4117 + $0x18] sm:$0xff]
        %v4122 = vld [vmem:[%s4117 + $0x20] sm:$0xff]
        %v4123 = vld [vmem:[%s4117 + $0x28] sm:$0xff]
        %v4124 = vld [vmem:[%s4117 + $0x30] sm:$0xff]
        %v4125 = vld [vmem:[%s4117 + $0x38] sm:$0xff]
        %4127 = vset.pattern.permute.xlu0 0
        %4128 = vperm.xlu0 %4127, %v4118
        %v4129 = vpop.permute.xlu0 %4128
        %4132 = vset.pattern.permute.xlu0 0
        %4133 = vperm.xlu0 %4132, %v4119
        %v4134 = vpop.permute.xlu0 %4133
        %4137 = vset.pattern.permute.xlu0 0
        %4138 = vperm.xlu0 %4137, %v4120
        %v4139 = vpop.permute.xlu0 %4138
        %4142 = vset.pattern.permute.xlu0 0
        %4143 = vperm.xlu0 %4142, %v4121
        %v4144 = vpop.permute.xlu0 %4143
        %4147 = vset.pattern.permute.xlu0 0
        %4148 = vperm.xlu0 %4147, %v4122
        %v4149 = vpop.permute.xlu0 %4148
        %4152 = vset.pattern.permute.xlu0 0
        %4153 = vperm.xlu0 %4152, %v4123
        %v4154 = vpop.permute.xlu0 %4153
        %4157 = vset.pattern.permute.xlu0 0
        %4158 = vperm.xlu0 %4157, %v4124
        %v4159 = vpop.permute.xlu0 %4158
        %4162 = vset.pattern.permute.xlu0 0
        %4163 = vperm.xlu0 %4162, %v4125
        %v4164 = vpop.permute.xlu0 %4163
        %v4166 = vmul.f32 %v4129, %v3925
        %v4167 = vmul.f32 %v4134, %v3927
        %v4168 = vmul.f32 %v4139, %v3929
        %v4169 = vmul.f32 %v4144, %v3931
        %v4170 = vmul.f32 %v4149, %v3933
        %v4171 = vmul.f32 %v4154, %v3935
        %v4172 = vmul.f32 %v4159, %v3937
        %v4173 = vmul.f32 %v4164, %v3939
        %4182 = vrot.lane.b32.xlu0 %v4166, 120
        %v4183 = vpop.permute.xlu0 %4182
        %4184 = vrot.lane.b32.xlu0 %v4167, 120
        %v4185 = vpop.permute.xlu0 %4184
        %4186 = vrot.lane.b32.xlu0 %v4168, 120
        %v4187 = vpop.permute.xlu0 %4186
        %4188 = vrot.lane.b32.xlu0 %v4169, 120
        %v4189 = vpop.permute.xlu0 %4188
        %4190 = vrot.lane.b32.xlu0 %v4170, 120
        %v4191 = vpop.permute.xlu0 %4190
        %4192 = vrot.lane.b32.xlu0 %v4171, 120
        %v4193 = vpop.permute.xlu0 %4192
        %4194 = vrot.lane.b32.xlu0 %v4172, 120
        %v4195 = vpop.permute.xlu0 %4194
        %4196 = vrot.lane.b32.xlu0 %v4173, 120
        %v4197 = vpop.permute.xlu0 %4196
        %v4206 = vadd.f32 %v4101, %v4183
        %v4207 = vadd.f32 %v4102, %v4183
        %v4208 = vadd.f32 %v4103, %v4185
        %v4209 = vadd.f32 %v4104, %v4185
        %v4210 = vadd.f32 %v4105, %v4187
        %v4211 = vadd.f32 %v4106, %v4187
        %v4212 = vadd.f32 %v4107, %v4189
        %v4213 = vadd.f32 %v4108, %v4189
        %v4214 = vadd.f32 %v4109, %v4191
        %v4215 = vadd.f32 %v4110, %v4191
        %v4216 = vadd.f32 %v4111, %v4193
        %v4217 = vadd.f32 %v4112, %v4193
        %v4218 = vadd.f32 %v4113, %v4195
        %v4219 = vadd.f32 %v4114, %v4195
        %v4220 = vadd.f32 %v4115, %v4197
        %v4221 = vadd.f32 %v4116, %v4197
        %s4222 = scalar_lea.vmem %s12, 128
        %v4223 = vld [vmem:[%s4222] sm:$0xff]
        %v4224 = vld [vmem:[%s4222 + $0x8] sm:$0xff]
        %v4225 = vld [vmem:[%s4222 + $0x10] sm:$0xff]
        %v4226 = vld [vmem:[%s4222 + $0x18] sm:$0xff]
        %v4227 = vld [vmem:[%s4222 + $0x20] sm:$0xff]
        %v4228 = vld [vmem:[%s4222 + $0x28] sm:$0xff]
        %v4229 = vld [vmem:[%s4222 + $0x30] sm:$0xff]
        %v4230 = vld [vmem:[%s4222 + $0x38] sm:$0xff]
        %4232 = vset.pattern.permute.xlu0 0
        %4233 = vperm.xlu0 %4232, %v4223
        %v4234 = vpop.permute.xlu0 %4233
        %4237 = vset.pattern.permute.xlu0 0
        %4238 = vperm.xlu0 %4237, %v4224
        %v4239 = vpop.permute.xlu0 %4238
        %4242 = vset.pattern.permute.xlu0 0
        %4243 = vperm.xlu0 %4242, %v4225
        %v4244 = vpop.permute.xlu0 %4243
        %4247 = vset.pattern.permute.xlu0 0
        %4248 = vperm.xlu0 %4247, %v4226
        %v4249 = vpop.permute.xlu0 %4248
        %4252 = vset.pattern.permute.xlu0 0
        %4253 = vperm.xlu0 %4252, %v4227
        %v4254 = vpop.permute.xlu0 %4253
        %4257 = vset.pattern.permute.xlu0 0
        %4258 = vperm.xlu0 %4257, %v4228
        %v4259 = vpop.permute.xlu0 %4258
        %4262 = vset.pattern.permute.xlu0 0
        %4263 = vperm.xlu0 %4262, %v4229
        %v4264 = vpop.permute.xlu0 %4263
        %4267 = vset.pattern.permute.xlu0 0
        %4268 = vperm.xlu0 %4267, %v4230
        %v4269 = vpop.permute.xlu0 %4268
        %v4271 = vadd.f32 %v4206, %v4234
        %v4272 = vadd.f32 %v4207, %v4234
        %v4273 = vadd.f32 %v4208, %v4239
        %v4274 = vadd.f32 %v4209, %v4239
        %v4275 = vadd.f32 %v4210, %v4244
        %v4276 = vadd.f32 %v4211, %v4244
        %v4277 = vadd.f32 %v4212, %v4249
        %v4278 = vadd.f32 %v4213, %v4249
        %v4279 = vadd.f32 %v4214, %v4254
        %v4280 = vadd.f32 %v4215, %v4254
        %v4281 = vadd.f32 %v4216, %v4259
        %v4282 = vadd.f32 %v4217, %v4259
        %v4283 = vadd.f32 %v4218, %v4264
        %v4284 = vadd.f32 %v4219, %v4264
        %v4285 = vadd.f32 %v4220, %v4269
        %v4286 = vadd.f32 %v4221, %v4269
        %s4287 = sld [smem:[#allocation4 + $0x5]]
        %vm4288 = vcmp.ge.f32.partialorder %v4271, 0.0
        %vm4289 = vcmp.ge.f32.partialorder %v4272, 0.0
        %vm4290 = vcmp.ge.f32.partialorder %v4273, 0.0
        %vm4291 = vcmp.ge.f32.partialorder %v4274, 0.0
        %vm4292 = vcmp.ge.f32.partialorder %v4275, 0.0
        %vm4293 = vcmp.ge.f32.partialorder %v4276, 0.0
        %vm4294 = vcmp.ge.f32.partialorder %v4277, 0.0
        %vm4295 = vcmp.ge.f32.partialorder %v4278, 0.0
        %vm4296 = vcmp.ge.f32.partialorder %v4279, 0.0
        %vm4297 = vcmp.ge.f32.partialorder %v4280, 0.0
        %vm4298 = vcmp.ge.f32.partialorder %v4281, 0.0
        %vm4299 = vcmp.ge.f32.partialorder %v4282, 0.0
        %vm4300 = vcmp.ge.f32.partialorder %v4283, 0.0
        %vm4301 = vcmp.ge.f32.partialorder %v4284, 0.0
        %vm4302 = vcmp.ge.f32.partialorder %v4285, 0.0
        %vm4303 = vcmp.ge.f32.partialorder %v4286, 0.0
        %v4304 = vstv %s4287
        %v4305 = vmul.f32 %v4304, %v4271
        %v4306 = vmul.f32 %v4304, %v4272
        %v4307 = vmul.f32 %v4304, %v4273
        %v4308 = vmul.f32 %v4304, %v4274
        %v4309 = vmul.f32 %v4304, %v4275
        %v4310 = vmul.f32 %v4304, %v4276
        %v4311 = vmul.f32 %v4304, %v4277
        %v4312 = vmul.f32 %v4304, %v4278
        %v4313 = vmul.f32 %v4304, %v4279
        %v4314 = vmul.f32 %v4304, %v4280
        %v4315 = vmul.f32 %v4304, %v4281
        %v4316 = vmul.f32 %v4304, %v4282
        %v4317 = vmul.f32 %v4304, %v4283
        %v4318 = vmul.f32 %v4304, %v4284
        %v4319 = vmul.f32 %v4304, %v4285
        %v4320 = vmul.f32 %v4304, %v4286
        %v4321 = vsel %vm4288, %v4271, %v4305
        %v4322 = vsel %vm4289, %v4272, %v4306
        %v4323 = vsel %vm4290, %v4273, %v4307
        %v4324 = vsel %vm4291, %v4274, %v4308
        %v4325 = vsel %vm4292, %v4275, %v4309
        %v4326 = vsel %vm4293, %v4276, %v4310
        %v4327 = vsel %vm4294, %v4277, %v4311
        %v4328 = vsel %vm4295, %v4278, %v4312
        %v4329 = vsel %vm4296, %v4279, %v4313
        %v4330 = vsel %vm4297, %v4280, %v4314
        %v4331 = vsel %vm4298, %v4281, %v4315
        %v4332 = vsel %vm4299, %v4282, %v4316
        %v4333 = vsel %vm4300, %v4283, %v4317
        %v4334 = vsel %vm4301, %v4284, %v4318
        %v4335 = vsel %vm4302, %v4285, %v4319
        %v4336 = vsel %vm4303, %v4286, %v4320
        %s4337 = scalar_lea.vmem %s13, 128
        %v4338 = vld [vmem:[%s4337] sm:$0xff]
        %v4339 = vld [vmem:[%s4337 + $0x8] sm:$0xff]
        %v4340 = vld [vmem:[%s4337 + $0x10] sm:$0xff]
        %v4341 = vld [vmem:[%s4337 + $0x18] sm:$0xff]
        %v4342 = vld [vmem:[%s4337 + $0x20] sm:$0xff]
        %v4343 = vld [vmem:[%s4337 + $0x28] sm:$0xff]
        %v4344 = vld [vmem:[%s4337 + $0x30] sm:$0xff]
        %v4345 = vld [vmem:[%s4337 + $0x38] sm:$0xff]
        %s4346 = scalar_lea.vmem %s14, 128
        %v4347 = vld [vmem:[%s4346] sm:$0xff]
        %v4348 = vld [vmem:[%s4346 + $0x8] sm:$0xff]
        %v4349 = vld [vmem:[%s4346 + $0x10] sm:$0xff]
        %v4350 = vld [vmem:[%s4346 + $0x18] sm:$0xff]
        %v4351 = vld [vmem:[%s4346 + $0x20] sm:$0xff]
        %v4352 = vld [vmem:[%s4346 + $0x28] sm:$0xff]
        %v4353 = vld [vmem:[%s4346 + $0x30] sm:$0xff]
        %v4354 = vld [vmem:[%s4346 + $0x38] sm:$0xff]
        %4371 = vrot.lane.b32.xlu0 %v4321, 4
        %v4372 = vpop.permute.xlu0 %4371
        %4373 = vrot.lane.b32.xlu0 %v4322, 4
        %v4374 = vpop.permute.xlu0 %4373
        %4375 = vrot.lane.b32.xlu0 %v4323, 4
        %v4376 = vpop.permute.xlu0 %4375
        %4377 = vrot.lane.b32.xlu0 %v4324, 4
        %v4378 = vpop.permute.xlu0 %4377
        %4379 = vrot.lane.b32.xlu0 %v4325, 4
        %v4380 = vpop.permute.xlu0 %4379
        %4381 = vrot.lane.b32.xlu0 %v4326, 4
        %v4382 = vpop.permute.xlu0 %4381
        %4383 = vrot.lane.b32.xlu0 %v4327, 4
        %v4384 = vpop.permute.xlu0 %4383
        %4385 = vrot.lane.b32.xlu0 %v4328, 4
        %v4386 = vpop.permute.xlu0 %4385
        %4387 = vrot.lane.b32.xlu0 %v4329, 4
        %v4388 = vpop.permute.xlu0 %4387
        %4389 = vrot.lane.b32.xlu0 %v4330, 4
        %v4390 = vpop.permute.xlu0 %4389
        %4391 = vrot.lane.b32.xlu0 %v4331, 4
        %v4392 = vpop.permute.xlu0 %4391
        %4393 = vrot.lane.b32.xlu0 %v4332, 4
        %v4394 = vpop.permute.xlu0 %4393
        %4395 = vrot.lane.b32.xlu0 %v4333, 4
        %v4396 = vpop.permute.xlu0 %4395
        %4397 = vrot.lane.b32.xlu0 %v4334, 4
        %v4398 = vpop.permute.xlu0 %4397
        %4399 = vrot.lane.b32.xlu0 %v4335, 4
        %v4400 = vpop.permute.xlu0 %4399
        %4401 = vrot.lane.b32.xlu0 %v4336, 4
        %v4402 = vpop.permute.xlu0 %4401
        %vm4403 = vcmask 31744
        %v4404 = vsel %vm4403, %v4372, %v4374
        %v4405 = vsel %vm4403, %v4376, %v4378
        %v4406 = vsel %vm4403, %v4380, %v4382
        %v4407 = vsel %vm4403, %v4384, %v4386
        %v4408 = vsel %vm4403, %v4388, %v4390
        %v4409 = vsel %vm4403, %v4392, %v4394
        %v4410 = vsel %vm4403, %v4396, %v4398
        %v4411 = vsel %vm4403, %v4400, %v4402
        %v4420 = vsel %vm696, %v4404, 0.0
        %v4421 = vsel %vm696, %v4405, 0.0
        %v4422 = vadd.f32 %v4420, %v4421
        %v4423 = vsel %vm696, %v4406, 0.0
        %v4424 = vadd.f32 %v4422, %v4423
        %v4425 = vsel %vm696, %v4407, 0.0
        %v4426 = vadd.f32 %v4424, %v4425
        %v4427 = vsel %vm696, %v4408, 0.0
        %v4428 = vadd.f32 %v4426, %v4427
        %v4429 = vsel %vm696, %v4409, 0.0
        %v4430 = vadd.f32 %v4428, %v4429
        %v4431 = vsel %vm696, %v4410, 0.0
        %v4432 = vadd.f32 %v4430, %v4431
        %v4433 = vsel %vm696, %v4411, 0.0
        %v4434 = vadd.f32 %v4432, %v4433
        %4435 = vadd.xlane.f32.xlu0 %v4434
        %v4436 = vpop.xlane.xlu0 %4435
        %v4437 = vrot.slane %v4436, 4
        %v4438 = vadd.f32 %v4436, %v4437
        %v4439 = vrot.slane %v4438, 2
        %v4440 = vadd.f32 %v4438, %v4439
        %v4441 = vrot.slane %v4440, 1
        %v4442 = vadd.f32 %v4440, %v4441
        %s4443 = vtos %v4442
        %v4444 = vrcp.pop 768.0
        %v4445 = vmul.f32 768.0, %v4444
        %v4446 = vsub.f32 1.0, %v4445
        %v4447 = vmul.f32 %v4444, %v4446
        %v4448 = vadd.f32 %v4444, %v4447
        %vm4449 = vweird.f32 %v4444
        %v4450 = vsel %vm4449, %v4444, %v4448
        %s4451 = vtos %v4450
        %s4452 = smul.f32 %s4443, %s4451
        %v4453 = vstv %s4452
        %v4454 = vsub.f32 %v4321, %v4453
        %v4455 = vsub.f32 %v4322, %v4453
        %v4456 = vsub.f32 %v4323, %v4453
        %v4457 = vsub.f32 %v4324, %v4453
        %v4458 = vsub.f32 %v4325, %v4453
        %v4459 = vsub.f32 %v4326, %v4453
        %v4460 = vsub.f32 %v4327, %v4453
        %v4461 = vsub.f32 %v4328, %v4453
        %v4462 = vsub.f32 %v4329, %v4453
        %v4463 = vsub.f32 %v4330, %v4453
        %v4464 = vsub.f32 %v4331, %v4453
        %v4465 = vsub.f32 %v4332, %v4453
        %v4466 = vsub.f32 %v4333, %v4453
        %v4467 = vsub.f32 %v4334, %v4453
        %v4468 = vsub.f32 %v4335, %v4453
        %v4469 = vsub.f32 %v4336, %v4453
        %v4470 = vmul.f32 %v4454, %v4454
        %v4471 = vmul.f32 %v4455, %v4455
        %v4472 = vmul.f32 %v4456, %v4456
        %v4473 = vmul.f32 %v4457, %v4457
        %v4474 = vmul.f32 %v4458, %v4458
        %v4475 = vmul.f32 %v4459, %v4459
        %v4476 = vmul.f32 %v4460, %v4460
        %v4477 = vmul.f32 %v4461, %v4461
        %v4478 = vmul.f32 %v4462, %v4462
        %v4479 = vmul.f32 %v4463, %v4463
        %v4480 = vmul.f32 %v4464, %v4464
        %v4481 = vmul.f32 %v4465, %v4465
        %v4482 = vmul.f32 %v4466, %v4466
        %v4483 = vmul.f32 %v4467, %v4467
        %v4484 = vmul.f32 %v4468, %v4468
        %v4485 = vmul.f32 %v4469, %v4469
        %4502 = vrot.lane.b32.xlu0 %v4470, 4
        %v4503 = vpop.permute.xlu0 %4502
        %4504 = vrot.lane.b32.xlu0 %v4471, 4
        %v4505 = vpop.permute.xlu0 %4504
        %4506 = vrot.lane.b32.xlu0 %v4472, 4
        %v4507 = vpop.permute.xlu0 %4506
        %4508 = vrot.lane.b32.xlu0 %v4473, 4
        %v4509 = vpop.permute.xlu0 %4508
        %4510 = vrot.lane.b32.xlu0 %v4474, 4
        %v4511 = vpop.permute.xlu0 %4510
        %4512 = vrot.lane.b32.xlu0 %v4475, 4
        %v4513 = vpop.permute.xlu0 %4512
        %4514 = vrot.lane.b32.xlu0 %v4476, 4
        %v4515 = vpop.permute.xlu0 %4514
        %4516 = vrot.lane.b32.xlu0 %v4477, 4
        %v4517 = vpop.permute.xlu0 %4516
        %4518 = vrot.lane.b32.xlu0 %v4478, 4
        %v4519 = vpop.permute.xlu0 %4518
        %4520 = vrot.lane.b32.xlu0 %v4479, 4
        %v4521 = vpop.permute.xlu0 %4520
        %4522 = vrot.lane.b32.xlu0 %v4480, 4
        %v4523 = vpop.permute.xlu0 %4522
        %4524 = vrot.lane.b32.xlu0 %v4481, 4
        %v4525 = vpop.permute.xlu0 %4524
        %4526 = vrot.lane.b32.xlu0 %v4482, 4
        %v4527 = vpop.permute.xlu0 %4526
        %4528 = vrot.lane.b32.xlu0 %v4483, 4
        %v4529 = vpop.permute.xlu0 %4528
        %4530 = vrot.lane.b32.xlu0 %v4484, 4
        %v4531 = vpop.permute.xlu0 %4530
        %4532 = vrot.lane.b32.xlu0 %v4485, 4
        %v4533 = vpop.permute.xlu0 %4532
        %v4534 = vsel %vm4403, %v4503, %v4505
        %v4535 = vsel %vm4403, %v4507, %v4509
        %v4536 = vsel %vm4403, %v4511, %v4513
        %v4537 = vsel %vm4403, %v4515, %v4517
        %v4538 = vsel %vm4403, %v4519, %v4521
        %v4539 = vsel %vm4403, %v4523, %v4525
        %v4540 = vsel %vm4403, %v4527, %v4529
        %v4541 = vsel %vm4403, %v4531, %v4533
        %v4550 = vsel %vm696, %v4534, 0.0
        %v4551 = vsel %vm696, %v4535, 0.0
        %v4552 = vadd.f32 %v4550, %v4551
        %v4553 = vsel %vm696, %v4536, 0.0
        %v4554 = vadd.f32 %v4552, %v4553
        %v4555 = vsel %vm696, %v4537, 0.0
        %v4556 = vadd.f32 %v4554, %v4555
        %v4557 = vsel %vm696, %v4538, 0.0
        %v4558 = vadd.f32 %v4556, %v4557
        %v4559 = vsel %vm696, %v4539, 0.0
        %v4560 = vadd.f32 %v4558, %v4559
        %v4561 = vsel %vm696, %v4540, 0.0
        %v4562 = vadd.f32 %v4560, %v4561
        %v4563 = vsel %vm696, %v4541, 0.0
        %v4564 = vadd.f32 %v4562, %v4563
        %4565 = vadd.xlane.f32.xlu0 %v4564
        %v4566 = vpop.xlane.xlu0 %4565
        %v4567 = vrot.slane %v4566, 4
        %v4568 = vadd.f32 %v4566, %v4567
        %v4569 = vrot.slane %v4568, 2
        %v4570 = vadd.f32 %v4568, %v4569
        %v4571 = vrot.slane %v4570, 1
        %v4572 = vadd.f32 %v4570, %v4571
        %s4573 = vtos %v4572
        %v4574 = vrcp.pop 768.0
        %v4575 = vmul.f32 768.0, %v4574
        %v4576 = vsub.f32 1.0, %v4575
        %v4577 = vmul.f32 %v4574, %v4576
        %v4578 = vadd.f32 %v4574, %v4577
        %vm4579 = vweird.f32 %v4574
        %v4580 = vsel %vm4579, %v4574, %v4578
        %s4581 = vtos %v4580
        %s4582 = smul.f32 %s4573, %s4581
        %4584 = vset.pattern.permute.xlu0 0
        %4585 = vperm.xlu0 %4584, %v4338
        %v4586 = vpop.permute.xlu0 %4585
        %4589 = vset.pattern.permute.xlu0 0
        %4590 = vperm.xlu0 %4589, %v4339
        %v4591 = vpop.permute.xlu0 %4590
        %4594 = vset.pattern.permute.xlu0 0
        %4595 = vperm.xlu0 %4594, %v4340
        %v4596 = vpop.permute.xlu0 %4595
        %4599 = vset.pattern.permute.xlu0 0
        %4600 = vperm.xlu0 %4599, %v4341
        %v4601 = vpop.permute.xlu0 %4600
        %4604 = vset.pattern.permute.xlu0 0
        %4605 = vperm.xlu0 %4604, %v4342
        %v4606 = vpop.permute.xlu0 %4605
        %4609 = vset.pattern.permute.xlu0 0
        %4610 = vperm.xlu0 %4609, %v4343
        %v4611 = vpop.permute.xlu0 %4610
        %4614 = vset.pattern.permute.xlu0 0
        %4615 = vperm.xlu0 %4614, %v4344
        %v4616 = vpop.permute.xlu0 %4615
        %4619 = vset.pattern.permute.xlu0 0
        %4620 = vperm.xlu0 %4619, %v4345
        %v4621 = vpop.permute.xlu0 %4620
        %v4623 = vmul.f32 %v4586, %v4454
        %v4624 = vmul.f32 %v4586, %v4455
        %v4625 = vmul.f32 %v4591, %v4456
        %v4626 = vmul.f32 %v4591, %v4457
        %v4627 = vmul.f32 %v4596, %v4458
        %v4628 = vmul.f32 %v4596, %v4459
        %v4629 = vmul.f32 %v4601, %v4460
        %v4630 = vmul.f32 %v4601, %v4461
        %v4631 = vmul.f32 %v4606, %v4462
        %v4632 = vmul.f32 %v4606, %v4463
        %v4633 = vmul.f32 %v4611, %v4464
        %v4634 = vmul.f32 %v4611, %v4465
        %v4635 = vmul.f32 %v4616, %v4466
        %v4636 = vmul.f32 %v4616, %v4467
        %v4637 = vmul.f32 %v4621, %v4468
        %v4638 = vmul.f32 %v4621, %v4469
        %s4639 = sadd.f32 %s4582, 1e-08
        %v4640 = vstv %s4639
        %v4641 = vrsqrt.pop %v4640
        %v4642 = vmul.f32 %v4641, %v4640
        %v4643 = vmul.f32 %v4642, %v4641
        %v4644 = vmul.f32 0.5, %v4643
        %v4645 = vsub.f32 1.5, %v4644
        %v4646 = vmul.f32 %v4641, %v4645
        %vm4647 = vweird.f32 %v4640
        %vm4648 = vweird.f32 %v4641
        %vm4649 = vmor %vm4647, %vm4648
        %v4650 = vsel %vm4649, %v4641, %v4646
        %s4651 = vtos %v4650
        %v4652 = vstv %s4651
        %v4653 = vmul.f32 %v4623, %v4652
        %v4654 = vmul.f32 %v4624, %v4652
        %v4655 = vmul.f32 %v4625, %v4652
        %v4656 = vmul.f32 %v4626, %v4652
        %v4657 = vmul.f32 %v4627, %v4652
        %v4658 = vmul.f32 %v4628, %v4652
        %v4659 = vmul.f32 %v4629, %v4652
        %v4660 = vmul.f32 %v4630, %v4652
        %v4661 = vmul.f32 %v4631, %v4652
        %v4662 = vmul.f32 %v4632, %v4652
        %v4663 = vmul.f32 %v4633, %v4652
        %v4664 = vmul.f32 %v4634, %v4652
        %v4665 = vmul.f32 %v4635, %v4652
        %v4666 = vmul.f32 %v4636, %v4652
        %v4667 = vmul.f32 %v4637, %v4652
        %v4668 = vmul.f32 %v4638, %v4652
        %4670 = vset.pattern.permute.xlu0 0
        %4671 = vperm.xlu0 %4670, %v4347
        %v4672 = vpop.permute.xlu0 %4671
        %4675 = vset.pattern.permute.xlu0 0
        %4676 = vperm.xlu0 %4675, %v4348
        %v4677 = vpop.permute.xlu0 %4676
        %4680 = vset.pattern.permute.xlu0 0
        %4681 = vperm.xlu0 %4680, %v4349
        %v4682 = vpop.permute.xlu0 %4681
        %4685 = vset.pattern.permute.xlu0 0
        %4686 = vperm.xlu0 %4685, %v4350
        %v4687 = vpop.permute.xlu0 %4686
        %4690 = vset.pattern.permute.xlu0 0
        %4691 = vperm.xlu0 %4690, %v4351
        %v4692 = vpop.permute.xlu0 %4691
        %4695 = vset.pattern.permute.xlu0 0
        %4696 = vperm.xlu0 %4695, %v4352
        %v4697 = vpop.permute.xlu0 %4696
        %4700 = vset.pattern.permute.xlu0 0
        %4701 = vperm.xlu0 %4700, %v4353
        %v4702 = vpop.permute.xlu0 %4701
        %4705 = vset.pattern.permute.xlu0 0
        %4706 = vperm.xlu0 %4705, %v4354
        %v4707 = vpop.permute.xlu0 %4706
        %v4709 = vadd.f32 %v4653, %v4672
        %v4710 = vadd.f32 %v4654, %v4672
        %v4711 = vadd.f32 %v4655, %v4677
        %v4712 = vadd.f32 %v4656, %v4677
        %v4713 = vadd.f32 %v4657, %v4682
        %v4714 = vadd.f32 %v4658, %v4682
        %v4715 = vadd.f32 %v4659, %v4687
        %v4716 = vadd.f32 %v4660, %v4687
        %v4717 = vadd.f32 %v4661, %v4692
        %v4718 = vadd.f32 %v4662, %v4692
        %v4719 = vadd.f32 %v4663, %v4697
        %v4720 = vadd.f32 %v4664, %v4697
        %v4721 = vadd.f32 %v4665, %v4702
        %v4722 = vadd.f32 %v4666, %v4702
        %v4723 = vadd.f32 %v4667, %v4707
        %v4724 = vadd.f32 %v4668, %v4707
        %s4725 = scalar_lea.vmem %s15, 16
        %v4726 = vld [vmem:[%s4725] sm:$0xf]
        %v4727 = vld [vmem:[%s4725 + $0x4] sm:$0xf]
        %v4728 = vpack.c.bf16 %v4711, %v4709
        %v4729 = vpack.c.bf16 %v4712, %v4710
        %v4730 = vpack.c.bf16 %v4715, %v4713
        %v4731 = vpack.c.bf16 %v4716, %v4714
        %v4732 = vpack.c.bf16 %v4719, %v4717
        %v4733 = vpack.c.bf16 %v4720, %v4718
        %v4734 = vpack.c.bf16 %v4723, %v4721
        %v4735 = vpack.c.bf16 %v4724, %v4722
        %s4736 = scalar_lea.vmem %s16, 32
        %v4737 = vld [vmem:[%s4736] sm:$0xff]
        %v4738 = vld [vmem:[%s4736 + $0x8] sm:$0xff]
        %4740 = vset.pattern.permute.xlu0 0
        %4741 = vperm.xlu0 %4740, %v4737
        %v4742 = vpop.permute.xlu0 %4741
        %4745 = vset.pattern.permute.xlu0 0
        %4746 = vperm.xlu0 %4745, %v4738
        %v4747 = vpop.permute.xlu0 %4746
        %v4751 = vunpack.c.l.b16 %v4726
        %v4752 = vunpack.c.l.b16 %v4727
        %v4753 = vpack.c.b16 %v4752, %v4751
        %4762 = vrot.lane.b32.xlu0 %v4728, 4
        %v4763 = vpop.permute.xlu0 %4762
        %4764 = vrot.lane.b32.xlu0 %v4729, 4
        %v4765 = vpop.permute.xlu0 %4764
        %4766 = vrot.lane.b32.xlu0 %v4730, 4
        %v4767 = vpop.permute.xlu0 %4766
        %4768 = vrot.lane.b32.xlu0 %v4731, 4
        %v4769 = vpop.permute.xlu0 %4768
        %4770 = vrot.lane.b32.xlu0 %v4732, 4
        %v4771 = vpop.permute.xlu0 %4770
        %4772 = vrot.lane.b32.xlu0 %v4733, 4
        %v4773 = vpop.permute.xlu0 %4772
        %4774 = vrot.lane.b32.xlu0 %v4734, 4
        %v4775 = vpop.permute.xlu0 %4774
        %4776 = vrot.lane.b32.xlu0 %v4735, 4
        %v4777 = vpop.permute.xlu0 %4776
        %vm4778 = vcmask 31744
        %v4779 = vsel %vm4778, %v4763, %v4765
        %v4780 = vsel %vm4778, %v4767, %v4769
        %v4781 = vsel %vm4778, %v4771, %v4773
        %v4782 = vsel %vm4778, %v4775, %v4777
        %v4788 = vsel %vm2258, %v4753, 0
        %4790 = vmatpush.bf16.msra.mxu0 0
        %4791 = vmatpush.bf16.msra.mxu0 0
        %4792 = vmatpush.bf16.msra.mxu0 0
        %4793 = vmatpush.bf16.msra.mxu0 0
        %4794 = vmatpush.bf16.msra.mxu0 %v4782
        %4795 = vmatpush.bf16.msra.mxu0 %v4781
        %4796 = vmatpush.bf16.msra.mxu0 %v4780
        %4797 = vmatpush.bf16.msra.mxu0 %v4779
        %4798 = vmatmul.bf16.gmra.mxu0 %v4788
        %v4799 = vpop.f32.mrf.mxu0
        %v4800 = vadd.f32 %v4742, %v4799
        %v4801 = vpop.f32.mrf.mxu0
        %v4802 = vadd.f32 %v4747, %v4801
        %4803 = vdwg.mxu0
        %v4804 = vadd.f32 %v3540, %v4800
        %v4805 = vadd.f32 %v3541, %v4802
        %s4806 = sld [smem:[#allocation4 + $0x6]]
        %vm4807 = vcmp.ge.f32.partialorder %v4804, 0.0
        %vm4808 = vcmp.ge.f32.partialorder %v4805, 0.0
        %v4809 = vstv %s4806
        %v4810 = vmul.f32 %v4809, %v4804
        %v4811 = vmul.f32 %v4809, %v4805
        %v4812 = vsel %vm4807, %v4804, %v4810
        %v4813 = vsel %vm4808, %v4805, %v4811
        %v4814 = vld [vmem:[%s17] sm:$0xf]
        %v4815 = vld [vmem:[%s17 + $0x4] sm:$0xf]
        %v4816 = vld [vmem:[%s17 + $0x8] sm:$0xf]
        %v4817 = vld [vmem:[%s17 + $0xc] sm:$0xf]
        %v4818 = vld [vmem:[%s17 + $0x10] sm:$0xf]
        %v4819 = vld [vmem:[%s17 + $0x14] sm:$0xf]
        %v4820 = vld [vmem:[%s17 + $0x18] sm:$0xf]
        %v4821 = vld [vmem:[%s17 + $0x1c] sm:$0xf]
        %v4822 = vpack.c.bf16 %v4813, %v4812
        %v4823 = vld [vmem:[%s18] sm:$0xff]
        %v4824 = vld [vmem:[%s18 + $0x8] sm:$0xff]
        %v4825 = vld [vmem:[%s18 + $0x10] sm:$0xff]
        %v4826 = vld [vmem:[%s18 + $0x18] sm:$0xff]
        %v4827 = vld [vmem:[%s18 + $0x20] sm:$0xff]
        %v4828 = vld [vmem:[%s18 + $0x28] sm:$0xff]
        %v4829 = vld [vmem:[%s18 + $0x30] sm:$0xff]
        %v4830 = vld [vmem:[%s18 + $0x38] sm:$0xff]
        %4832 = vset.pattern.permute.xlu0 0
        %4833 = vperm.xlu0 %4832, %v4823
        %v4834 = vpop.permute.xlu0 %4833
        %4837 = vset.pattern.permute.xlu0 0
        %4838 = vperm.xlu0 %4837, %v4824
        %v4839 = vpop.permute.xlu0 %4838
        %4842 = vset.pattern.permute.xlu0 0
        %4843 = vperm.xlu0 %4842, %v4825
        %v4844 = vpop.permute.xlu0 %4843
        %4847 = vset.pattern.permute.xlu0 0
        %4848 = vperm.xlu0 %4847, %v4826
        %v4849 = vpop.permute.xlu0 %4848
        %4852 = vset.pattern.permute.xlu0 0
        %4853 = vperm.xlu0 %4852, %v4827
        %v4854 = vpop.permute.xlu0 %4853
        %4857 = vset.pattern.permute.xlu0 0
        %4858 = vperm.xlu0 %4857, %v4828
        %v4859 = vpop.permute.xlu0 %4858
        %4862 = vset.pattern.permute.xlu0 0
        %4863 = vperm.xlu0 %4862, %v4829
        %v4864 = vpop.permute.xlu0 %4863
        %4867 = vset.pattern.permute.xlu0 0
        %4868 = vperm.xlu0 %4867, %v4830
        %v4869 = vpop.permute.xlu0 %4868
        %v4879 = vunpack.c.l.b16 %v4814
        %v4880 = vunpack.c.l.b16 %v4815
        %v4881 = vunpack.c.l.b16 %v4816
        %v4882 = vunpack.c.l.b16 %v4817
        %v4883 = vunpack.c.l.b16 %v4818
        %v4884 = vunpack.c.l.b16 %v4819
        %v4885 = vunpack.c.l.b16 %v4820
        %v4886 = vunpack.c.l.b16 %v4821
        %v4887 = vpack.c.b16 %v4880, %v4879
        %v4888 = vpack.c.b16 %v4882, %v4881
        %v4889 = vpack.c.b16 %v4884, %v4883
        %v4890 = vpack.c.b16 %v4886, %v4885
        %v4892 = vsel %vm662, %v4887, 0
        %v4895 = vsel %vm662, %v4888, 0
        %v4898 = vsel %vm662, %v4889, 0
        %v4901 = vsel %vm662, %v4890, 0
        %4903 = vmatpush.bf16.msra.mxu0 0
        %4904 = vmatpush.bf16.msra.mxu0 0
        %4905 = vmatpush.bf16.msra.mxu0 0
        %4906 = vmatpush.bf16.msra.mxu0 0
        %4907 = vmatpush.bf16.msra.mxu0 0
        %4908 = vmatpush.bf16.msra.mxu0 0
        %4909 = vmatpush.bf16.msra.mxu0 0
        %4910 = vmatpush.bf16.msra.mxu0 %v4822
        %4911 = vmatmul.bf16.gmra.mxu0 %v4892
        %v4912 = vpop.f32.mrf.mxu0
        %v4913 = vadd.f32 %v4834, %v4912
        %v4914 = vpop.f32.mrf.mxu0
        %v4915 = vadd.f32 %v4839, %v4914
        %4916 = vmatmul.bf16.gmra.mxu0 %v4895
        %v4917 = vpop.f32.mrf.mxu0
        %v4918 = vadd.f32 %v4844, %v4917
        %v4919 = vpop.f32.mrf.mxu0
        %v4920 = vadd.f32 %v4849, %v4919
        %4921 = vmatmul.bf16.gmra.mxu0 %v4898
        %v4922 = vpop.f32.mrf.mxu0
        %v4923 = vadd.f32 %v4854, %v4922
        %v4924 = vpop.f32.mrf.mxu0
        %v4925 = vadd.f32 %v4859, %v4924
        %4926 = vmatmul.bf16.gmra.mxu0 %v4901
        %v4927 = vpop.f32.mrf.mxu0
        %v4928 = vadd.f32 %v4864, %v4927
        %v4929 = vpop.f32.mrf.mxu0
        %v4930 = vadd.f32 %v4869, %v4929
        %4931 = vdwg.mxu0
        %v4932 = vxor.u32 %v4913, 2147483648
        %v4933 = vxor.u32 %v4915, 2147483648
        %v4934 = vxor.u32 %v4918, 2147483648
        %v4935 = vxor.u32 %v4920, 2147483648
        %v4936 = vxor.u32 %v4923, 2147483648
        %v4937 = vxor.u32 %v4925, 2147483648
        %v4938 = vxor.u32 %v4928, 2147483648
        %v4939 = vxor.u32 %v4930, 2147483648
        %v4940 = vmul.f32 %v4932, 1.442695
        %v4941 = vpow.pop %v4940
        %v4942 = vmul.f32 %v4933, 1.442695
        %v4943 = vpow.pop %v4942
        %v4944 = vmul.f32 %v4934, 1.442695
        %v4945 = vpow.pop %v4944
        %v4946 = vmul.f32 %v4935, 1.442695
        %v4947 = vpow.pop %v4946
        %v4948 = vmul.f32 %v4936, 1.442695
        %v4949 = vpow.pop %v4948
        %v4950 = vmul.f32 %v4937, 1.442695
        %v4951 = vpow.pop %v4950
        %v4952 = vmul.f32 %v4938, 1.442695
        %v4953 = vpow.pop %v4952
        %v4954 = vmul.f32 %v4939, 1.442695
        %v4955 = vpow.pop %v4954
        %v4956 = vadd.f32 %v4941, 1.0
        %v4957 = vadd.f32 %v4943, 1.0
        %v4958 = vadd.f32 %v4945, 1.0
        %v4959 = vadd.f32 %v4947, 1.0
        %v4960 = vadd.f32 %v4949, 1.0
        %v4961 = vadd.f32 %v4951, 1.0
        %v4962 = vadd.f32 %v4953, 1.0
        %v4963 = vadd.f32 %v4955, 1.0
        %v4964 = vrcp.pop %v4956
        %v4965 = vmul.f32 %v4956, %v4964
        %v4966 = vsub.f32 1.0, %v4965
        %v4967 = vmul.f32 %v4964, %v4966
        %v4968 = vadd.f32 %v4964, %v4967
        %vm4969 = vweird.f32 %v4956
        %vm4970 = vweird.f32 %v4964
        %vm4971 = vmor %vm4969, %vm4970
        %v4972 = vsel %vm4971, %v4964, %v4968
        %v4973 = vand.u32 2147483647, %v4956
        %vm4974 = vcmp.eq.f32.partialorder %v4973, 8.507059e+37
        %v4975 = vand.u32 %v4956, 2147483648
        %v4976 = vor.u32 1.1754944e-38, %v4975
        %v4977 = vsel %vm4974, %v4976, %v4972
        %v4978 = vmul.f32 1.0, %v4977
        %v4979 = vrcp.pop %v4957
        %v4980 = vmul.f32 %v4957, %v4979
        %v4981 = vsub.f32 1.0, %v4980
        %v4982 = vmul.f32 %v4979, %v4981
        %v4983 = vadd.f32 %v4979, %v4982
        %vm4984 = vweird.f32 %v4957
        %vm4985 = vweird.f32 %v4979
        %vm4986 = vmor %vm4984, %vm4985
        %v4987 = vsel %vm4986, %v4979, %v4983
        %v4988 = vand.u32 2147483647, %v4957
        %vm4989 = vcmp.eq.f32.partialorder %v4988, 8.507059e+37
        %v4990 = vand.u32 %v4957, 2147483648
        %v4991 = vor.u32 1.1754944e-38, %v4990
        %v4992 = vsel %vm4989, %v4991, %v4987
        %v4993 = vmul.f32 1.0, %v4992
        %v4994 = vrcp.pop %v4958
        %v4995 = vmul.f32 %v4958, %v4994
        %v4996 = vsub.f32 1.0, %v4995
        %v4997 = vmul.f32 %v4994, %v4996
        %v4998 = vadd.f32 %v4994, %v4997
        %vm4999 = vweird.f32 %v4958
        %vm5000 = vweird.f32 %v4994
        %vm5001 = vmor %vm4999, %vm5000
        %v5002 = vsel %vm5001, %v4994, %v4998
        %v5003 = vand.u32 2147483647, %v4958
        %vm5004 = vcmp.eq.f32.partialorder %v5003, 8.507059e+37
        %v5005 = vand.u32 %v4958, 2147483648
        %v5006 = vor.u32 1.1754944e-38, %v5005
        %v5007 = vsel %vm5004, %v5006, %v5002
        %v5008 = vmul.f32 1.0, %v5007
        %v5009 = vrcp.pop %v4959
        %v5010 = vmul.f32 %v4959, %v5009
        %v5011 = vsub.f32 1.0, %v5010
        %v5012 = vmul.f32 %v5009, %v5011
        %v5013 = vadd.f32 %v5009, %v5012
        %vm5014 = vweird.f32 %v4959
        %vm5015 = vweird.f32 %v5009
        %vm5016 = vmor %vm5014, %vm5015
        %v5017 = vsel %vm5016, %v5009, %v5013
        %v5018 = vand.u32 2147483647, %v4959
        %vm5019 = vcmp.eq.f32.partialorder %v5018, 8.507059e+37
        %v5020 = vand.u32 %v4959, 2147483648
        %v5021 = vor.u32 1.1754944e-38, %v5020
        %v5022 = vsel %vm5019, %v5021, %v5017
        %v5023 = vmul.f32 1.0, %v5022
        %v5024 = vrcp.pop %v4960
        %v5025 = vmul.f32 %v4960, %v5024
        %v5026 = vsub.f32 1.0, %v5025
        %v5027 = vmul.f32 %v5024, %v5026
        %v5028 = vadd.f32 %v5024, %v5027
        %vm5029 = vweird.f32 %v4960
        %vm5030 = vweird.f32 %v5024
        %vm5031 = vmor %vm5029, %vm5030
        %v5032 = vsel %vm5031, %v5024, %v5028
        %v5033 = vand.u32 2147483647, %v4960
        %vm5034 = vcmp.eq.f32.partialorder %v5033, 8.507059e+37
        %v5035 = vand.u32 %v4960, 2147483648
        %v5036 = vor.u32 1.1754944e-38, %v5035
        %v5037 = vsel %vm5034, %v5036, %v5032
        %v5038 = vmul.f32 1.0, %v5037
        %v5039 = vrcp.pop %v4961
        %v5040 = vmul.f32 %v4961, %v5039
        %v5041 = vsub.f32 1.0, %v5040
        %v5042 = vmul.f32 %v5039, %v5041
        %v5043 = vadd.f32 %v5039, %v5042
        %vm5044 = vweird.f32 %v4961
        %vm5045 = vweird.f32 %v5039
        %vm5046 = vmor %vm5044, %vm5045
        %v5047 = vsel %vm5046, %v5039, %v5043
        %v5048 = vand.u32 2147483647, %v4961
        %vm5049 = vcmp.eq.f32.partialorder %v5048, 8.507059e+37
        %v5050 = vand.u32 %v4961, 2147483648
        %v5051 = vor.u32 1.1754944e-38, %v5050
        %v5052 = vsel %vm5049, %v5051, %v5047
        %v5053 = vmul.f32 1.0, %v5052
        %v5054 = vrcp.pop %v4962
        %v5055 = vmul.f32 %v4962, %v5054
        %v5056 = vsub.f32 1.0, %v5055
        %v5057 = vmul.f32 %v5054, %v5056
        %v5058 = vadd.f32 %v5054, %v5057
        %vm5059 = vweird.f32 %v4962
        %vm5060 = vweird.f32 %v5054
        %vm5061 = vmor %vm5059, %vm5060
        %v5062 = vsel %vm5061, %v5054, %v5058
        %v5063 = vand.u32 2147483647, %v4962
        %vm5064 = vcmp.eq.f32.partialorder %v5063, 8.507059e+37
        %v5065 = vand.u32 %v4962, 2147483648
        %v5066 = vor.u32 1.1754944e-38, %v5065
        %v5067 = vsel %vm5064, %v5066, %v5062
        %v5068 = vmul.f32 1.0, %v5067
        %v5069 = vrcp.pop %v4963
        %v5070 = vmul.f32 %v4963, %v5069
        %v5071 = vsub.f32 1.0, %v5070
        %v5072 = vmul.f32 %v5069, %v5071
        %v5073 = vadd.f32 %v5069, %v5072
        %vm5074 = vweird.f32 %v4963
        %vm5075 = vweird.f32 %v5069
        %vm5076 = vmor %vm5074, %vm5075
        %v5077 = vsel %vm5076, %v5069, %v5073
        %v5078 = vand.u32 2147483647, %v4963
        %vm5079 = vcmp.eq.f32.partialorder %v5078, 8.507059e+37
        %v5080 = vand.u32 %v4963, 2147483648
        %v5081 = vor.u32 1.1754944e-38, %v5080
        %v5082 = vsel %vm5079, %v5081, %v5077
        %v5083 = vmul.f32 1.0, %v5082
        %v5084 = vld [vmem:[%s19] sm:$0xff]
        %v5085 = vld [vmem:[%s19 + $0x8] sm:$0xff]
        %v5086 = vmul.f32 %v4978, %v679
        %v5087 = vmul.f32 %v4993, %v681
        %v5088 = vmul.f32 %v5008, %v684
        %v5089 = vmul.f32 %v5023, %v686
        %v5091 = vsel %vm961, %v5084, 0
        %v5094 = vsel %vm961, %v5085, 0
        %5096 = vmatpush.msra.mxu0 0.0
        %5097 = vmatpush.msra.mxu0 0.0
        %5098 = vmatpush.msra.mxu0 0.0
        %5099 = vmatpush.msra.mxu0 0.0
        %5100 = vmatpush.msra.mxu0 0.0
        %5101 = vmatpush.msra.mxu0 0.0
        %5102 = vmatpush.msra.mxu0 0.0
        %5103 = vmatpush.msra.mxu0 0.0
        %5104 = vmatpush.msra.mxu0 0.0
        %5105 = vmatpush.msra.mxu0 0.0
        %5106 = vmatpush.msra.mxu0 0.0
        %5107 = vmatpush.msra.mxu0 0.0
        %5108 = vmatpush.msra.mxu0 %v5089
        %5109 = vmatpush.msra.mxu0 %v5088
        %5110 = vmatpush.msra.mxu0 %v5087
        %5111 = vmatpush.msra.mxu0 %v5086
        %5112 = vmatmul.f32.gmra.mxu0 %v5091
        %v5113 = vpop.f32.mrf.mxu0
        %v5114 = vadd.f32 0.0, %v5113
        %5115 = vmatmul.f32.gmra.mxu0 %v5094
        %v5116 = vpop.f32.mrf.mxu0
        %v5117 = vadd.f32 0.0, %v5116
        %5118 = vdwg.mxu0
        %5119 = vst.msk [vmem:[%s643] sm:$0xff] %vm1876, %v5114
        %5121 = vrot.lane.b32.xlu0 %v5117, 1
        %v5122 = vpop.permute.xlu0 %5121
        %v5124 = vadd.f32 %v5114, %v5122
        %vm5125 = vcmask 97288
        %5126 = vst.msk [vmem:[%s643] sm:$0xff] %vm5125, %v5124
        %vm5127 = vcmask 105568
        %5128 = vst.msk [vmem:[%s643] sm:$0xff] %vm5127, %v5122
        %v5129 = vmul.f32 %v5038, %v679
        %v5130 = vmul.f32 %v5053, %v681
        %v5131 = vmul.f32 %v5068, %v684
        %v5132 = vmul.f32 %v5083, %v686
        %5133 = vmatpush.msra.mxu0 0.0
        %5134 = vmatpush.msra.mxu0 0.0
        %5135 = vmatpush.msra.mxu0 0.0
        %5136 = vmatpush.msra.mxu0 0.0
        %5137 = vmatpush.msra.mxu0 0.0
        %5138 = vmatpush.msra.mxu0 0.0
        %5139 = vmatpush.msra.mxu0 0.0
        %5140 = vmatpush.msra.mxu0 0.0
        %5141 = vmatpush.msra.mxu0 0.0
        %5142 = vmatpush.msra.mxu0 0.0
        %5143 = vmatpush.msra.mxu0 0.0
        %5144 = vmatpush.msra.mxu0 0.0
        %5145 = vmatpush.msra.mxu0 %v5132
        %5146 = vmatpush.msra.mxu0 %v5131
        %5147 = vmatpush.msra.mxu0 %v5130
        %5148 = vmatpush.msra.mxu0 %v5129
        %5149 = vmatmul.f32.gmra.mxu0 %v5091
        %v5150 = vpop.f32.mrf.mxu0
        %v5151 = vadd.f32 0.0, %v5150
        %5152 = vmatmul.f32.gmra.mxu0 %v5094
        %v5153 = vpop.f32.mrf.mxu0
        %v5154 = vadd.f32 0.0, %v5153
        %5155 = vdwg.mxu0
        %s5156 = scalar_lea.vmem %s643, 8
        %5157 = vst.msk [vmem:[%s5156] sm:$0xff] %vm1876, %v5151
        %5159 = vrot.lane.b32.xlu0 %v5154, 1
        %v5160 = vpop.permute.xlu0 %5159
        %v5162 = vadd.f32 %v5151, %v5160
        %5163 = vst.msk [vmem:[%s5156] sm:$0xff] %vm5125, %v5162
        %5164 = vst.msk [vmem:[%s5156] sm:$0xff] %vm5127, %v5160
        %p5165 = scmp.lt.s32.totalorder %s32, 1
        %s5166 = scalar_select %p5165, %s32, 1
        %s5167 = smul.addr %s5166, 2
        %s5168 = smul.addr %s5167, 8
        %s5169 = scalar_lea.vmem %s20, %s5168
        // Predicated region
        $region105: #{net_forward.1} parent=99 // pred_check
          %p5170 = pneg %p475
        $region106: #{net_forward.1} parent=99 // pred_check_branch
          %5172 = sbr.rel (%p5170) target = $region108
        $region107: #{net_forward.1} parent=99 // pred_region
          _
        $region108: #{net_forward.1} parent=99 // pred_fallthru
          _
      $region100: #{net_forward.1} parent=5 // pred_fallthru
        _
      %p5173 = scmp.le.s32.totalorder 2, %s27
      // Predicated region
      $region109: #{net_forward.1} parent=5 // pred_check
        %p5174 = pneg %p5173
      $region110: #{net_forward.1} parent=5 // pred_check_branch
        %5176 = sbr.rel (%p5174) target = $region112
      $region111: #{net_forward.1} parent=5 // pred_region
        %s5177 = ssub.s32 %s27, 2
        // Predicated region
        $region113: #{net_forward.1} parent=111 // pred_check
          %p5178 = pneg %p481
        $region114: #{net_forward.1} parent=111 // pred_check_branch
          %5180 = sbr.rel (%p5178) target = $region116
        $region115: #{net_forward.1} parent=111 // pred_region
          %p5181 = scmp.lt.s32.totalorder %s33, 1
          %s5182 = scalar_select %p5181, %s33, 1
          %s5183 = smul.addr %s5182, 2
          %s5184 = smul.addr %s5183, 8
          %s5185 = scalar_lea.vmem %s20, %s5184
        $region116: #{net_forward.1} parent=111 // pred_fallthru
          _
      $region112: #{net_forward.1} parent=5 // pred_fallthru
        _
    $region6: #{net_forward.1} parent=1 // loop_footer
      %s31 = sadd.s32 1, %s27
    $region7: #{net_forward.1} parent=1 // loop_footer_branch
      %26 = sbr.rel target = $region3
    $region8: #{net_forward.1} parent=1 // loop_exit
      _
    %5186 = vsyncpa [#allocation5], 1
    %s5187 = scalar_lea.sflag [#allocation5], 1
    %5188 = vsyncpa %s5187, 1

</llo_original>
